<compile_context>
chip_gen: v7x
topology: tpu7x:2x2x1
jax: 0.10.0
libtpu: 0.0.40
codegen_flags: <defaults>
</compile_context>

<pallas_src>
import functools

import jax
import jax.numpy as jnp
from jax.experimental import pallas as pl
from jax.experimental.pallas import tpu as pltpu  # noqa: F401  (TPU backend assumed)


# ----------------------------------------------------------------------------
# Fused whole-network kernel
# ----------------------------------------------------------------------------
def _fused_forward_kernel(*refs, K, pools):
    n_conv = len(pools)
    x_ref = refs[0]                                        # (L, B) f32
    conv_refs = [refs[1 + 4 * i: 1 + 4 * (i + 1)] for i in range(n_conv)]
    (wf4_ref, bf4_ref, wf5_ref, bf5_ref, wf6_ref, bf6_ref, o_ref) = refs[1 + 4 * n_conv:]

    pad = K // 2
    x = x_ref[...]
    L0, Bsz = x.shape
    hs = [x[:, b:b + 1] for b in range(Bsz)]               # per-batch (L, 1) activations

    # ---- conv / BN / ReLU / pool stages (all data stays in VMEM/vregs) ----
    for (w_ref, s_ref, t_ref, sel_ref), pool in zip(conv_refs, pools):
        w2d = w_ref[...]                                   # (K*Cin, Cout) im2col weights
        scale = s_ref[...]                                 # (1, Cout) folded BN scale
        shift = t_ref[...]                                 # (1, Cout) folded BN shift (incl. conv bias)
        sel = sel_ref[...]                                 # (Lout, Lsel) 0/1 pooling selector
        Lout, Lsel = sel.shape
        Lcur, Cin = hs[0].shape
        Lconv = Lcur + 2 * pad - K + 1                     # PyTorch Conv1d output length
        zero_rows = jnp.zeros((pad, Cin), jnp.float32)

        new_hs = []
        for h in hs:
            if pad > 0:                                    # zero 'same' padding (sublane concat)
                hp = jnp.concatenate([zero_rows, h, zero_rows], axis=0)
            else:
                hp = h
            # im2col: K sublane-shifted copies concatenated on the lane axis.
            taps = jnp.concatenate([hp[k:k + Lconv, :] for k in range(K)], axis=1)
            y = jnp.dot(taps, w2d, preferred_element_type=jnp.float32)   # conv   (Lconv, Cout)
            y = jnp.maximum(y * scale + shift, 0.0)                      # BN + ReLU
            # MaxPool1d(pool): running max of `pool` shifted copies ...
            z = y[0:Lsel, :]
            for i in range(1, pool):
                z = jnp.maximum(z, y[i:i + Lsel, :])
            # ... then pick rows j*pool via a 0/1 selection matmul (identity cases skipped).
            if Lout == Lsel:
                pooled = z
            else:
                pooled = jnp.dot(sel, z, preferred_element_type=jnp.float32)
            new_hs.append(pooled)                          # (Lout, Cout)
        hs = new_hs

    # ---- flatten (matches torch .view(B, -1) on (B, C, Lfinal)) ----
    if hs[0].shape[0] == 1:
        feat = jnp.concatenate(hs, axis=0)                 # (B, Cfinal)
    else:
        feat = jnp.concatenate([jnp.transpose(h).reshape(1, -1) for h in hs], axis=0)

    # ---- MLP: fc4 -> ReLU -> fc5 -> ReLU -> fc6 (Dropout = identity, eval) ----
    # Weights were zero-padded to a 256-wide hidden dim at init -> lane-aligned tiles;
    # the padding contributes exactly zero to the result.
    h = jnp.maximum(jnp.dot(feat, wf4_ref[...], preferred_element_type=jnp.float32)
                    + bf4_ref[...], 0.0)
    h = jnp.maximum(jnp.dot(h, wf5_ref[...], preferred_element_type=jnp.float32)
                    + bf5_ref[...], 0.0)
    o_ref[...] = (jnp.dot(h, wf6_ref[...], preferred_element_type=jnp.float32)
                  + bf6_ref[...])


def convnet_forward(x, params):
    B, _ = x.shape
    x_lb = jnp.transpose(x.astype(jnp.float32))            # (L, B): length on sublanes
    K = params["K"]
    pools = params["pools"]
    out_dim = params["bf6"].shape[1]

    conv_args = []
    for i in range(1, len(pools) + 1):
        conv_args += [params[f"w{i}"], params[f"s{i}"], params[f"t{i}"], params[f"sel{i}"]]

    kernel = functools.partial(_fused_forward_kernel, K=K, pools=pools)
    # No grid / no in_specs: every operand is a whole-array VMEM block (all KB-scale),
    # so there is a single program invocation with zero pipeline overhead.
    return pl.pallas_call(
        kernel,
        out_shape=jax.ShapeDtypeStruct((B, out_dim), jnp.float32),
    )(x_lb, *conv_args,
      params["wf4"], params["bf4"], params["wf5"], params["bf5"],
      params["wf6"], params["bf6"])


# ----------------------------------------------------------------------------
# Parameter construction (deterministic; mirrors the PyTorch __init__ shapes).
# All layout transforms (im2col weight transpose, BN folding, pooling selectors,
# MLP transpose + 256-padding) happen here, once, not per forward call.
# ----------------------------------------------------------------------------
def init_params(key, input_shape, out_shape, kernel_size, channel_size=8):
    eps = 1e-5
    pools = (2, 5, 5, 5)
    pad = kernel_size // 2
    c1 = channel_size
    chans = [(1, c1), (c1, 2 * c1), (2 * c1, 4 * c1), (4 * c1, 4 * c1)]

    keys = jax.random.split(key, 14)
    ki = iter(keys)
    params = {"K": kernel_size, "pools": pools}

    L = input_shape
    for idx, ((cin, cout), pool) in enumerate(zip(chans, pools), start=1):
        w = 0.1 * jax.random.normal(next(ki), (cout, cin, kernel_size), jnp.float32)
        b = 0.1 * jax.random.normal(next(ki), (cout,), jnp.float32)
        # BatchNorm1d eval-mode defaults: gamma=1, beta=0, running_mean=0, running_var=1
        gamma = jnp.ones((cout,), jnp.float32)
        beta = jnp.zeros((cout,), jnp.float32)
        mean = jnp.zeros((cout,), jnp.float32)
        var = jnp.ones((cout,), jnp.float32)
        scale = gamma / jnp.sqrt(var + eps)
        shift = beta + (b - mean) * scale
        # im2col weight layout: row k*Cin + cin  <->  w_torch[cout, cin, k]
        params[f"w{idx}"] = jnp.transpose(w, (2, 1, 0)).reshape(kernel_size * cin, cout)
        params[f"s{idx}"] = scale.reshape(1, cout)
        params[f"t{idx}"] = shift.reshape(1, cout)

        Lconv = L + 2 * pad - kernel_size + 1              # Conv1d output length
        Lout = Lconv // pool                               # floor-mode MaxPool1d
        Lsel = (Lout - 1) * pool + 1
        sel = (jnp.arange(Lsel)[None, :] == pool * jnp.arange(Lout)[:, None])
        params[f"sel{idx}"] = sel.astype(jnp.float32)      # (Lout, Lsel) 0/1 selector
        L = Lout

    feat_dim = chans[-1][1] * L
    # flattened-feature size, computed exactly as in the PyTorch __init__
    size = int(input_shape * c1 / 2)
    size = int(size * 2 / 5)
    size = int(size * 2 / 5)
    size = int(size / 5)
    assert size == feat_dim, (size, feat_dim)

    hidden = 200
    hpad = ((hidden + 127) // 128) * 128                   # 256: lane-aligned hidden width

    def linear(fan_in, fan_out):
        w = 0.1 * jax.random.normal(next(ki), (fan_out, fan_in), jnp.float32)
        b = 0.1 * jax.random.normal(next(ki), (fan_out,), jnp.float32)
        return w, b

    w4, b4 = linear(size, hidden)
    w5, b5 = linear(hidden, hidden)
    w6, b6 = linear(hidden, out_shape)

    params["wf4"] = jnp.pad(w4.T, ((0, 0), (0, hpad - hidden)))              # (size, 256)
    params["bf4"] = jnp.pad(b4, (0, hpad - hidden)).reshape(1, hpad)
    params["wf5"] = jnp.pad(w5.T, ((0, hpad - hidden), (0, hpad - hidden)))  # (256, 256)
    params["bf5"] = jnp.pad(b5, (0, hpad - hidden)).reshape(1, hpad)
    params["wf6"] = jnp.pad(w6.T, ((0, hpad - hidden), (0, 0)))              # (256, out)
    params["bf6"] = b6.reshape(1, out_shape)
    return params


if __name__ == "__main__":
    INPUT_SHAPE = 250      # sequence length (divisible by 2*5*5*5 so pooling is exact)
    OUT_SHAPE = 5          # n_classes
    KERNEL_SIZE = 5        # odd kernel -> 'same' padding, like the PyTorch module
    CHANNEL_SIZE = 8
    BATCH = 2

    key = jax.random.PRNGKey(0)
    pkey, xkey = jax.random.split(key)
    params = init_params(pkey, INPUT_SHAPE, OUT_SHAPE, KERNEL_SIZE, CHANNEL_SIZE)
    x = jax.random.normal(xkey, (BATCH, INPUT_SHAPE), jnp.float32)

    out = convnet_forward(x, params)
    jax.block_until_ready(out)
    assert out.shape == (BATCH, OUT_SHAPE), out.shape
    print("KERNEL_OK")
</pallas_src>

<mosaic_0001>
module attributes {stable_mosaic.version = 11 : i64} {
  func.func @_fused_forward_kernel(%arg0: memref<250x2xf32, #tpu.memory_space<vmem>>, %arg1: memref<5x8xf32, #tpu.memory_space<vmem>>, %arg2: memref<1x8xf32, #tpu.memory_space<vmem>>, %arg3: memref<1x8xf32, #tpu.memory_space<vmem>>, %arg4: memref<125x249xf32, #tpu.memory_space<vmem>>, %arg5: memref<40x16xf32, #tpu.memory_space<vmem>>, %arg6: memref<1x16xf32, #tpu.memory_space<vmem>>, %arg7: memref<1x16xf32, #tpu.memory_space<vmem>>, %arg8: memref<25x121xf32, #tpu.memory_space<vmem>>, %arg9: memref<80x32xf32, #tpu.memory_space<vmem>>, %arg10: memref<1x32xf32, #tpu.memory_space<vmem>>, %arg11: memref<1x32xf32, #tpu.memory_space<vmem>>, %arg12: memref<5x21xf32, #tpu.memory_space<vmem>>, %arg13: memref<160x32xf32, #tpu.memory_space<vmem>>, %arg14: memref<1x32xf32, #tpu.memory_space<vmem>>, %arg15: memref<1x32xf32, #tpu.memory_space<vmem>>, %arg16: memref<1x1xf32, #tpu.memory_space<vmem>>, %arg17: memref<32x256xf32, #tpu.memory_space<vmem>>, %arg18: memref<1x256xf32, #tpu.memory_space<vmem>>, %arg19: memref<256x256xf32, #tpu.memory_space<vmem>>, %arg20: memref<1x256xf32, #tpu.memory_space<vmem>>, %arg21: memref<256x5xf32, #tpu.memory_space<vmem>>, %arg22: memref<1x5xf32, #tpu.memory_space<vmem>>, %arg23: memref<2x5xf32, #tpu.memory_space<vmem>>) attributes {dimension_semantics = [], scalar_prefetch = 0 : i64, scratch_operands = 0 : i64, tpu.core_type = #tpu.core_type<tc>} {
    %c0 = arith.constant 0 : index
    %c0_0 = arith.constant 0 : index
    %0 = vector.load %arg0[%c0, %c0_0] : memref<250x2xf32, #tpu.memory_space<vmem>>, vector<250x2xf32>
    %1 = vector.extract_strided_slice %0 {offsets = [0, 0], sizes = [250, 1], strides = [1, 1]} : vector<250x2xf32> to vector<250x1xf32>
    %2 = vector.extract_strided_slice %0 {offsets = [0, 1], sizes = [250, 1], strides = [1, 1]} : vector<250x2xf32> to vector<250x1xf32>
    %c0_1 = arith.constant 0 : index
    %c0_2 = arith.constant 0 : index
    %3 = vector.load %arg1[%c0_1, %c0_2] : memref<5x8xf32, #tpu.memory_space<vmem>>, vector<5x8xf32>
    %c0_3 = arith.constant 0 : index
    %c0_4 = arith.constant 0 : index
    %4 = vector.load %arg2[%c0_3, %c0_4] : memref<1x8xf32, #tpu.memory_space<vmem>>, vector<1x8xf32>
    %c0_5 = arith.constant 0 : index
    %c0_6 = arith.constant 0 : index
    %5 = vector.load %arg3[%c0_5, %c0_6] : memref<1x8xf32, #tpu.memory_space<vmem>>, vector<1x8xf32>
    %c0_7 = arith.constant 0 : index
    %c0_8 = arith.constant 0 : index
    %6 = vector.load %arg4[%c0_7, %c0_8] : memref<125x249xf32, #tpu.memory_space<vmem>>, vector<125x249xf32>
    %cst = arith.constant 0.000000e+00 : f32
    %7 = vector.broadcast %cst : f32 to vector<2x1xf32>
    %8 = tpu.concatenate %7, %1, %7 in 0 : vector<2x1xf32>, vector<250x1xf32>, vector<2x1xf32> -> vector<254x1xf32>
    %9 = vector.extract_strided_slice %8 {offsets = [0, 0], sizes = [250, 1], strides = [1, 1]} : vector<254x1xf32> to vector<250x1xf32>
    %10 = vector.extract_strided_slice %8 {offsets = [1, 0], sizes = [250, 1], strides = [1, 1]} : vector<254x1xf32> to vector<250x1xf32>
    %11 = vector.extract_strided_slice %8 {offsets = [2, 0], sizes = [250, 1], strides = [1, 1]} : vector<254x1xf32> to vector<250x1xf32>
    %12 = vector.extract_strided_slice %8 {offsets = [3, 0], sizes = [250, 1], strides = [1, 1]} : vector<254x1xf32> to vector<250x1xf32>
    %13 = vector.extract_strided_slice %8 {offsets = [4, 0], sizes = [250, 1], strides = [1, 1]} : vector<254x1xf32> to vector<250x1xf32>
    %14 = tpu.concatenate %9, %10, %11, %12, %13 in 1 : vector<250x1xf32>, vector<250x1xf32>, vector<250x1xf32>, vector<250x1xf32>, vector<250x1xf32> -> vector<250x5xf32>
    %cst_9 = arith.constant dense<0.000000e+00> : vector<250x8xf32>
    %15 = tpu.matmul %14, %3, %cst_9 {dimension_numbers = #tpu.dot_dimension_numbers<[1], [0], [0], [1], [0, 0, 1, 1], [], []>} : vector<250x5xf32>, vector<5x8xf32>, vector<250x8xf32> -> vector<250x8xf32>
    %16 = vector.broadcast %4 : vector<1x8xf32> to vector<250x8xf32>
    %17 = arith.mulf %15, %16 : vector<250x8xf32>
    %18 = vector.broadcast %5 : vector<1x8xf32> to vector<250x8xf32>
    %19 = arith.addf %17, %18 : vector<250x8xf32>
    %cst_10 = arith.constant 0.000000e+00 : f32
    %20 = vector.broadcast %cst_10 : f32 to vector<250x8xf32>
    %21 = arith.maximumf %19, %20 : vector<250x8xf32>
    %22 = vector.extract_strided_slice %21 {offsets = [0, 0], sizes = [249, 8], strides = [1, 1]} : vector<250x8xf32> to vector<249x8xf32>
    %23 = vector.extract_strided_slice %21 {offsets = [1, 0], sizes = [249, 8], strides = [1, 1]} : vector<250x8xf32> to vector<249x8xf32>
    %24 = arith.maximumf %22, %23 : vector<249x8xf32>
    %cst_11 = arith.constant dense<0.000000e+00> : vector<125x8xf32>
    %25 = tpu.matmul %6, %24, %cst_11 {dimension_numbers = #tpu.dot_dimension_numbers<[1], [0], [0], [1], [0, 0, 1, 1], [], []>} : vector<125x249xf32>, vector<249x8xf32>, vector<125x8xf32> -> vector<125x8xf32>
    %26 = tpu.concatenate %7, %2, %7 in 0 : vector<2x1xf32>, vector<250x1xf32>, vector<2x1xf32> -> vector<254x1xf32>
    %27 = vector.extract_strided_slice %26 {offsets = [0, 0], sizes = [250, 1], strides = [1, 1]} : vector<254x1xf32> to vector<250x1xf32>
    %28 = vector.extract_strided_slice %26 {offsets = [1, 0], sizes = [250, 1], strides = [1, 1]} : vector<254x1xf32> to vector<250x1xf32>
    %29 = vector.extract_strided_slice %26 {offsets = [2, 0], sizes = [250, 1], strides = [1, 1]} : vector<254x1xf32> to vector<250x1xf32>
    %30 = vector.extract_strided_slice %26 {offsets = [3, 0], sizes = [250, 1], strides = [1, 1]} : vector<254x1xf32> to vector<250x1xf32>
    %31 = vector.extract_strided_slice %26 {offsets = [4, 0], sizes = [250, 1], strides = [1, 1]} : vector<254x1xf32> to vector<250x1xf32>
    %32 = tpu.concatenate %27, %28, %29, %30, %31 in 1 : vector<250x1xf32>, vector<250x1xf32>, vector<250x1xf32>, vector<250x1xf32>, vector<250x1xf32> -> vector<250x5xf32>
    %cst_12 = arith.constant dense<0.000000e+00> : vector<250x8xf32>
    %33 = tpu.matmul %32, %3, %cst_12 {dimension_numbers = #tpu.dot_dimension_numbers<[1], [0], [0], [1], [0, 0, 1, 1], [], []>} : vector<250x5xf32>, vector<5x8xf32>, vector<250x8xf32> -> vector<250x8xf32>
    %34 = vector.broadcast %4 : vector<1x8xf32> to vector<250x8xf32>
    %35 = arith.mulf %33, %34 : vector<250x8xf32>
    %36 = vector.broadcast %5 : vector<1x8xf32> to vector<250x8xf32>
    %37 = arith.addf %35, %36 : vector<250x8xf32>
    %cst_13 = arith.constant 0.000000e+00 : f32
    %38 = vector.broadcast %cst_13 : f32 to vector<250x8xf32>
    %39 = arith.maximumf %37, %38 : vector<250x8xf32>
    %40 = vector.extract_strided_slice %39 {offsets = [0, 0], sizes = [249, 8], strides = [1, 1]} : vector<250x8xf32> to vector<249x8xf32>
    %41 = vector.extract_strided_slice %39 {offsets = [1, 0], sizes = [249, 8], strides = [1, 1]} : vector<250x8xf32> to vector<249x8xf32>
    %42 = arith.maximumf %40, %41 : vector<249x8xf32>
    %cst_14 = arith.constant dense<0.000000e+00> : vector<125x8xf32>
    %43 = tpu.matmul %6, %42, %cst_14 {dimension_numbers = #tpu.dot_dimension_numbers<[1], [0], [0], [1], [0, 0, 1, 1], [], []>} : vector<125x249xf32>, vector<249x8xf32>, vector<125x8xf32> -> vector<125x8xf32>
    %c0_15 = arith.constant 0 : index
    %c0_16 = arith.constant 0 : index
    %44 = vector.load %arg5[%c0_15, %c0_16] : memref<40x16xf32, #tpu.memory_space<vmem>>, vector<40x16xf32>
    %c0_17 = arith.constant 0 : index
    %c0_18 = arith.constant 0 : index
    %45 = vector.load %arg6[%c0_17, %c0_18] : memref<1x16xf32, #tpu.memory_space<vmem>>, vector<1x16xf32>
    %c0_19 = arith.constant 0 : index
    %c0_20 = arith.constant 0 : index
    %46 = vector.load %arg7[%c0_19, %c0_20] : memref<1x16xf32, #tpu.memory_space<vmem>>, vector<1x16xf32>
    %c0_21 = arith.constant 0 : index
    %c0_22 = arith.constant 0 : index
    %47 = vector.load %arg8[%c0_21, %c0_22] : memref<25x121xf32, #tpu.memory_space<vmem>>, vector<25x121xf32>
    %cst_23 = arith.constant 0.000000e+00 : f32
    %48 = vector.broadcast %cst_23 : f32 to vector<2x8xf32>
    %49 = tpu.concatenate %48, %25, %48 in 0 : vector<2x8xf32>, vector<125x8xf32>, vector<2x8xf32> -> vector<129x8xf32>
    %50 = vector.extract_strided_slice %49 {offsets = [0, 0], sizes = [125, 8], strides = [1, 1]} : vector<129x8xf32> to vector<125x8xf32>
    %51 = vector.extract_strided_slice %49 {offsets = [1, 0], sizes = [125, 8], strides = [1, 1]} : vector<129x8xf32> to vector<125x8xf32>
    %52 = vector.extract_strided_slice %49 {offsets = [2, 0], sizes = [125, 8], strides = [1, 1]} : vector<129x8xf32> to vector<125x8xf32>
    %53 = vector.extract_strided_slice %49 {offsets = [3, 0], sizes = [125, 8], strides = [1, 1]} : vector<129x8xf32> to vector<125x8xf32>
    %54 = vector.extract_strided_slice %49 {offsets = [4, 0], sizes = [125, 8], strides = [1, 1]} : vector<129x8xf32> to vector<125x8xf32>
    %55 = tpu.concatenate %50, %51, %52, %53, %54 in 1 : vector<125x8xf32>, vector<125x8xf32>, vector<125x8xf32>, vector<125x8xf32>, vector<125x8xf32> -> vector<125x40xf32>
    %cst_24 = arith.constant dense<0.000000e+00> : vector<125x16xf32>
    %56 = tpu.matmul %55, %44, %cst_24 {dimension_numbers = #tpu.dot_dimension_numbers<[1], [0], [0], [1], [0, 0, 1, 1], [], []>} : vector<125x40xf32>, vector<40x16xf32>, vector<125x16xf32> -> vector<125x16xf32>
    %57 = vector.broadcast %45 : vector<1x16xf32> to vector<125x16xf32>
    %58 = arith.mulf %56, %57 : vector<125x16xf32>
    %59 = vector.broadcast %46 : vector<1x16xf32> to vector<125x16xf32>
    %60 = arith.addf %58, %59 : vector<125x16xf32>
    %cst_25 = arith.constant 0.000000e+00 : f32
    %61 = vector.broadcast %cst_25 : f32 to vector<125x16xf32>
    %62 = arith.maximumf %60, %61 : vector<125x16xf32>
    %63 = vector.extract_strided_slice %62 {offsets = [0, 0], sizes = [121, 16], strides = [1, 1]} : vector<125x16xf32> to vector<121x16xf32>
    %64 = vector.extract_strided_slice %62 {offsets = [1, 0], sizes = [121, 16], strides = [1, 1]} : vector<125x16xf32> to vector<121x16xf32>
    %65 = arith.maximumf %63, %64 : vector<121x16xf32>
    %66 = vector.extract_strided_slice %62 {offsets = [2, 0], sizes = [121, 16], strides = [1, 1]} : vector<125x16xf32> to vector<121x16xf32>
    %67 = arith.maximumf %65, %66 : vector<121x16xf32>
    %68 = vector.extract_strided_slice %62 {offsets = [3, 0], sizes = [121, 16], strides = [1, 1]} : vector<125x16xf32> to vector<121x16xf32>
    %69 = arith.maximumf %67, %68 : vector<121x16xf32>
    %70 = vector.extract_strided_slice %62 {offsets = [4, 0], sizes = [121, 16], strides = [1, 1]} : vector<125x16xf32> to vector<121x16xf32>
    %71 = arith.maximumf %69, %70 : vector<121x16xf32>
    %cst_26 = arith.constant dense<0.000000e+00> : vector<25x16xf32>
    %72 = tpu.matmul %47, %71, %cst_26 {dimension_numbers = #tpu.dot_dimension_numbers<[1], [0], [0], [1], [0, 0, 1, 1], [], []>} : vector<25x121xf32>, vector<121x16xf32>, vector<25x16xf32> -> vector<25x16xf32>
    %73 = tpu.concatenate %48, %43, %48 in 0 : vector<2x8xf32>, vector<125x8xf32>, vector<2x8xf32> -> vector<129x8xf32>
    %74 = vector.extract_strided_slice %73 {offsets = [0, 0], sizes = [125, 8], strides = [1, 1]} : vector<129x8xf32> to vector<125x8xf32>
    %75 = vector.extract_strided_slice %73 {offsets = [1, 0], sizes = [125, 8], strides = [1, 1]} : vector<129x8xf32> to vector<125x8xf32>
    %76 = vector.extract_strided_slice %73 {offsets = [2, 0], sizes = [125, 8], strides = [1, 1]} : vector<129x8xf32> to vector<125x8xf32>
    %77 = vector.extract_strided_slice %73 {offsets = [3, 0], sizes = [125, 8], strides = [1, 1]} : vector<129x8xf32> to vector<125x8xf32>
    %78 = vector.extract_strided_slice %73 {offsets = [4, 0], sizes = [125, 8], strides = [1, 1]} : vector<129x8xf32> to vector<125x8xf32>
    %79 = tpu.concatenate %74, %75, %76, %77, %78 in 1 : vector<125x8xf32>, vector<125x8xf32>, vector<125x8xf32>, vector<125x8xf32>, vector<125x8xf32> -> vector<125x40xf32>
    %cst_27 = arith.constant dense<0.000000e+00> : vector<125x16xf32>
    %80 = tpu.matmul %79, %44, %cst_27 {dimension_numbers = #tpu.dot_dimension_numbers<[1], [0], [0], [1], [0, 0, 1, 1], [], []>} : vector<125x40xf32>, vector<40x16xf32>, vector<125x16xf32> -> vector<125x16xf32>
    %81 = vector.broadcast %45 : vector<1x16xf32> to vector<125x16xf32>
    %82 = arith.mulf %80, %81 : vector<125x16xf32>
    %83 = vector.broadcast %46 : vector<1x16xf32> to vector<125x16xf32>
    %84 = arith.addf %82, %83 : vector<125x16xf32>
    %cst_28 = arith.constant 0.000000e+00 : f32
    %85 = vector.broadcast %cst_28 : f32 to vector<125x16xf32>
    %86 = arith.maximumf %84, %85 : vector<125x16xf32>
    %87 = vector.extract_strided_slice %86 {offsets = [0, 0], sizes = [121, 16], strides = [1, 1]} : vector<125x16xf32> to vector<121x16xf32>
    %88 = vector.extract_strided_slice %86 {offsets = [1, 0], sizes = [121, 16], strides = [1, 1]} : vector<125x16xf32> to vector<121x16xf32>
    %89 = arith.maximumf %87, %88 : vector<121x16xf32>
    %90 = vector.extract_strided_slice %86 {offsets = [2, 0], sizes = [121, 16], strides = [1, 1]} : vector<125x16xf32> to vector<121x16xf32>
    %91 = arith.maximumf %89, %90 : vector<121x16xf32>
    %92 = vector.extract_strided_slice %86 {offsets = [3, 0], sizes = [121, 16], strides = [1, 1]} : vector<125x16xf32> to vector<121x16xf32>
    %93 = arith.maximumf %91, %92 : vector<121x16xf32>
    %94 = vector.extract_strided_slice %86 {offsets = [4, 0], sizes = [121, 16], strides = [1, 1]} : vector<125x16xf32> to vector<121x16xf32>
    %95 = arith.maximumf %93, %94 : vector<121x16xf32>
    %cst_29 = arith.constant dense<0.000000e+00> : vector<25x16xf32>
    %96 = tpu.matmul %47, %95, %cst_29 {dimension_numbers = #tpu.dot_dimension_numbers<[1], [0], [0], [1], [0, 0, 1, 1], [], []>} : vector<25x121xf32>, vector<121x16xf32>, vector<25x16xf32> -> vector<25x16xf32>
    %c0_30 = arith.constant 0 : index
    %c0_31 = arith.constant 0 : index
    %97 = vector.load %arg9[%c0_30, %c0_31] : memref<80x32xf32, #tpu.memory_space<vmem>>, vector<80x32xf32>
    %c0_32 = arith.constant 0 : index
    %c0_33 = arith.constant 0 : index
    %98 = vector.load %arg10[%c0_32, %c0_33] : memref<1x32xf32, #tpu.memory_space<vmem>>, vector<1x32xf32>
    %c0_34 = arith.constant 0 : index
    %c0_35 = arith.constant 0 : index
    %99 = vector.load %arg11[%c0_34, %c0_35] : memref<1x32xf32, #tpu.memory_space<vmem>>, vector<1x32xf32>
    %c0_36 = arith.constant 0 : index
    %c0_37 = arith.constant 0 : index
    %100 = vector.load %arg12[%c0_36, %c0_37] : memref<5x21xf32, #tpu.memory_space<vmem>>, vector<5x21xf32>
    %cst_38 = arith.constant 0.000000e+00 : f32
    %101 = vector.broadcast %cst_38 : f32 to vector<2x16xf32>
    %102 = tpu.concatenate %101, %72, %101 in 0 : vector<2x16xf32>, vector<25x16xf32>, vector<2x16xf32> -> vector<29x16xf32>
    %103 = vector.extract_strided_slice %102 {offsets = [0, 0], sizes = [25, 16], strides = [1, 1]} : vector<29x16xf32> to vector<25x16xf32>
    %104 = vector.extract_strided_slice %102 {offsets = [1, 0], sizes = [25, 16], strides = [1, 1]} : vector<29x16xf32> to vector<25x16xf32>
    %105 = vector.extract_strided_slice %102 {offsets = [2, 0], sizes = [25, 16], strides = [1, 1]} : vector<29x16xf32> to vector<25x16xf32>
    %106 = vector.extract_strided_slice %102 {offsets = [3, 0], sizes = [25, 16], strides = [1, 1]} : vector<29x16xf32> to vector<25x16xf32>
    %107 = vector.extract_strided_slice %102 {offsets = [4, 0], sizes = [25, 16], strides = [1, 1]} : vector<29x16xf32> to vector<25x16xf32>
    %108 = tpu.concatenate %103, %104, %105, %106, %107 in 1 : vector<25x16xf32>, vector<25x16xf32>, vector<25x16xf32>, vector<25x16xf32>, vector<25x16xf32> -> vector<25x80xf32>
    %cst_39 = arith.constant dense<0.000000e+00> : vector<25x32xf32>
    %109 = tpu.matmul %108, %97, %cst_39 {dimension_numbers = #tpu.dot_dimension_numbers<[1], [0], [0], [1], [0, 0, 1, 1], [], []>} : vector<25x80xf32>, vector<80x32xf32>, vector<25x32xf32> -> vector<25x32xf32>
    %110 = vector.broadcast %98 : vector<1x32xf32> to vector<25x32xf32>
    %111 = arith.mulf %109, %110 : vector<25x32xf32>
    %112 = vector.broadcast %99 : vector<1x32xf32> to vector<25x32xf32>
    %113 = arith.addf %111, %112 : vector<25x32xf32>
    %cst_40 = arith.constant 0.000000e+00 : f32
    %114 = vector.broadcast %cst_40 : f32 to vector<25x32xf32>
    %115 = arith.maximumf %113, %114 : vector<25x32xf32>
    %116 = vector.extract_strided_slice %115 {offsets = [0, 0], sizes = [21, 32], strides = [1, 1]} : vector<25x32xf32> to vector<21x32xf32>
    %117 = vector.extract_strided_slice %115 {offsets = [1, 0], sizes = [21, 32], strides = [1, 1]} : vector<25x32xf32> to vector<21x32xf32>
    %118 = arith.maximumf %116, %117 : vector<21x32xf32>
    %119 = vector.extract_strided_slice %115 {offsets = [2, 0], sizes = [21, 32], strides = [1, 1]} : vector<25x32xf32> to vector<21x32xf32>
    %120 = arith.maximumf %118, %119 : vector<21x32xf32>
    %121 = vector.extract_strided_slice %115 {offsets = [3, 0], sizes = [21, 32], strides = [1, 1]} : vector<25x32xf32> to vector<21x32xf32>
    %122 = arith.maximumf %120, %121 : vector<21x32xf32>
    %123 = vector.extract_strided_slice %115 {offsets = [4, 0], sizes = [21, 32], strides = [1, 1]} : vector<25x32xf32> to vector<21x32xf32>
    %124 = arith.maximumf %122, %123 : vector<21x32xf32>
    %cst_41 = arith.constant dense<0.000000e+00> : vector<5x32xf32>
    %125 = tpu.matmul %100, %124, %cst_41 {dimension_numbers = #tpu.dot_dimension_numbers<[1], [0], [0], [1], [0, 0, 1, 1], [], []>} : vector<5x21xf32>, vector<21x32xf32>, vector<5x32xf32> -> vector<5x32xf32>
    %126 = tpu.concatenate %101, %96, %101 in 0 : vector<2x16xf32>, vector<25x16xf32>, vector<2x16xf32> -> vector<29x16xf32>
    %127 = vector.extract_strided_slice %126 {offsets = [0, 0], sizes = [25, 16], strides = [1, 1]} : vector<29x16xf32> to vector<25x16xf32>
    %128 = vector.extract_strided_slice %126 {offsets = [1, 0], sizes = [25, 16], strides = [1, 1]} : vector<29x16xf32> to vector<25x16xf32>
    %129 = vector.extract_strided_slice %126 {offsets = [2, 0], sizes = [25, 16], strides = [1, 1]} : vector<29x16xf32> to vector<25x16xf32>
    %130 = vector.extract_strided_slice %126 {offsets = [3, 0], sizes = [25, 16], strides = [1, 1]} : vector<29x16xf32> to vector<25x16xf32>
    %131 = vector.extract_strided_slice %126 {offsets = [4, 0], sizes = [25, 16], strides = [1, 1]} : vector<29x16xf32> to vector<25x16xf32>
    %132 = tpu.concatenate %127, %128, %129, %130, %131 in 1 : vector<25x16xf32>, vector<25x16xf32>, vector<25x16xf32>, vector<25x16xf32>, vector<25x16xf32> -> vector<25x80xf32>
    %cst_42 = arith.constant dense<0.000000e+00> : vector<25x32xf32>
    %133 = tpu.matmul %132, %97, %cst_42 {dimension_numbers = #tpu.dot_dimension_numbers<[1], [0], [0], [1], [0, 0, 1, 1], [], []>} : vector<25x80xf32>, vector<80x32xf32>, vector<25x32xf32> -> vector<25x32xf32>
    %134 = vector.broadcast %98 : vector<1x32xf32> to vector<25x32xf32>
    %135 = arith.mulf %133, %134 : vector<25x32xf32>
    %136 = vector.broadcast %99 : vector<1x32xf32> to vector<25x32xf32>
    %137 = arith.addf %135, %136 : vector<25x32xf32>
    %cst_43 = arith.constant 0.000000e+00 : f32
    %138 = vector.broadcast %cst_43 : f32 to vector<25x32xf32>
    %139 = arith.maximumf %137, %138 : vector<25x32xf32>
    %140 = vector.extract_strided_slice %139 {offsets = [0, 0], sizes = [21, 32], strides = [1, 1]} : vector<25x32xf32> to vector<21x32xf32>
    %141 = vector.extract_strided_slice %139 {offsets = [1, 0], sizes = [21, 32], strides = [1, 1]} : vector<25x32xf32> to vector<21x32xf32>
    %142 = arith.maximumf %140, %141 : vector<21x32xf32>
    %143 = vector.extract_strided_slice %139 {offsets = [2, 0], sizes = [21, 32], strides = [1, 1]} : vector<25x32xf32> to vector<21x32xf32>
    %144 = arith.maximumf %142, %143 : vector<21x32xf32>
    %145 = vector.extract_strided_slice %139 {offsets = [3, 0], sizes = [21, 32], strides = [1, 1]} : vector<25x32xf32> to vector<21x32xf32>
    %146 = arith.maximumf %144, %145 : vector<21x32xf32>
    %147 = vector.extract_strided_slice %139 {offsets = [4, 0], sizes = [21, 32], strides = [1, 1]} : vector<25x32xf32> to vector<21x32xf32>
    %148 = arith.maximumf %146, %147 : vector<21x32xf32>
    %cst_44 = arith.constant dense<0.000000e+00> : vector<5x32xf32>
    %149 = tpu.matmul %100, %148, %cst_44 {dimension_numbers = #tpu.dot_dimension_numbers<[1], [0], [0], [1], [0, 0, 1, 1], [], []>} : vector<5x21xf32>, vector<21x32xf32>, vector<5x32xf32> -> vector<5x32xf32>
    %c0_45 = arith.constant 0 : index
    %c0_46 = arith.constant 0 : index
    %150 = vector.load %arg13[%c0_45, %c0_46] : memref<160x32xf32, #tpu.memory_space<vmem>>, vector<160x32xf32>
    %c0_47 = arith.constant 0 : index
    %c0_48 = arith.constant 0 : index
    %151 = vector.load %arg14[%c0_47, %c0_48] : memref<1x32xf32, #tpu.memory_space<vmem>>, vector<1x32xf32>
    %c0_49 = arith.constant 0 : index
    %c0_50 = arith.constant 0 : index
    %152 = vector.load %arg15[%c0_49, %c0_50] : memref<1x32xf32, #tpu.memory_space<vmem>>, vector<1x32xf32>
    %cst_51 = arith.constant 0.000000e+00 : f32
    %153 = vector.broadcast %cst_51 : f32 to vector<2x32xf32>
    %154 = tpu.concatenate %153, %125, %153 in 0 : vector<2x32xf32>, vector<5x32xf32>, vector<2x32xf32> -> vector<9x32xf32>
    %155 = vector.extract_strided_slice %154 {offsets = [0, 0], sizes = [5, 32], strides = [1, 1]} : vector<9x32xf32> to vector<5x32xf32>
    %156 = vector.extract_strided_slice %154 {offsets = [1, 0], sizes = [5, 32], strides = [1, 1]} : vector<9x32xf32> to vector<5x32xf32>
    %157 = vector.extract_strided_slice %154 {offsets = [2, 0], sizes = [5, 32], strides = [1, 1]} : vector<9x32xf32> to vector<5x32xf32>
    %158 = vector.extract_strided_slice %154 {offsets = [3, 0], sizes = [5, 32], strides = [1, 1]} : vector<9x32xf32> to vector<5x32xf32>
    %159 = vector.extract_strided_slice %154 {offsets = [4, 0], sizes = [5, 32], strides = [1, 1]} : vector<9x32xf32> to vector<5x32xf32>
    %160 = tpu.concatenate %155, %156, %157, %158, %159 in 1 : vector<5x32xf32>, vector<5x32xf32>, vector<5x32xf32>, vector<5x32xf32>, vector<5x32xf32> -> vector<5x160xf32>
    %cst_52 = arith.constant dense<0.000000e+00> : vector<5x32xf32>
    %161 = tpu.matmul %160, %150, %cst_52 {dimension_numbers = #tpu.dot_dimension_numbers<[1], [0], [0], [1], [0, 0, 1, 1], [], []>} : vector<5x160xf32>, vector<160x32xf32>, vector<5x32xf32> -> vector<5x32xf32>
    %162 = vector.broadcast %151 : vector<1x32xf32> to vector<5x32xf32>
    %163 = arith.mulf %161, %162 : vector<5x32xf32>
    %164 = vector.broadcast %152 : vector<1x32xf32> to vector<5x32xf32>
    %165 = arith.addf %163, %164 : vector<5x32xf32>
    %cst_53 = arith.constant 0.000000e+00 : f32
    %166 = vector.broadcast %cst_53 : f32 to vector<5x32xf32>
    %167 = arith.maximumf %165, %166 : vector<5x32xf32>
    %168 = vector.extract_strided_slice %167 {offsets = [0, 0], sizes = [1, 32], strides = [1, 1]} : vector<5x32xf32> to vector<1x32xf32>
    %169 = vector.extract_strided_slice %167 {offsets = [1, 0], sizes = [1, 32], strides = [1, 1]} : vector<5x32xf32> to vector<1x32xf32>
    %170 = arith.maximumf %168, %169 : vector<1x32xf32>
    %171 = vector.extract_strided_slice %167 {offsets = [2, 0], sizes = [1, 32], strides = [1, 1]} : vector<5x32xf32> to vector<1x32xf32>
    %172 = arith.maximumf %170, %171 : vector<1x32xf32>
    %173 = vector.extract_strided_slice %167 {offsets = [3, 0], sizes = [1, 32], strides = [1, 1]} : vector<5x32xf32> to vector<1x32xf32>
    %174 = arith.maximumf %172, %173 : vector<1x32xf32>
    %175 = vector.extract_strided_slice %167 {offsets = [4, 0], sizes = [1, 32], strides = [1, 1]} : vector<5x32xf32> to vector<1x32xf32>
    %176 = arith.maximumf %174, %175 : vector<1x32xf32>
    %177 = tpu.concatenate %153, %149, %153 in 0 : vector<2x32xf32>, vector<5x32xf32>, vector<2x32xf32> -> vector<9x32xf32>
    %178 = vector.extract_strided_slice %177 {offsets = [0, 0], sizes = [5, 32], strides = [1, 1]} : vector<9x32xf32> to vector<5x32xf32>
    %179 = vector.extract_strided_slice %177 {offsets = [1, 0], sizes = [5, 32], strides = [1, 1]} : vector<9x32xf32> to vector<5x32xf32>
    %180 = vector.extract_strided_slice %177 {offsets = [2, 0], sizes = [5, 32], strides = [1, 1]} : vector<9x32xf32> to vector<5x32xf32>
    %181 = vector.extract_strided_slice %177 {offsets = [3, 0], sizes = [5, 32], strides = [1, 1]} : vector<9x32xf32> to vector<5x32xf32>
    %182 = vector.extract_strided_slice %177 {offsets = [4, 0], sizes = [5, 32], strides = [1, 1]} : vector<9x32xf32> to vector<5x32xf32>
    %183 = tpu.concatenate %178, %179, %180, %181, %182 in 1 : vector<5x32xf32>, vector<5x32xf32>, vector<5x32xf32>, vector<5x32xf32>, vector<5x32xf32> -> vector<5x160xf32>
    %cst_54 = arith.constant dense<0.000000e+00> : vector<5x32xf32>
    %184 = tpu.matmul %183, %150, %cst_54 {dimension_numbers = #tpu.dot_dimension_numbers<[1], [0], [0], [1], [0, 0, 1, 1], [], []>} : vector<5x160xf32>, vector<160x32xf32>, vector<5x32xf32> -> vector<5x32xf32>
    %185 = vector.broadcast %151 : vector<1x32xf32> to vector<5x32xf32>
    %186 = arith.mulf %184, %185 : vector<5x32xf32>
    %187 = vector.broadcast %152 : vector<1x32xf32> to vector<5x32xf32>
    %188 = arith.addf %186, %187 : vector<5x32xf32>
    %cst_55 = arith.constant 0.000000e+00 : f32
    %189 = vector.broadcast %cst_55 : f32 to vector<5x32xf32>
    %190 = arith.maximumf %188, %189 : vector<5x32xf32>
    %191 = vector.extract_strided_slice %190 {offsets = [0, 0], sizes = [1, 32], strides = [1, 1]} : vector<5x32xf32> to vector<1x32xf32>
    %192 = vector.extract_strided_slice %190 {offsets = [1, 0], sizes = [1, 32], strides = [1, 1]} : vector<5x32xf32> to vector<1x32xf32>
    %193 = arith.maximumf %191, %192 : vector<1x32xf32>
    %194 = vector.extract_strided_slice %190 {offsets = [2, 0], sizes = [1, 32], strides = [1, 1]} : vector<5x32xf32> to vector<1x32xf32>
    %195 = arith.maximumf %193, %194 : vector<1x32xf32>
    %196 = vector.extract_strided_slice %190 {offsets = [3, 0], sizes = [1, 32], strides = [1, 1]} : vector<5x32xf32> to vector<1x32xf32>
    %197 = arith.maximumf %195, %196 : vector<1x32xf32>
    %198 = vector.extract_strided_slice %190 {offsets = [4, 0], sizes = [1, 32], strides = [1, 1]} : vector<5x32xf32> to vector<1x32xf32>
    %199 = arith.maximumf %197, %198 : vector<1x32xf32>
    %200 = tpu.concatenate %176, %199 in 0 : vector<1x32xf32>, vector<1x32xf32> -> vector<2x32xf32>
    %c0_56 = arith.constant 0 : index
    %c0_57 = arith.constant 0 : index
    %201 = vector.load %arg17[%c0_56, %c0_57] : memref<32x256xf32, #tpu.memory_space<vmem>>, vector<32x256xf32>
    %cst_58 = arith.constant dense<0.000000e+00> : vector<2x256xf32>
    %202 = tpu.matmul %200, %201, %cst_58 {dimension_numbers = #tpu.dot_dimension_numbers<[1], [0], [0], [1], [0, 0, 1, 1], [], []>} : vector<2x32xf32>, vector<32x256xf32>, vector<2x256xf32> -> vector<2x256xf32>
    %c0_59 = arith.constant 0 : index
    %c0_60 = arith.constant 0 : index
    %203 = vector.load %arg18[%c0_59, %c0_60] : memref<1x256xf32, #tpu.memory_space<vmem>>, vector<1x256xf32>
    %204 = vector.broadcast %203 : vector<1x256xf32> to vector<2x256xf32>
    %205 = arith.addf %202, %204 : vector<2x256xf32>
    %cst_61 = arith.constant 0.000000e+00 : f32
    %206 = vector.broadcast %cst_61 : f32 to vector<2x256xf32>
    %207 = arith.maximumf %205, %206 : vector<2x256xf32>
    %c0_62 = arith.constant 0 : index
    %c0_63 = arith.constant 0 : index
    %208 = vector.load %arg19[%c0_62, %c0_63] : memref<256x256xf32, #tpu.memory_space<vmem>>, vector<256x256xf32>
    %cst_64 = arith.constant dense<0.000000e+00> : vector<2x256xf32>
    %209 = tpu.matmul %207, %208, %cst_64 {dimension_numbers = #tpu.dot_dimension_numbers<[1], [0], [0], [1], [0, 0, 1, 1], [], []>} : vector<2x256xf32>, vector<256x256xf32>, vector<2x256xf32> -> vector<2x256xf32>
    %c0_65 = arith.constant 0 : index
    %c0_66 = arith.constant 0 : index
    %210 = vector.load %arg20[%c0_65, %c0_66] : memref<1x256xf32, #tpu.memory_space<vmem>>, vector<1x256xf32>
    %211 = vector.broadcast %210 : vector<1x256xf32> to vector<2x256xf32>
    %212 = arith.addf %209, %211 : vector<2x256xf32>
    %cst_67 = arith.constant 0.000000e+00 : f32
    %213 = vector.broadcast %cst_67 : f32 to vector<2x256xf32>
    %214 = arith.maximumf %212, %213 : vector<2x256xf32>
    %c0_68 = arith.constant 0 : index
    %c0_69 = arith.constant 0 : index
    %215 = vector.load %arg21[%c0_68, %c0_69] : memref<256x5xf32, #tpu.memory_space<vmem>>, vector<256x5xf32>
    %cst_70 = arith.constant dense<0.000000e+00> : vector<2x5xf32>
    %216 = tpu.matmul %214, %215, %cst_70 {dimension_numbers = #tpu.dot_dimension_numbers<[1], [0], [0], [1], [0, 0, 1, 1], [], []>} : vector<2x256xf32>, vector<256x5xf32>, vector<2x5xf32> -> vector<2x5xf32>
    %c0_71 = arith.constant 0 : index
    %c0_72 = arith.constant 0 : index
    %217 = vector.load %arg22[%c0_71, %c0_72] : memref<1x5xf32, #tpu.memory_space<vmem>>, vector<1x5xf32>
    %218 = vector.broadcast %217 : vector<1x5xf32> to vector<2x5xf32>
    %219 = arith.addf %216, %218 : vector<2x5xf32>
    %c0_73 = arith.constant 0 : index
    %c0_74 = arith.constant 0 : index
    %220 = vector.load %arg23[%c0_73, %c0_74] : memref<2x5xf32, #tpu.memory_space<vmem>>, vector<2x5xf32>
    tpu.vector_store %arg23[%c0_73, %c0_74], %219 {strides = array<i32>} : memref<2x5xf32, #tpu.memory_space<vmem>>, vector<2x5xf32>,
    return
  }
}

</mosaic_0001>

<llo_original>
// kernel: tpu_custom_call.1
$region0: #{tpu_custom_call.1}
  #allocation0 [shape = 'u32[]', space=smem, size = 0x4, offset = 0x4, fixed_abs, tag = 'smem constant byte address 0x4 - core index']
  #allocation1 [shape = 'u32[144,128]{1,0:T(1,128)}', space=vmem, size = 0x12000, scoped, tag = 'internal scratch']
  #allocation2 [shape = 'f32[1,1]{1,0:T(1,128)S(1)}', space=vmem, size = 0x200, scoped, tag = 'scoped memory for tpu_custom_call.1']
  %s0 = inlined_call_operand.vmem [shape: f32[250,2], index: 0, kind: input, shape index: {}]
  %s1 = inlined_call_operand.vmem [shape: f32[5,8], index: 1, kind: input, shape index: {}]
  %s2 = inlined_call_operand.vmem [shape: f32[1,8], index: 2, kind: input, shape index: {}]
  %s3 = inlined_call_operand.vmem [shape: f32[1,8], index: 3, kind: input, shape index: {}]
  %s4 = inlined_call_operand.vmem [shape: f32[125,249], index: 4, kind: input, shape index: {}]
  %s5 = inlined_call_operand.vmem [shape: f32[40,16], index: 5, kind: input, shape index: {}]
  %s6 = inlined_call_operand.vmem [shape: f32[1,16], index: 6, kind: input, shape index: {}]
  %s7 = inlined_call_operand.vmem [shape: f32[1,16], index: 7, kind: input, shape index: {}]
  %s8 = inlined_call_operand.vmem [shape: f32[25,121], index: 8, kind: input, shape index: {}]
  %s9 = inlined_call_operand.vmem [shape: f32[80,32], index: 9, kind: input, shape index: {}]
  %s10 = inlined_call_operand.vmem [shape: f32[1,32], index: 10, kind: input, shape index: {}]
  %s11 = inlined_call_operand.vmem [shape: f32[1,32], index: 11, kind: input, shape index: {}]
  %s12 = inlined_call_operand.vmem [shape: f32[5,21], index: 12, kind: input, shape index: {}]
  %s13 = inlined_call_operand.vmem [shape: f32[160,32], index: 13, kind: input, shape index: {}]
  %s14 = inlined_call_operand.vmem [shape: f32[1,32], index: 14, kind: input, shape index: {}]
  %s15 = inlined_call_operand.vmem [shape: f32[1,32], index: 15, kind: input, shape index: {}]
  %s16 = inlined_call_operand.<no memory space> [shape: f32[1,1], index: 16, kind: input, shape index: {}]
  %s17 = inlined_call_operand.vmem [shape: f32[32,256], index: 17, kind: input, shape index: {}]
  %s18 = inlined_call_operand.vmem [shape: f32[1,256], index: 18, kind: input, shape index: {}]
  %s19 = inlined_call_operand.vmem [shape: f32[256,256], index: 19, kind: input, shape index: {}]
  %s20 = inlined_call_operand.vmem [shape: f32[1,256], index: 20, kind: input, shape index: {}]
  %s21 = inlined_call_operand.vmem [shape: f32[256,5], index: 21, kind: input, shape index: {}]
  %s22 = inlined_call_operand.vmem [shape: f32[1,5], index: 22, kind: input, shape index: {}]
  %s23 = inlined_call_operand.hbm [shape: f32[2,5], index: 23, kind: output, shape index: {}]
  %s24 = sld [smem:[#allocation0]]
  $region102: #{tpu_custom_call.1} parent=0
    _
  %s26 = ssub.s32 1, %s24
  %s27 = scalar_select 0, %s26, %s24
  %v28 = vstv %s16
  %29 = vst [vmem:[#allocation2] sm:$0x1] %v28
  $region1: #{tpu_custom_call.1} parent=0
    #allocation3 [shape = 'u8[1024]{0}', space=vmem, size = 0x400, scoped, tag = 'output window, operand 0, single buffered']
    #allocation4 [shape = 's32[1]{0}', space=sflag, size = 0x4, scoped, tag = 'scoped memory for tpu_custom_call.1']
    %30 = vsyncpa [#allocation4], 0
    // Predicated region
    $region2: #{tpu_custom_call.1} parent=1 // pred_check
      _
    $region3: #{tpu_custom_call.1} parent=1 // pred_check_branch
      %32 = sbr.rel (0) target = $region5
    $region4: #{tpu_custom_call.1} parent=1 // pred_region
      _
    $region5: #{tpu_custom_call.1} parent=1 // pred_fallthru
      _
    // Predicated region
    $region6: #{tpu_custom_call.1} parent=1 // pred_check
      _
    $region7: #{tpu_custom_call.1} parent=1 // pred_check_branch
      %34 = sbr.rel (0) target = $region9
    $region8: #{tpu_custom_call.1} parent=1 // pred_region
      _
    $region9: #{tpu_custom_call.1} parent=1 // pred_fallthru
      _
    // Predicated region
    $region10: #{tpu_custom_call.1} parent=1 // pred_check
      _
    $region11: #{tpu_custom_call.1} parent=1 // pred_check_branch
      %36 = sbr.rel (0) target = $region13
    $region12: #{tpu_custom_call.1} parent=1 // pred_region
      _
    $region13: #{tpu_custom_call.1} parent=1 // pred_fallthru
      _
    // Predicated region
    $region14: #{tpu_custom_call.1} parent=1 // pred_check
      _
    $region15: #{tpu_custom_call.1} parent=1 // pred_check_branch
      %38 = sbr.rel (0) target = $region17
    $region16: #{tpu_custom_call.1} parent=1 // pred_region
      _
    $region17: #{tpu_custom_call.1} parent=1 // pred_fallthru
      _
    // Predicated region
    $region18: #{tpu_custom_call.1} parent=1 // pred_check
      _
    $region19: #{tpu_custom_call.1} parent=1 // pred_check_branch
      %40 = sbr.rel (0) target = $region21
    $region20: #{tpu_custom_call.1} parent=1 // pred_region
      _
    $region21: #{tpu_custom_call.1} parent=1 // pred_fallthru
      _
    // Predicated region
    $region22: #{tpu_custom_call.1} parent=1 // pred_check
      _
    $region23: #{tpu_custom_call.1} parent=1 // pred_check_branch
      %42 = sbr.rel (0) target = $region25
    $region24: #{tpu_custom_call.1} parent=1 // pred_region
      _
    $region25: #{tpu_custom_call.1} parent=1 // pred_fallthru
      _
    // Predicated region
    $region26: #{tpu_custom_call.1} parent=1 // pred_check
      _
    $region27: #{tpu_custom_call.1} parent=1 // pred_check_branch
      %44 = sbr.rel (0) target = $region29
    $region28: #{tpu_custom_call.1} parent=1 // pred_region
      _
    $region29: #{tpu_custom_call.1} parent=1 // pred_fallthru
      _
    // Predicated region
    $region30: #{tpu_custom_call.1} parent=1 // pred_check
      _
    $region31: #{tpu_custom_call.1} parent=1 // pred_check_branch
      %46 = sbr.rel (0) target = $region33
    $region32: #{tpu_custom_call.1} parent=1 // pred_region
      _
    $region33: #{tpu_custom_call.1} parent=1 // pred_fallthru
      _
    // Predicated region
    $region34: #{tpu_custom_call.1} parent=1 // pred_check
      _
    $region35: #{tpu_custom_call.1} parent=1 // pred_check_branch
      %48 = sbr.rel (0) target = $region37
    $region36: #{tpu_custom_call.1} parent=1 // pred_region
      _
    $region37: #{tpu_custom_call.1} parent=1 // pred_fallthru
      _
    // Predicated region
    $region38: #{tpu_custom_call.1} parent=1 // pred_check
      _
    $region39: #{tpu_custom_call.1} parent=1 // pred_check_branch
      %50 = sbr.rel (0) target = $region41
    $region40: #{tpu_custom_call.1} parent=1 // pred_region
      _
    $region41: #{tpu_custom_call.1} parent=1 // pred_fallthru
      _
    // Predicated region
    $region42: #{tpu_custom_call.1} parent=1 // pred_check
      _
    $region43: #{tpu_custom_call.1} parent=1 // pred_check_branch
      %52 = sbr.rel (0) target = $region45
    $region44: #{tpu_custom_call.1} parent=1 // pred_region
      _
    $region45: #{tpu_custom_call.1} parent=1 // pred_fallthru
      _
    // Predicated region
    $region46: #{tpu_custom_call.1} parent=1 // pred_check
      _
    $region47: #{tpu_custom_call.1} parent=1 // pred_check_branch
      %54 = sbr.rel (0) target = $region49
    $region48: #{tpu_custom_call.1} parent=1 // pred_region
      _
    $region49: #{tpu_custom_call.1} parent=1 // pred_fallthru
      _
    // Predicated region
    $region50: #{tpu_custom_call.1} parent=1 // pred_check
      _
    $region51: #{tpu_custom_call.1} parent=1 // pred_check_branch
      %56 = sbr.rel (0) target = $region53
    $region52: #{tpu_custom_call.1} parent=1 // pred_region
      _
    $region53: #{tpu_custom_call.1} parent=1 // pred_fallthru
      _
    // Predicated region
    $region54: #{tpu_custom_call.1} parent=1 // pred_check
      _
    $region55: #{tpu_custom_call.1} parent=1 // pred_check_branch
      %58 = sbr.rel (0) target = $region57
    $region56: #{tpu_custom_call.1} parent=1 // pred_region
      _
    $region57: #{tpu_custom_call.1} parent=1 // pred_fallthru
      _
    // Predicated region
    $region58: #{tpu_custom_call.1} parent=1 // pred_check
      _
    $region59: #{tpu_custom_call.1} parent=1 // pred_check_branch
      %60 = sbr.rel (0) target = $region61
    $region60: #{tpu_custom_call.1} parent=1 // pred_region
      _
    $region61: #{tpu_custom_call.1} parent=1 // pred_fallthru
      _
    // Predicated region
    $region62: #{tpu_custom_call.1} parent=1 // pred_check
      _
    $region63: #{tpu_custom_call.1} parent=1 // pred_check_branch
      %62 = sbr.rel (0) target = $region65
    $region64: #{tpu_custom_call.1} parent=1 // pred_region
      _
    $region65: #{tpu_custom_call.1} parent=1 // pred_fallthru
      _
    // Predicated region
    $region66: #{tpu_custom_call.1} parent=1 // pred_check
      _
    $region67: #{tpu_custom_call.1} parent=1 // pred_check_branch
      %64 = sbr.rel (0) target = $region69
    $region68: #{tpu_custom_call.1} parent=1 // pred_region
      _
    $region69: #{tpu_custom_call.1} parent=1 // pred_fallthru
      _
    // Predicated region
    $region70: #{tpu_custom_call.1} parent=1 // pred_check
      _
    $region71: #{tpu_custom_call.1} parent=1 // pred_check_branch
      %66 = sbr.rel (0) target = $region73
    $region72: #{tpu_custom_call.1} parent=1 // pred_region
      _
    $region73: #{tpu_custom_call.1} parent=1 // pred_fallthru
      _
    // Predicated region
    $region74: #{tpu_custom_call.1} parent=1 // pred_check
      _
    $region75: #{tpu_custom_call.1} parent=1 // pred_check_branch
      %68 = sbr.rel (0) target = $region77
    $region76: #{tpu_custom_call.1} parent=1 // pred_region
      _
    $region77: #{tpu_custom_call.1} parent=1 // pred_fallthru
      _
    // Predicated region
    $region78: #{tpu_custom_call.1} parent=1 // pred_check
      _
    $region79: #{tpu_custom_call.1} parent=1 // pred_check_branch
      %70 = sbr.rel (0) target = $region81
    $region80: #{tpu_custom_call.1} parent=1 // pred_region
      _
    $region81: #{tpu_custom_call.1} parent=1 // pred_fallthru
      _
    // Predicated region
    $region82: #{tpu_custom_call.1} parent=1 // pred_check
      _
    $region83: #{tpu_custom_call.1} parent=1 // pred_check_branch
      %72 = sbr.rel (0) target = $region85
    $region84: #{tpu_custom_call.1} parent=1 // pred_region
      _
    $region85: #{tpu_custom_call.1} parent=1 // pred_fallthru
      _
    // Predicated region
    $region86: #{tpu_custom_call.1} parent=1 // pred_check
      _
    $region87: #{tpu_custom_call.1} parent=1 // pred_check_branch
      %74 = sbr.rel (0) target = $region89
    $region88: #{tpu_custom_call.1} parent=1 // pred_region
      _
    $region89: #{tpu_custom_call.1} parent=1 // pred_fallthru
      _
    // Predicated region
    $region90: #{tpu_custom_call.1} parent=1 // pred_check
      _
    $region91: #{tpu_custom_call.1} parent=1 // pred_check_branch
      %76 = sbr.rel (0) target = $region93
    $region92: #{tpu_custom_call.1} parent=1 // pred_region
      _
    $region93: #{tpu_custom_call.1} parent=1 // pred_fallthru
      _
    %v77 = vld [vmem:[%s0] sm:$0xff]
    %v78 = vld [vmem:[%s0 + $0x8] sm:$0xff]
    %v79 = vld [vmem:[%s0 + $0x10] sm:$0xff]
    %v80 = vld [vmem:[%s0 + $0x18] sm:$0xff]
    %v81 = vld [vmem:[%s0 + $0x20] sm:$0xff]
    %v82 = vld [vmem:[%s0 + $0x28] sm:$0xff]
    %v83 = vld [vmem:[%s0 + $0x30] sm:$0xff]
    %v84 = vld [vmem:[%s0 + $0x38] sm:$0xff]
    %v85 = vld [vmem:[%s0 + $0x40] sm:$0xff]
    %v86 = vld [vmem:[%s0 + $0x48] sm:$0xff]
    %v87 = vld [vmem:[%s0 + $0x50] sm:$0xff]
    %v88 = vld [vmem:[%s0 + $0x58] sm:$0xff]
    %v89 = vld [vmem:[%s0 + $0x60] sm:$0xff]
    %v90 = vld [vmem:[%s0 + $0x68] sm:$0xff]
    %v91 = vld [vmem:[%s0 + $0x70] sm:$0xff]
    %v92 = vld [vmem:[%s0 + $0x78] sm:$0xff]
    %v93 = vld [vmem:[%s0 + $0x80] sm:$0xff]
    %v94 = vld [vmem:[%s0 + $0x88] sm:$0xff]
    %v95 = vld [vmem:[%s0 + $0x90] sm:$0xff]
    %v96 = vld [vmem:[%s0 + $0x98] sm:$0xff]
    %v97 = vld [vmem:[%s0 + $0xa0] sm:$0xff]
    %v98 = vld [vmem:[%s0 + $0xa8] sm:$0xff]
    %v99 = vld [vmem:[%s0 + $0xb0] sm:$0xff]
    %v100 = vld [vmem:[%s0 + $0xb8] sm:$0xff]
    %v101 = vld [vmem:[%s0 + $0xc0] sm:$0xff]
    %v102 = vld [vmem:[%s0 + $0xc8] sm:$0xff]
    %v103 = vld [vmem:[%s0 + $0xd0] sm:$0xff]
    %v104 = vld [vmem:[%s0 + $0xd8] sm:$0xff]
    %v105 = vld [vmem:[%s0 + $0xe0] sm:$0xff]
    %v106 = vld [vmem:[%s0 + $0xe8] sm:$0xff]
    %v107 = vld [vmem:[%s0 + $0xf0] sm:$0xff]
    %v108 = vld [vmem:[%s0 + $0xf8] sm:$0x3]
    %v109 = vld [vmem:[%s1] sm:$0x1f]
    %v110 = vld [vmem:[%s2] sm:$0x1]
    %v111 = vld [vmem:[%s3] sm:$0x1]
    %v112 = vld [vmem:[%s4] sm:$0xff]
    %v113 = vld [vmem:[%s4 + $0x8] sm:$0xff]
    %v114 = vld [vmem:[%s4 + $0x10] sm:$0xff]
    %v115 = vld [vmem:[%s4 + $0x18] sm:$0xff]
    %v116 = vld [vmem:[%s4 + $0x20] sm:$0xff]
    %v117 = vld [vmem:[%s4 + $0x28] sm:$0xff]
    %v118 = vld [vmem:[%s4 + $0x30] sm:$0xff]
    %v119 = vld [vmem:[%s4 + $0x38] sm:$0xff]
    %v120 = vld [vmem:[%s4 + $0x40] sm:$0xff]
    %v121 = vld [vmem:[%s4 + $0x48] sm:$0xff]
    %v122 = vld [vmem:[%s4 + $0x50] sm:$0xff]
    %v123 = vld [vmem:[%s4 + $0x58] sm:$0xff]
    %v124 = vld [vmem:[%s4 + $0x60] sm:$0xff]
    %v125 = vld [vmem:[%s4 + $0x68] sm:$0xff]
    %v126 = vld [vmem:[%s4 + $0x70] sm:$0xff]
    %v127 = vld [vmem:[%s4 + $0x78] sm:$0xff]
    %v128 = vld [vmem:[%s4 + $0x80] sm:$0xff]
    %v129 = vld [vmem:[%s4 + $0x88] sm:$0xff]
    %v130 = vld [vmem:[%s4 + $0x90] sm:$0xff]
    %v131 = vld [vmem:[%s4 + $0x98] sm:$0xff]
    %v132 = vld [vmem:[%s4 + $0xa0] sm:$0xff]
    %v133 = vld [vmem:[%s4 + $0xa8] sm:$0xff]
    %v134 = vld [vmem:[%s4 + $0xb0] sm:$0xff]
    %v135 = vld [vmem:[%s4 + $0xb8] sm:$0xff]
    %v136 = vld [vmem:[%s4 + $0xc0] sm:$0xff]
    %v137 = vld [vmem:[%s4 + $0xc8] sm:$0xff]
    %v138 = vld [vmem:[%s4 + $0xd0] sm:$0xff]
    %v139 = vld [vmem:[%s4 + $0xd8] sm:$0xff]
    %v140 = vld [vmem:[%s4 + $0xe0] sm:$0xff]
    %v141 = vld [vmem:[%s4 + $0xe8] sm:$0xff]
    %v142 = vld [vmem:[%s4 + $0xf0] sm:$0x1f]
    %v143 = vld [vmem:[%s4 + $0xf8] sm:$0x1f]
    %vm176 = vcmask 1041408
    %v177 = vrot.slane %v77, 6
    %v178 = vrot.slane %v78, 6
    %v179 = vsel %vm176, %v177, %v178
    %v180 = vrot.slane %v79, 6
    %v181 = vsel %vm176, %v178, %v180
    %v182 = vrot.slane %v80, 6
    %v183 = vsel %vm176, %v180, %v182
    %v184 = vrot.slane %v81, 6
    %v185 = vsel %vm176, %v182, %v184
    %v186 = vrot.slane %v82, 6
    %v187 = vsel %vm176, %v184, %v186
    %v188 = vrot.slane %v83, 6
    %v189 = vsel %vm176, %v186, %v188
    %v190 = vrot.slane %v84, 6
    %v191 = vsel %vm176, %v188, %v190
    %v192 = vrot.slane %v85, 6
    %v193 = vsel %vm176, %v190, %v192
    %v194 = vrot.slane %v86, 6
    %v195 = vsel %vm176, %v192, %v194
    %v196 = vrot.slane %v87, 6
    %v197 = vsel %vm176, %v194, %v196
    %v198 = vrot.slane %v88, 6
    %v199 = vsel %vm176, %v196, %v198
    %v200 = vrot.slane %v89, 6
    %v201 = vsel %vm176, %v198, %v200
    %v202 = vrot.slane %v90, 6
    %v203 = vsel %vm176, %v200, %v202
    %v204 = vrot.slane %v91, 6
    %v205 = vsel %vm176, %v202, %v204
    %v206 = vrot.slane %v92, 6
    %v207 = vsel %vm176, %v204, %v206
    %v208 = vrot.slane %v93, 6
    %v209 = vsel %vm176, %v206, %v208
    %v210 = vrot.slane %v94, 6
    %v211 = vsel %vm176, %v208, %v210
    %v212 = vrot.slane %v95, 6
    %v213 = vsel %vm176, %v210, %v212
    %v214 = vrot.slane %v96, 6
    %v215 = vsel %vm176, %v212, %v214
    %v216 = vrot.slane %v97, 6
    %v217 = vsel %vm176, %v214, %v216
    %v218 = vrot.slane %v98, 6
    %v219 = vsel %vm176, %v216, %v218
    %v220 = vrot.slane %v99, 6
    %v221 = vsel %vm176, %v218, %v220
    %v222 = vrot.slane %v100, 6
    %v223 = vsel %vm176, %v220, %v222
    %v224 = vrot.slane %v101, 6
    %v225 = vsel %vm176, %v222, %v224
    %v226 = vrot.slane %v102, 6
    %v227 = vsel %vm176, %v224, %v226
    %v228 = vrot.slane %v103, 6
    %v229 = vsel %vm176, %v226, %v228
    %v230 = vrot.slane %v104, 6
    %v231 = vsel %vm176, %v228, %v230
    %v232 = vrot.slane %v105, 6
    %v233 = vsel %vm176, %v230, %v232
    %v234 = vrot.slane %v106, 6
    %v235 = vsel %vm176, %v232, %v234
    %v236 = vrot.slane %v107, 6
    %v237 = vsel %vm176, %v234, %v236
    %v238 = vrot.slane %v108, 6
    %v239 = vsel %vm176, %v236, %v238
    %v272 = vsel %vm176, 0.0, %v177
    %vm273 = vcmask 1043456
    %v274 = vsel %vm273, %v239, 0.0
    %vm277 = vcmask 1046528
    %v278 = vrot.slane %v272, 1
    %v279 = vrot.slane %v179, 1
    %v280 = vsel %vm277, %v278, %v279
    %v281 = vrot.slane %v181, 1
    %v282 = vsel %vm277, %v279, %v281
    %v283 = vrot.slane %v183, 1
    %v284 = vsel %vm277, %v281, %v283
    %v285 = vrot.slane %v185, 1
    %v286 = vsel %vm277, %v283, %v285
    %v287 = vrot.slane %v187, 1
    %v288 = vsel %vm277, %v285, %v287
    %v289 = vrot.slane %v189, 1
    %v290 = vsel %vm277, %v287, %v289
    %v291 = vrot.slane %v191, 1
    %v292 = vsel %vm277, %v289, %v291
    %v293 = vrot.slane %v193, 1
    %v294 = vsel %vm277, %v291, %v293
    %v295 = vrot.slane %v195, 1
    %v296 = vsel %vm277, %v293, %v295
    %v297 = vrot.slane %v197, 1
    %v298 = vsel %vm277, %v295, %v297
    %v299 = vrot.slane %v199, 1
    %v300 = vsel %vm277, %v297, %v299
    %v301 = vrot.slane %v201, 1
    %v302 = vsel %vm277, %v299, %v301
    %v303 = vrot.slane %v203, 1
    %v304 = vsel %vm277, %v301, %v303
    %v305 = vrot.slane %v205, 1
    %v306 = vsel %vm277, %v303, %v305
    %v307 = vrot.slane %v207, 1
    %v308 = vsel %vm277, %v305, %v307
    %v309 = vrot.slane %v209, 1
    %v310 = vsel %vm277, %v307, %v309
    %v311 = vrot.slane %v211, 1
    %v312 = vsel %vm277, %v309, %v311
    %v313 = vrot.slane %v213, 1
    %v314 = vsel %vm277, %v311, %v313
    %v315 = vrot.slane %v215, 1
    %v316 = vsel %vm277, %v313, %v315
    %v317 = vrot.slane %v217, 1
    %v318 = vsel %vm277, %v315, %v317
    %v319 = vrot.slane %v219, 1
    %v320 = vsel %vm277, %v317, %v319
    %v321 = vrot.slane %v221, 1
    %v322 = vsel %vm277, %v319, %v321
    %v323 = vrot.slane %v223, 1
    %v324 = vsel %vm277, %v321, %v323
    %v325 = vrot.slane %v225, 1
    %v326 = vsel %vm277, %v323, %v325
    %v327 = vrot.slane %v227, 1
    %v328 = vsel %vm277, %v325, %v327
    %v329 = vrot.slane %v229, 1
    %v330 = vsel %vm277, %v327, %v329
    %v331 = vrot.slane %v231, 1
    %v332 = vsel %vm277, %v329, %v331
    %v333 = vrot.slane %v233, 1
    %v334 = vsel %vm277, %v331, %v333
    %v335 = vrot.slane %v235, 1
    %v336 = vsel %vm277, %v333, %v335
    %v337 = vrot.slane %v237, 1
    %v338 = vsel %vm277, %v335, %v337
    %v339 = vrot.slane %v274, 1
    %v340 = vsel %vm277, %v337, %v339
    %341 = vrot.lane.b32.xlu0 %v280, 1
    %v342 = vpop.permute.xlu0 %341
    %343 = vrot.lane.b32.xlu0 %v282, 1
    %v344 = vpop.permute.xlu0 %343
    %345 = vrot.lane.b32.xlu0 %v284, 1
    %v346 = vpop.permute.xlu0 %345
    %347 = vrot.lane.b32.xlu0 %v286, 1
    %v348 = vpop.permute.xlu0 %347
    %349 = vrot.lane.b32.xlu0 %v288, 1
    %v350 = vpop.permute.xlu0 %349
    %351 = vrot.lane.b32.xlu0 %v290, 1
    %v352 = vpop.permute.xlu0 %351
    %353 = vrot.lane.b32.xlu0 %v292, 1
    %v354 = vpop.permute.xlu0 %353
    %355 = vrot.lane.b32.xlu0 %v294, 1
    %v356 = vpop.permute.xlu0 %355
    %357 = vrot.lane.b32.xlu0 %v296, 1
    %v358 = vpop.permute.xlu0 %357
    %359 = vrot.lane.b32.xlu0 %v298, 1
    %v360 = vpop.permute.xlu0 %359
    %361 = vrot.lane.b32.xlu0 %v300, 1
    %v362 = vpop.permute.xlu0 %361
    %363 = vrot.lane.b32.xlu0 %v302, 1
    %v364 = vpop.permute.xlu0 %363
    %365 = vrot.lane.b32.xlu0 %v304, 1
    %v366 = vpop.permute.xlu0 %365
    %367 = vrot.lane.b32.xlu0 %v306, 1
    %v368 = vpop.permute.xlu0 %367
    %369 = vrot.lane.b32.xlu0 %v308, 1
    %v370 = vpop.permute.xlu0 %369
    %371 = vrot.lane.b32.xlu0 %v310, 1
    %v372 = vpop.permute.xlu0 %371
    %373 = vrot.lane.b32.xlu0 %v312, 1
    %v374 = vpop.permute.xlu0 %373
    %375 = vrot.lane.b32.xlu0 %v314, 1
    %v376 = vpop.permute.xlu0 %375
    %377 = vrot.lane.b32.xlu0 %v316, 1
    %v378 = vpop.permute.xlu0 %377
    %379 = vrot.lane.b32.xlu0 %v318, 1
    %v380 = vpop.permute.xlu0 %379
    %381 = vrot.lane.b32.xlu0 %v320, 1
    %v382 = vpop.permute.xlu0 %381
    %383 = vrot.lane.b32.xlu0 %v322, 1
    %v384 = vpop.permute.xlu0 %383
    %385 = vrot.lane.b32.xlu0 %v324, 1
    %v386 = vpop.permute.xlu0 %385
    %387 = vrot.lane.b32.xlu0 %v326, 1
    %v388 = vpop.permute.xlu0 %387
    %389 = vrot.lane.b32.xlu0 %v328, 1
    %v390 = vpop.permute.xlu0 %389
    %391 = vrot.lane.b32.xlu0 %v330, 1
    %v392 = vpop.permute.xlu0 %391
    %393 = vrot.lane.b32.xlu0 %v332, 1
    %v394 = vpop.permute.xlu0 %393
    %395 = vrot.lane.b32.xlu0 %v334, 1
    %v396 = vpop.permute.xlu0 %395
    %397 = vrot.lane.b32.xlu0 %v336, 1
    %v398 = vpop.permute.xlu0 %397
    %399 = vrot.lane.b32.xlu0 %v338, 1
    %v400 = vpop.permute.xlu0 %399
    %401 = vrot.lane.b32.xlu0 %v340, 1
    %v402 = vpop.permute.xlu0 %401
    %403 = vrot.lane.b32.xlu0 %v339, 1
    %v404 = vpop.permute.xlu0 %403
    %vm437 = vcmask 1045504
    %v438 = vrot.slane %v272, 2
    %v439 = vrot.slane %v179, 2
    %v440 = vsel %vm437, %v438, %v439
    %v441 = vrot.slane %v181, 2
    %v442 = vsel %vm437, %v439, %v441
    %v443 = vrot.slane %v183, 2
    %v444 = vsel %vm437, %v441, %v443
    %v445 = vrot.slane %v185, 2
    %v446 = vsel %vm437, %v443, %v445
    %v447 = vrot.slane %v187, 2
    %v448 = vsel %vm437, %v445, %v447
    %v449 = vrot.slane %v189, 2
    %v450 = vsel %vm437, %v447, %v449
    %v451 = vrot.slane %v191, 2
    %v452 = vsel %vm437, %v449, %v451
    %v453 = vrot.slane %v193, 2
    %v454 = vsel %vm437, %v451, %v453
    %v455 = vrot.slane %v195, 2
    %v456 = vsel %vm437, %v453, %v455
    %v457 = vrot.slane %v197, 2
    %v458 = vsel %vm437, %v455, %v457
    %v459 = vrot.slane %v199, 2
    %v460 = vsel %vm437, %v457, %v459
    %v461 = vrot.slane %v201, 2
    %v462 = vsel %vm437, %v459, %v461
    %v463 = vrot.slane %v203, 2
    %v464 = vsel %vm437, %v461, %v463
    %v465 = vrot.slane %v205, 2
    %v466 = vsel %vm437, %v463, %v465
    %v467 = vrot.slane %v207, 2
    %v468 = vsel %vm437, %v465, %v467
    %v469 = vrot.slane %v209, 2
    %v470 = vsel %vm437, %v467, %v469
    %v471 = vrot.slane %v211, 2
    %v472 = vsel %vm437, %v469, %v471
    %v473 = vrot.slane %v213, 2
    %v474 = vsel %vm437, %v471, %v473
    %v475 = vrot.slane %v215, 2
    %v476 = vsel %vm437, %v473, %v475
    %v477 = vrot.slane %v217, 2
    %v478 = vsel %vm437, %v475, %v477
    %v479 = vrot.slane %v219, 2
    %v480 = vsel %vm437, %v477, %v479
    %v481 = vrot.slane %v221, 2
    %v482 = vsel %vm437, %v479, %v481
    %v483 = vrot.slane %v223, 2
    %v484 = vsel %vm437, %v481, %v483
    %v485 = vrot.slane %v225, 2
    %v486 = vsel %vm437, %v483, %v485
    %v487 = vrot.slane %v227, 2
    %v488 = vsel %vm437, %v485, %v487
    %v489 = vrot.slane %v229, 2
    %v490 = vsel %vm437, %v487, %v489
    %v491 = vrot.slane %v231, 2
    %v492 = vsel %vm437, %v489, %v491
    %v493 = vrot.slane %v233, 2
    %v494 = vsel %vm437, %v491, %v493
    %v495 = vrot.slane %v235, 2
    %v496 = vsel %vm437, %v493, %v495
    %v497 = vrot.slane %v237, 2
    %v498 = vsel %vm437, %v495, %v497
    %v499 = vrot.slane %v274, 2
    %v500 = vsel %vm437, %v497, %v499
    %501 = vrot.lane.b32.xlu0 %v440, 2
    %v502 = vpop.permute.xlu0 %501
    %503 = vrot.lane.b32.xlu0 %v442, 2
    %v504 = vpop.permute.xlu0 %503
    %505 = vrot.lane.b32.xlu0 %v444, 2
    %v506 = vpop.permute.xlu0 %505
    %507 = vrot.lane.b32.xlu0 %v446, 2
    %v508 = vpop.permute.xlu0 %507
    %509 = vrot.lane.b32.xlu0 %v448, 2
    %v510 = vpop.permute.xlu0 %509
    %511 = vrot.lane.b32.xlu0 %v450, 2
    %v512 = vpop.permute.xlu0 %511
    %513 = vrot.lane.b32.xlu0 %v452, 2
    %v514 = vpop.permute.xlu0 %513
    %515 = vrot.lane.b32.xlu0 %v454, 2
    %v516 = vpop.permute.xlu0 %515
    %517 = vrot.lane.b32.xlu0 %v456, 2
    %v518 = vpop.permute.xlu0 %517
    %519 = vrot.lane.b32.xlu0 %v458, 2
    %v520 = vpop.permute.xlu0 %519
    %521 = vrot.lane.b32.xlu0 %v460, 2
    %v522 = vpop.permute.xlu0 %521
    %523 = vrot.lane.b32.xlu0 %v462, 2
    %v524 = vpop.permute.xlu0 %523
    %525 = vrot.lane.b32.xlu0 %v464, 2
    %v526 = vpop.permute.xlu0 %525
    %527 = vrot.lane.b32.xlu0 %v466, 2
    %v528 = vpop.permute.xlu0 %527
    %529 = vrot.lane.b32.xlu0 %v468, 2
    %v530 = vpop.permute.xlu0 %529
    %531 = vrot.lane.b32.xlu0 %v470, 2
    %v532 = vpop.permute.xlu0 %531
    %533 = vrot.lane.b32.xlu0 %v472, 2
    %v534 = vpop.permute.xlu0 %533
    %535 = vrot.lane.b32.xlu0 %v474, 2
    %v536 = vpop.permute.xlu0 %535
    %537 = vrot.lane.b32.xlu0 %v476, 2
    %v538 = vpop.permute.xlu0 %537
    %539 = vrot.lane.b32.xlu0 %v478, 2
    %v540 = vpop.permute.xlu0 %539
    %541 = vrot.lane.b32.xlu0 %v480, 2
    %v542 = vpop.permute.xlu0 %541
    %543 = vrot.lane.b32.xlu0 %v482, 2
    %v544 = vpop.permute.xlu0 %543
    %545 = vrot.lane.b32.xlu0 %v484, 2
    %v546 = vpop.permute.xlu0 %545
    %547 = vrot.lane.b32.xlu0 %v486, 2
    %v548 = vpop.permute.xlu0 %547
    %549 = vrot.lane.b32.xlu0 %v488, 2
    %v550 = vpop.permute.xlu0 %549
    %551 = vrot.lane.b32.xlu0 %v490, 2
    %v552 = vpop.permute.xlu0 %551
    %553 = vrot.lane.b32.xlu0 %v492, 2
    %v554 = vpop.permute.xlu0 %553
    %555 = vrot.lane.b32.xlu0 %v494, 2
    %v556 = vpop.permute.xlu0 %555
    %557 = vrot.lane.b32.xlu0 %v496, 2
    %v558 = vpop.permute.xlu0 %557
    %559 = vrot.lane.b32.xlu0 %v498, 2
    %v560 = vpop.permute.xlu0 %559
    %561 = vrot.lane.b32.xlu0 %v500, 2
    %v562 = vpop.permute.xlu0 %561
    %563 = vrot.lane.b32.xlu0 %v499, 2
    %v564 = vpop.permute.xlu0 %563
    %vm597 = vcmask 1044480
    %v598 = vrot.slane %v272, 3
    %v599 = vrot.slane %v179, 3
    %v600 = vsel %vm597, %v598, %v599
    %v601 = vrot.slane %v181, 3
    %v602 = vsel %vm597, %v599, %v601
    %v603 = vrot.slane %v183, 3
    %v604 = vsel %vm597, %v601, %v603
    %v605 = vrot.slane %v185, 3
    %v606 = vsel %vm597, %v603, %v605
    %v607 = vrot.slane %v187, 3
    %v608 = vsel %vm597, %v605, %v607
    %v609 = vrot.slane %v189, 3
    %v610 = vsel %vm597, %v607, %v609
    %v611 = vrot.slane %v191, 3
    %v612 = vsel %vm597, %v609, %v611
    %v613 = vrot.slane %v193, 3
    %v614 = vsel %vm597, %v611, %v613
    %v615 = vrot.slane %v195, 3
    %v616 = vsel %vm597, %v613, %v615
    %v617 = vrot.slane %v197, 3
    %v618 = vsel %vm597, %v615, %v617
    %v619 = vrot.slane %v199, 3
    %v620 = vsel %vm597, %v617, %v619
    %v621 = vrot.slane %v201, 3
    %v622 = vsel %vm597, %v619, %v621
    %v623 = vrot.slane %v203, 3
    %v624 = vsel %vm597, %v621, %v623
    %v625 = vrot.slane %v205, 3
    %v626 = vsel %vm597, %v623, %v625
    %v627 = vrot.slane %v207, 3
    %v628 = vsel %vm597, %v625, %v627
    %v629 = vrot.slane %v209, 3
    %v630 = vsel %vm597, %v627, %v629
    %v631 = vrot.slane %v211, 3
    %v632 = vsel %vm597, %v629, %v631
    %v633 = vrot.slane %v213, 3
    %v634 = vsel %vm597, %v631, %v633
    %v635 = vrot.slane %v215, 3
    %v636 = vsel %vm597, %v633, %v635
    %v637 = vrot.slane %v217, 3
    %v638 = vsel %vm597, %v635, %v637
    %v639 = vrot.slane %v219, 3
    %v640 = vsel %vm597, %v637, %v639
    %v641 = vrot.slane %v221, 3
    %v642 = vsel %vm597, %v639, %v641
    %v643 = vrot.slane %v223, 3
    %v644 = vsel %vm597, %v641, %v643
    %v645 = vrot.slane %v225, 3
    %v646 = vsel %vm597, %v643, %v645
    %v647 = vrot.slane %v227, 3
    %v648 = vsel %vm597, %v645, %v647
    %v649 = vrot.slane %v229, 3
    %v650 = vsel %vm597, %v647, %v649
    %v651 = vrot.slane %v231, 3
    %v652 = vsel %vm597, %v649, %v651
    %v653 = vrot.slane %v233, 3
    %v654 = vsel %vm597, %v651, %v653
    %v655 = vrot.slane %v235, 3
    %v656 = vsel %vm597, %v653, %v655
    %v657 = vrot.slane %v237, 3
    %v658 = vsel %vm597, %v655, %v657
    %v659 = vrot.slane %v274, 3
    %v660 = vsel %vm597, %v657, %v659
    %661 = vrot.lane.b32.xlu0 %v600, 3
    %v662 = vpop.permute.xlu0 %661
    %663 = vrot.lane.b32.xlu0 %v602, 3
    %v664 = vpop.permute.xlu0 %663
    %665 = vrot.lane.b32.xlu0 %v604, 3
    %v666 = vpop.permute.xlu0 %665
    %667 = vrot.lane.b32.xlu0 %v606, 3
    %v668 = vpop.permute.xlu0 %667
    %669 = vrot.lane.b32.xlu0 %v608, 3
    %v670 = vpop.permute.xlu0 %669
    %671 = vrot.lane.b32.xlu0 %v610, 3
    %v672 = vpop.permute.xlu0 %671
    %673 = vrot.lane.b32.xlu0 %v612, 3
    %v674 = vpop.permute.xlu0 %673
    %675 = vrot.lane.b32.xlu0 %v614, 3
    %v676 = vpop.permute.xlu0 %675
    %677 = vrot.lane.b32.xlu0 %v616, 3
    %v678 = vpop.permute.xlu0 %677
    %679 = vrot.lane.b32.xlu0 %v618, 3
    %v680 = vpop.permute.xlu0 %679
    %681 = vrot.lane.b32.xlu0 %v620, 3
    %v682 = vpop.permute.xlu0 %681
    %683 = vrot.lane.b32.xlu0 %v622, 3
    %v684 = vpop.permute.xlu0 %683
    %685 = vrot.lane.b32.xlu0 %v624, 3
    %v686 = vpop.permute.xlu0 %685
    %687 = vrot.lane.b32.xlu0 %v626, 3
    %v688 = vpop.permute.xlu0 %687
    %689 = vrot.lane.b32.xlu0 %v628, 3
    %v690 = vpop.permute.xlu0 %689
    %691 = vrot.lane.b32.xlu0 %v630, 3
    %v692 = vpop.permute.xlu0 %691
    %693 = vrot.lane.b32.xlu0 %v632, 3
    %v694 = vpop.permute.xlu0 %693
    %695 = vrot.lane.b32.xlu0 %v634, 3
    %v696 = vpop.permute.xlu0 %695
    %697 = vrot.lane.b32.xlu0 %v636, 3
    %v698 = vpop.permute.xlu0 %697
    %699 = vrot.lane.b32.xlu0 %v638, 3
    %v700 = vpop.permute.xlu0 %699
    %701 = vrot.lane.b32.xlu0 %v640, 3
    %v702 = vpop.permute.xlu0 %701
    %703 = vrot.lane.b32.xlu0 %v642, 3
    %v704 = vpop.permute.xlu0 %703
    %705 = vrot.lane.b32.xlu0 %v644, 3
    %v706 = vpop.permute.xlu0 %705
    %707 = vrot.lane.b32.xlu0 %v646, 3
    %v708 = vpop.permute.xlu0 %707
    %709 = vrot.lane.b32.xlu0 %v648, 3
    %v710 = vpop.permute.xlu0 %709
    %711 = vrot.lane.b32.xlu0 %v650, 3
    %v712 = vpop.permute.xlu0 %711
    %713 = vrot.lane.b32.xlu0 %v652, 3
    %v714 = vpop.permute.xlu0 %713
    %715 = vrot.lane.b32.xlu0 %v654, 3
    %v716 = vpop.permute.xlu0 %715
    %717 = vrot.lane.b32.xlu0 %v656, 3
    %v718 = vpop.permute.xlu0 %717
    %719 = vrot.lane.b32.xlu0 %v658, 3
    %v720 = vpop.permute.xlu0 %719
    %721 = vrot.lane.b32.xlu0 %v660, 3
    %v722 = vpop.permute.xlu0 %721
    %723 = vrot.lane.b32.xlu0 %v659, 3
    %v724 = vpop.permute.xlu0 %723
    %v757 = vrot.slane %v272, 4
    %v758 = vrot.slane %v179, 4
    %v759 = vsel %vm273, %v757, %v758
    %v760 = vrot.slane %v181, 4
    %v761 = vsel %vm273, %v758, %v760
    %v762 = vrot.slane %v183, 4
    %v763 = vsel %vm273, %v760, %v762
    %v764 = vrot.slane %v185, 4
    %v765 = vsel %vm273, %v762, %v764
    %v766 = vrot.slane %v187, 4
    %v767 = vsel %vm273, %v764, %v766
    %v768 = vrot.slane %v189, 4
    %v769 = vsel %vm273, %v766, %v768
    %v770 = vrot.slane %v191, 4
    %v771 = vsel %vm273, %v768, %v770
    %v772 = vrot.slane %v193, 4
    %v773 = vsel %vm273, %v770, %v772
    %v774 = vrot.slane %v195, 4
    %v775 = vsel %vm273, %v772, %v774
    %v776 = vrot.slane %v197, 4
    %v777 = vsel %vm273, %v774, %v776
    %v778 = vrot.slane %v199, 4
    %v779 = vsel %vm273, %v776, %v778
    %v780 = vrot.slane %v201, 4
    %v781 = vsel %vm273, %v778, %v780
    %v782 = vrot.slane %v203, 4
    %v783 = vsel %vm273, %v780, %v782
    %v784 = vrot.slane %v205, 4
    %v785 = vsel %vm273, %v782, %v784
    %v786 = vrot.slane %v207, 4
    %v787 = vsel %vm273, %v784, %v786
    %v788 = vrot.slane %v209, 4
    %v789 = vsel %vm273, %v786, %v788
    %v790 = vrot.slane %v211, 4
    %v791 = vsel %vm273, %v788, %v790
    %v792 = vrot.slane %v213, 4
    %v793 = vsel %vm273, %v790, %v792
    %v794 = vrot.slane %v215, 4
    %v795 = vsel %vm273, %v792, %v794
    %v796 = vrot.slane %v217, 4
    %v797 = vsel %vm273, %v794, %v796
    %v798 = vrot.slane %v219, 4
    %v799 = vsel %vm273, %v796, %v798
    %v800 = vrot.slane %v221, 4
    %v801 = vsel %vm273, %v798, %v800
    %v802 = vrot.slane %v223, 4
    %v803 = vsel %vm273, %v800, %v802
    %v804 = vrot.slane %v225, 4
    %v805 = vsel %vm273, %v802, %v804
    %v806 = vrot.slane %v227, 4
    %v807 = vsel %vm273, %v804, %v806
    %v808 = vrot.slane %v229, 4
    %v809 = vsel %vm273, %v806, %v808
    %v810 = vrot.slane %v231, 4
    %v811 = vsel %vm273, %v808, %v810
    %v812 = vrot.slane %v233, 4
    %v813 = vsel %vm273, %v810, %v812
    %v814 = vrot.slane %v235, 4
    %v815 = vsel %vm273, %v812, %v814
    %v816 = vrot.slane %v237, 4
    %v817 = vsel %vm273, %v814, %v816
    %v818 = vrot.slane %v274, 4
    %v819 = vsel %vm273, %v816, %v818
    %820 = vrot.lane.b32.xlu0 %v759, 4
    %v821 = vpop.permute.xlu0 %820
    %822 = vrot.lane.b32.xlu0 %v761, 4
    %v823 = vpop.permute.xlu0 %822
    %824 = vrot.lane.b32.xlu0 %v763, 4
    %v825 = vpop.permute.xlu0 %824
    %826 = vrot.lane.b32.xlu0 %v765, 4
    %v827 = vpop.permute.xlu0 %826
    %828 = vrot.lane.b32.xlu0 %v767, 4
    %v829 = vpop.permute.xlu0 %828
    %830 = vrot.lane.b32.xlu0 %v769, 4
    %v831 = vpop.permute.xlu0 %830
    %832 = vrot.lane.b32.xlu0 %v771, 4
    %v833 = vpop.permute.xlu0 %832
    %834 = vrot.lane.b32.xlu0 %v773, 4
    %v835 = vpop.permute.xlu0 %834
    %836 = vrot.lane.b32.xlu0 %v775, 4
    %v837 = vpop.permute.xlu0 %836
    %838 = vrot.lane.b32.xlu0 %v777, 4
    %v839 = vpop.permute.xlu0 %838
    %840 = vrot.lane.b32.xlu0 %v779, 4
    %v841 = vpop.permute.xlu0 %840
    %842 = vrot.lane.b32.xlu0 %v781, 4
    %v843 = vpop.permute.xlu0 %842
    %844 = vrot.lane.b32.xlu0 %v783, 4
    %v845 = vpop.permute.xlu0 %844
    %846 = vrot.lane.b32.xlu0 %v785, 4
    %v847 = vpop.permute.xlu0 %846
    %848 = vrot.lane.b32.xlu0 %v787, 4
    %v849 = vpop.permute.xlu0 %848
    %850 = vrot.lane.b32.xlu0 %v789, 4
    %v851 = vpop.permute.xlu0 %850
    %852 = vrot.lane.b32.xlu0 %v791, 4
    %v853 = vpop.permute.xlu0 %852
    %854 = vrot.lane.b32.xlu0 %v793, 4
    %v855 = vpop.permute.xlu0 %854
    %856 = vrot.lane.b32.xlu0 %v795, 4
    %v857 = vpop.permute.xlu0 %856
    %858 = vrot.lane.b32.xlu0 %v797, 4
    %v859 = vpop.permute.xlu0 %858
    %860 = vrot.lane.b32.xlu0 %v799, 4
    %v861 = vpop.permute.xlu0 %860
    %862 = vrot.lane.b32.xlu0 %v801, 4
    %v863 = vpop.permute.xlu0 %862
    %864 = vrot.lane.b32.xlu0 %v803, 4
    %v865 = vpop.permute.xlu0 %864
    %866 = vrot.lane.b32.xlu0 %v805, 4
    %v867 = vpop.permute.xlu0 %866
    %868 = vrot.lane.b32.xlu0 %v807, 4
    %v869 = vpop.permute.xlu0 %868
    %870 = vrot.lane.b32.xlu0 %v809, 4
    %v871 = vpop.permute.xlu0 %870
    %872 = vrot.lane.b32.xlu0 %v811, 4
    %v873 = vpop.permute.xlu0 %872
    %874 = vrot.lane.b32.xlu0 %v813, 4
    %v875 = vpop.permute.xlu0 %874
    %876 = vrot.lane.b32.xlu0 %v815, 4
    %v877 = vpop.permute.xlu0 %876
    %878 = vrot.lane.b32.xlu0 %v817, 4
    %v879 = vpop.permute.xlu0 %878
    %880 = vrot.lane.b32.xlu0 %v819, 4
    %v881 = vpop.permute.xlu0 %880
    %882 = vrot.lane.b32.xlu0 %v818, 4
    %v883 = vpop.permute.xlu0 %882
    %vm916 = vcmask 7168
    %v917 = vsel %vm916, %v272, %v342
    %v918 = vsel %vm916, %v179, %v344
    %v919 = vsel %vm916, %v181, %v346
    %v920 = vsel %vm916, %v183, %v348
    %v921 = vsel %vm916, %v185, %v350
    %v922 = vsel %vm916, %v187, %v352
    %v923 = vsel %vm916, %v189, %v354
    %v924 = vsel %vm916, %v191, %v356
    %v925 = vsel %vm916, %v193, %v358
    %v926 = vsel %vm916, %v195, %v360
    %v927 = vsel %vm916, %v197, %v362
    %v928 = vsel %vm916, %v199, %v364
    %v929 = vsel %vm916, %v201, %v366
    %v930 = vsel %vm916, %v203, %v368
    %v931 = vsel %vm916, %v205, %v370
    %v932 = vsel %vm916, %v207, %v372
    %v933 = vsel %vm916, %v209, %v374
    %v934 = vsel %vm916, %v211, %v376
    %v935 = vsel %vm916, %v213, %v378
    %v936 = vsel %vm916, %v215, %v380
    %v937 = vsel %vm916, %v217, %v382
    %v938 = vsel %vm916, %v219, %v384
    %v939 = vsel %vm916, %v221, %v386
    %v940 = vsel %vm916, %v223, %v388
    %v941 = vsel %vm916, %v225, %v390
    %v942 = vsel %vm916, %v227, %v392
    %v943 = vsel %vm916, %v229, %v394
    %v944 = vsel %vm916, %v231, %v396
    %v945 = vsel %vm916, %v233, %v398
    %v946 = vsel %vm916, %v235, %v400
    %v947 = vsel %vm916, %v237, %v402
    %v948 = vsel %vm916, %v274, %v404
    %vm949 = vcmask 15360
    %v950 = vsel %vm949, %v917, %v502
    %v951 = vsel %vm949, %v918, %v504
    %v952 = vsel %vm949, %v919, %v506
    %v953 = vsel %vm949, %v920, %v508
    %v954 = vsel %vm949, %v921, %v510
    %v955 = vsel %vm949, %v922, %v512
    %v956 = vsel %vm949, %v923, %v514
    %v957 = vsel %vm949, %v924, %v516
    %v958 = vsel %vm949, %v925, %v518
    %v959 = vsel %vm949, %v926, %v520
    %v960 = vsel %vm949, %v927, %v522
    %v961 = vsel %vm949, %v928, %v524
    %v962 = vsel %vm949, %v929, %v526
    %v963 = vsel %vm949, %v930, %v528
    %v964 = vsel %vm949, %v931, %v530
    %v965 = vsel %vm949, %v932, %v532
    %v966 = vsel %vm949, %v933, %v534
    %v967 = vsel %vm949, %v934, %v536
    %v968 = vsel %vm949, %v935, %v538
    %v969 = vsel %vm949, %v936, %v540
    %v970 = vsel %vm949, %v937, %v542
    %v971 = vsel %vm949, %v938, %v544
    %v972 = vsel %vm949, %v939, %v546
    %v973 = vsel %vm949, %v940, %v548
    %v974 = vsel %vm949, %v941, %v550
    %v975 = vsel %vm949, %v942, %v552
    %v976 = vsel %vm949, %v943, %v554
    %v977 = vsel %vm949, %v944, %v556
    %v978 = vsel %vm949, %v945, %v558
    %v979 = vsel %vm949, %v946, %v560
    %v980 = vsel %vm949, %v947, %v562
    %v981 = vsel %vm949, %v948, %v564
    %vm982 = vcmask 23552
    %v983 = vsel %vm982, %v950, %v662
    %v984 = vsel %vm982, %v951, %v664
    %v985 = vsel %vm982, %v952, %v666
    %v986 = vsel %vm982, %v953, %v668
    %v987 = vsel %vm982, %v954, %v670
    %v988 = vsel %vm982, %v955, %v672
    %v989 = vsel %vm982, %v956, %v674
    %v990 = vsel %vm982, %v957, %v676
    %v991 = vsel %vm982, %v958, %v678
    %v992 = vsel %vm982, %v959, %v680
    %v993 = vsel %vm982, %v960, %v682
    %v994 = vsel %vm982, %v961, %v684
    %v995 = vsel %vm982, %v962, %v686
    %v996 = vsel %vm982, %v963, %v688
    %v997 = vsel %vm982, %v964, %v690
    %v998 = vsel %vm982, %v965, %v692
    %v999 = vsel %vm982, %v966, %v694
    %v1000 = vsel %vm982, %v967, %v696
    %v1001 = vsel %vm982, %v968, %v698
    %v1002 = vsel %vm982, %v969, %v700
    %v1003 = vsel %vm982, %v970, %v702
    %v1004 = vsel %vm982, %v971, %v704
    %v1005 = vsel %vm982, %v972, %v706
    %v1006 = vsel %vm982, %v973, %v708
    %v1007 = vsel %vm982, %v974, %v710
    %v1008 = vsel %vm982, %v975, %v712
    %v1009 = vsel %vm982, %v976, %v714
    %v1010 = vsel %vm982, %v977, %v716
    %v1011 = vsel %vm982, %v978, %v718
    %v1012 = vsel %vm982, %v979, %v720
    %v1013 = vsel %vm982, %v980, %v722
    %v1014 = vsel %vm982, %v981, %v724
    %vm1015 = vcmask 31744
    %v1016 = vsel %vm1015, %v983, %v821
    %v1017 = vsel %vm1015, %v984, %v823
    %v1018 = vsel %vm1015, %v985, %v825
    %v1019 = vsel %vm1015, %v986, %v827
    %v1020 = vsel %vm1015, %v987, %v829
    %v1021 = vsel %vm1015, %v988, %v831
    %v1022 = vsel %vm1015, %v989, %v833
    %v1023 = vsel %vm1015, %v990, %v835
    %v1024 = vsel %vm1015, %v991, %v837
    %v1025 = vsel %vm1015, %v992, %v839
    %v1026 = vsel %vm1015, %v993, %v841
    %v1027 = vsel %vm1015, %v994, %v843
    %v1028 = vsel %vm1015, %v995, %v845
    %v1029 = vsel %vm1015, %v996, %v847
    %v1030 = vsel %vm1015, %v997, %v849
    %v1031 = vsel %vm1015, %v998, %v851
    %v1032 = vsel %vm1015, %v999, %v853
    %v1033 = vsel %vm1015, %v1000, %v855
    %v1034 = vsel %vm1015, %v1001, %v857
    %v1035 = vsel %vm1015, %v1002, %v859
    %v1036 = vsel %vm1015, %v1003, %v861
    %v1037 = vsel %vm1015, %v1004, %v863
    %v1038 = vsel %vm1015, %v1005, %v865
    %v1039 = vsel %vm1015, %v1006, %v867
    %v1040 = vsel %vm1015, %v1007, %v869
    %v1041 = vsel %vm1015, %v1008, %v871
    %v1042 = vsel %vm1015, %v1009, %v873
    %v1043 = vsel %vm1015, %v1010, %v875
    %v1044 = vsel %vm1015, %v1011, %v877
    %v1045 = vsel %vm1015, %v1012, %v879
    %v1046 = vsel %vm1015, %v1013, %v881
    %v1047 = vsel %vm1015, %v1014, %v883
    %vm1048 = vcmask 39936
    %v1050 = vsel %vm1048, %v1016, 0
    %v1053 = vsel %vm1048, %v1017, 0
    %v1056 = vsel %vm1048, %v1018, 0
    %v1059 = vsel %vm1048, %v1019, 0
    %v1062 = vsel %vm1048, %v1020, 0
    %v1065 = vsel %vm1048, %v1021, 0
    %v1068 = vsel %vm1048, %v1022, 0
    %v1071 = vsel %vm1048, %v1023, 0
    %v1074 = vsel %vm1048, %v1024, 0
    %v1077 = vsel %vm1048, %v1025, 0
    %v1080 = vsel %vm1048, %v1026, 0
    %v1083 = vsel %vm1048, %v1027, 0
    %v1086 = vsel %vm1048, %v1028, 0
    %v1089 = vsel %vm1048, %v1029, 0
    %v1092 = vsel %vm1048, %v1030, 0
    %v1095 = vsel %vm1048, %v1031, 0
    %v1098 = vsel %vm1048, %v1032, 0
    %v1101 = vsel %vm1048, %v1033, 0
    %v1104 = vsel %vm1048, %v1034, 0
    %v1107 = vsel %vm1048, %v1035, 0
    %v1110 = vsel %vm1048, %v1036, 0
    %v1113 = vsel %vm1048, %v1037, 0
    %v1116 = vsel %vm1048, %v1038, 0
    %v1119 = vsel %vm1048, %v1039, 0
    %v1122 = vsel %vm1048, %v1040, 0
    %v1125 = vsel %vm1048, %v1041, 0
    %v1128 = vsel %vm1048, %v1042, 0
    %v1131 = vsel %vm1048, %v1043, 0
    %v1134 = vsel %vm1048, %v1044, 0
    %v1137 = vsel %vm1048, %v1045, 0
    %v1140 = vsel %vm1048, %v1046, 0
    %v1143 = vsel %vm1048, %v1047, 0
    %v1146 = vsel %vm597, %v109, 0
    %1148 = vmatprep.subr.mxu0 0.0
    %1149 = vmatpush1.msra.mxu0 %v1146
    %1150 = vmatprep.subr.mxu0 0.0
    %1151 = vmatpush1.msra.mxu0 0.0
    %1152 = vmatprep.subr.mxu0 0.0
    %1153 = vmatpush1.msra.mxu0 0.0
    %1154 = vmatprep.subr.mxu0 0.0
    %1155 = vmatpush1.msra.mxu0 0.0
    %1156 = vmatprep.subr.mxu0 0.0
    %1157 = vmatpush1.msra.mxu0 0.0
    %1158 = vmatprep.subr.mxu0 0.0
    %1159 = vmatpush1.msra.mxu0 0.0
    %1160 = vmatprep.subr.mxu0 0.0
    %1161 = vmatpush1.msra.mxu0 0.0
    %1162 = vmatprep.subr.mxu0 0.0
    %1163 = vmatpush1.msra.mxu0 0.0
    %1164 = vmatprep.subr.mxu0 0.0
    %1165 = vmatpush1.msra.mxu0 0.0
    %1166 = vmatprep.subr.mxu0 0.0
    %1167 = vmatpush1.msra.mxu0 0.0
    %1168 = vmatprep.subr.mxu0 0.0
    %1169 = vmatpush1.msra.mxu0 0.0
    %1170 = vmatprep.subr.mxu0 0.0
    %1171 = vmatpush1.msra.mxu0 0.0
    %1172 = vmatprep.subr.mxu0 0.0
    %1173 = vmatpush1.msra.mxu0 0.0
    %1174 = vmatprep.subr.mxu0 0.0
    %1175 = vmatpush1.msra.mxu0 0.0
    %1176 = vmatprep.subr.mxu0 0.0
    %1177 = vmatpush1.msra.mxu0 0.0
    %1178 = vmatprep.subr.mxu0 0.0
    %1179 = vmatpush1.msra.mxu0 0.0
    %1180 = vmatprep.subr.mxu0 0.0
    %1181 = vmatpush1.msra.mxu0 0.0
    %1182 = vmatprep.subr.mxu0 0.0
    %1183 = vmatpush1.msra.mxu0 0.0
    %1184 = vmatprep.subr.mxu0 0.0
    %1185 = vmatpush1.msra.mxu0 0.0
    %1186 = vmatprep.subr.mxu0 0.0
    %1187 = vmatpush1.msra.mxu0 0.0
    %1188 = vmatprep.subr.mxu0 0.0
    %1189 = vmatpush1.msra.mxu0 0.0
    %1190 = vmatprep.subr.mxu0 0.0
    %1191 = vmatpush1.msra.mxu0 0.0
    %1192 = vmatprep.subr.mxu0 0.0
    %1193 = vmatpush1.msra.mxu0 0.0
    %1194 = vmatprep.subr.mxu0 0.0
    %1195 = vmatpush1.msra.mxu0 0.0
    %1196 = vmatprep.subr.mxu0 0.0
    %1197 = vmatpush1.msra.mxu0 0.0
    %1198 = vmatprep.subr.mxu0 0.0
    %1199 = vmatpush1.msra.mxu0 0.0
    %1200 = vmatprep.subr.mxu0 0.0
    %1201 = vmatpush1.msra.mxu0 0.0
    %1202 = vmatprep.subr.mxu0 0.0
    %1203 = vmatpush1.msra.mxu0 0.0
    %1204 = vmatprep.subr.mxu0 0.0
    %1205 = vmatpush1.msra.mxu0 0.0
    %1206 = vmatprep.subr.mxu0 0.0
    %1207 = vmatpush1.msra.mxu0 0.0
    %1208 = vmatprep.subr.mxu0 0.0
    %1209 = vmatpush1.msra.mxu0 0.0
    %1210 = vmatprep.subr.mxu0 0.0
    %1211 = vmatpush1.msra.mxu0 0.0
    %1212 = vmatprep.mubr.f32.mxu0 0.0
    %1213 = vmatmul.mubr.f32.gmra.mrb[0].mxu0 %v1050
    %v1214 = vpop.f32.mrb[0].mxu0
    %v1215 = vadd.f32 0.0, %v1214
    %v1216 = vpop.f32.mrb[0].mxu0
    %1217 = vmatprep.mubr.f32.mxu0 0.0
    %1218 = vmatmul.mubr.f32.gmra.mrb[0].mxu0 %v1053
    %v1219 = vpop.f32.mrb[0].mxu0
    %v1220 = vadd.f32 0.0, %v1219
    %v1221 = vpop.f32.mrb[0].mxu0
    %1222 = vmatprep.mubr.f32.mxu0 0.0
    %1223 = vmatmul.mubr.f32.gmra.mrb[0].mxu0 %v1056
    %v1224 = vpop.f32.mrb[0].mxu0
    %v1225 = vadd.f32 0.0, %v1224
    %v1226 = vpop.f32.mrb[0].mxu0
    %1227 = vmatprep.mubr.f32.mxu0 0.0
    %1228 = vmatmul.mubr.f32.gmra.mrb[0].mxu0 %v1059
    %v1229 = vpop.f32.mrb[0].mxu0
    %v1230 = vadd.f32 0.0, %v1229
    %v1231 = vpop.f32.mrb[0].mxu0
    %1232 = vmatprep.mubr.f32.mxu0 0.0
    %1233 = vmatmul.mubr.f32.gmra.mrb[0].mxu0 %v1062
    %v1234 = vpop.f32.mrb[0].mxu0
    %v1235 = vadd.f32 0.0, %v1234
    %v1236 = vpop.f32.mrb[0].mxu0
    %1237 = vmatprep.mubr.f32.mxu0 0.0
    %1238 = vmatmul.mubr.f32.gmra.mrb[0].mxu0 %v1065
    %v1239 = vpop.f32.mrb[0].mxu0
    %v1240 = vadd.f32 0.0, %v1239
    %v1241 = vpop.f32.mrb[0].mxu0
    %1242 = vmatprep.mubr.f32.mxu0 0.0
    %1243 = vmatmul.mubr.f32.gmra.mrb[0].mxu0 %v1068
    %v1244 = vpop.f32.mrb[0].mxu0
    %v1245 = vadd.f32 0.0, %v1244
    %v1246 = vpop.f32.mrb[0].mxu0
    %1247 = vmatprep.mubr.f32.mxu0 0.0
    %1248 = vmatmul.mubr.f32.gmra.mrb[0].mxu0 %v1071
    %v1249 = vpop.f32.mrb[0].mxu0
    %v1250 = vadd.f32 0.0, %v1249
    %v1251 = vpop.f32.mrb[0].mxu0
    %1252 = vmatprep.mubr.f32.mxu0 0.0
    %1253 = vmatmul.mubr.f32.gmra.mrb[0].mxu0 %v1074
    %v1254 = vpop.f32.mrb[0].mxu0
    %v1255 = vadd.f32 0.0, %v1254
    %v1256 = vpop.f32.mrb[0].mxu0
    %1257 = vmatprep.mubr.f32.mxu0 0.0
    %1258 = vmatmul.mubr.f32.gmra.mrb[0].mxu0 %v1077
    %v1259 = vpop.f32.mrb[0].mxu0
    %v1260 = vadd.f32 0.0, %v1259
    %v1261 = vpop.f32.mrb[0].mxu0
    %1262 = vmatprep.mubr.f32.mxu0 0.0
    %1263 = vmatmul.mubr.f32.gmra.mrb[0].mxu0 %v1080
    %v1264 = vpop.f32.mrb[0].mxu0
    %v1265 = vadd.f32 0.0, %v1264
    %v1266 = vpop.f32.mrb[0].mxu0
    %1267 = vmatprep.mubr.f32.mxu0 0.0
    %1268 = vmatmul.mubr.f32.gmra.mrb[0].mxu0 %v1083
    %v1269 = vpop.f32.mrb[0].mxu0
    %v1270 = vadd.f32 0.0, %v1269
    %v1271 = vpop.f32.mrb[0].mxu0
    %1272 = vmatprep.mubr.f32.mxu0 0.0
    %1273 = vmatmul.mubr.f32.gmra.mrb[0].mxu0 %v1086
    %v1274 = vpop.f32.mrb[0].mxu0
    %v1275 = vadd.f32 0.0, %v1274
    %v1276 = vpop.f32.mrb[0].mxu0
    %1277 = vmatprep.mubr.f32.mxu0 0.0
    %1278 = vmatmul.mubr.f32.gmra.mrb[0].mxu0 %v1089
    %v1279 = vpop.f32.mrb[0].mxu0
    %v1280 = vadd.f32 0.0, %v1279
    %v1281 = vpop.f32.mrb[0].mxu0
    %1282 = vmatprep.mubr.f32.mxu0 0.0
    %1283 = vmatmul.mubr.f32.gmra.mrb[0].mxu0 %v1092
    %v1284 = vpop.f32.mrb[0].mxu0
    %v1285 = vadd.f32 0.0, %v1284
    %v1286 = vpop.f32.mrb[0].mxu0
    %1287 = vmatprep.mubr.f32.mxu0 0.0
    %1288 = vmatmul.mubr.f32.gmra.mrb[0].mxu0 %v1095
    %v1289 = vpop.f32.mrb[0].mxu0
    %v1290 = vadd.f32 0.0, %v1289
    %v1291 = vpop.f32.mrb[0].mxu0
    %1292 = vmatprep.mubr.f32.mxu0 0.0
    %1293 = vmatmul.mubr.f32.gmra.mrb[0].mxu0 %v1098
    %v1294 = vpop.f32.mrb[0].mxu0
    %v1295 = vadd.f32 0.0, %v1294
    %v1296 = vpop.f32.mrb[0].mxu0
    %1297 = vmatprep.mubr.f32.mxu0 0.0
    %1298 = vmatmul.mubr.f32.gmra.mrb[0].mxu0 %v1101
    %v1299 = vpop.f32.mrb[0].mxu0
    %v1300 = vadd.f32 0.0, %v1299
    %v1301 = vpop.f32.mrb[0].mxu0
    %1302 = vmatprep.mubr.f32.mxu0 0.0
    %1303 = vmatmul.mubr.f32.gmra.mrb[0].mxu0 %v1104
    %v1304 = vpop.f32.mrb[0].mxu0
    %v1305 = vadd.f32 0.0, %v1304
    %v1306 = vpop.f32.mrb[0].mxu0
    %1307 = vmatprep.mubr.f32.mxu0 0.0
    %1308 = vmatmul.mubr.f32.gmra.mrb[0].mxu0 %v1107
    %v1309 = vpop.f32.mrb[0].mxu0
    %v1310 = vadd.f32 0.0, %v1309
    %v1311 = vpop.f32.mrb[0].mxu0
    %1312 = vmatprep.mubr.f32.mxu0 0.0
    %1313 = vmatmul.mubr.f32.gmra.mrb[0].mxu0 %v1110
    %v1314 = vpop.f32.mrb[0].mxu0
    %v1315 = vadd.f32 0.0, %v1314
    %v1316 = vpop.f32.mrb[0].mxu0
    %1317 = vmatprep.mubr.f32.mxu0 0.0
    %1318 = vmatmul.mubr.f32.gmra.mrb[0].mxu0 %v1113
    %v1319 = vpop.f32.mrb[0].mxu0
    %v1320 = vadd.f32 0.0, %v1319
    %v1321 = vpop.f32.mrb[0].mxu0
    %1322 = vmatprep.mubr.f32.mxu0 0.0
    %1323 = vmatmul.mubr.f32.gmra.mrb[0].mxu0 %v1116
    %v1324 = vpop.f32.mrb[0].mxu0
    %v1325 = vadd.f32 0.0, %v1324
    %v1326 = vpop.f32.mrb[0].mxu0
    %1327 = vmatprep.mubr.f32.mxu0 0.0
    %1328 = vmatmul.mubr.f32.gmra.mrb[0].mxu0 %v1119
    %v1329 = vpop.f32.mrb[0].mxu0
    %v1330 = vadd.f32 0.0, %v1329
    %v1331 = vpop.f32.mrb[0].mxu0
    %1332 = vmatprep.mubr.f32.mxu0 0.0
    %1333 = vmatmul.mubr.f32.gmra.mrb[0].mxu0 %v1122
    %v1334 = vpop.f32.mrb[0].mxu0
    %v1335 = vadd.f32 0.0, %v1334
    %v1336 = vpop.f32.mrb[0].mxu0
    %1337 = vmatprep.mubr.f32.mxu0 0.0
    %1338 = vmatmul.mubr.f32.gmra.mrb[0].mxu0 %v1125
    %v1339 = vpop.f32.mrb[0].mxu0
    %v1340 = vadd.f32 0.0, %v1339
    %v1341 = vpop.f32.mrb[0].mxu0
    %1342 = vmatprep.mubr.f32.mxu0 0.0
    %1343 = vmatmul.mubr.f32.gmra.mrb[0].mxu0 %v1128
    %v1344 = vpop.f32.mrb[0].mxu0
    %v1345 = vadd.f32 0.0, %v1344
    %v1346 = vpop.f32.mrb[0].mxu0
    %1347 = vmatprep.mubr.f32.mxu0 0.0
    %1348 = vmatmul.mubr.f32.gmra.mrb[0].mxu0 %v1131
    %v1349 = vpop.f32.mrb[0].mxu0
    %v1350 = vadd.f32 0.0, %v1349
    %v1351 = vpop.f32.mrb[0].mxu0
    %1352 = vmatprep.mubr.f32.mxu0 0.0
    %1353 = vmatmul.mubr.f32.gmra.mrb[0].mxu0 %v1134
    %v1354 = vpop.f32.mrb[0].mxu0
    %v1355 = vadd.f32 0.0, %v1354
    %v1356 = vpop.f32.mrb[0].mxu0
    %1357 = vmatprep.mubr.f32.mxu0 0.0
    %1358 = vmatmul.mubr.f32.gmra.mrb[0].mxu0 %v1137
    %v1359 = vpop.f32.mrb[0].mxu0
    %v1360 = vadd.f32 0.0, %v1359
    %v1361 = vpop.f32.mrb[0].mxu0
    %1362 = vmatprep.mubr.f32.mxu0 0.0
    %1363 = vmatmul.mubr.f32.gmra.mrb[0].mxu0 %v1140
    %v1364 = vpop.f32.mrb[0].mxu0
    %v1365 = vadd.f32 0.0, %v1364
    %v1366 = vpop.f32.mrb[0].mxu0
    %1367 = vmatprep.mubr.f32.mxu0 0.0
    %1368 = vmatmul.mubr.f32.gmra.mrb[0].mxu0 %v1143
    %v1369 = vpop.f32.mrb[0].mxu0
    %v1370 = vadd.f32 0.0, %v1369
    %v1371 = vpop.f32.mrb[0].mxu0
    %1372 = vdwg.mxu0
    %v1374 = vlaneseq
    %v1375 = vshrl.u32 %v1374, 7
    %v1376 = vsub.s32 0, %v1375
    %v1377 = vrot.slane %v110, %v1376
    %v1379 = vmul.f32 %v1215, %v1377
    %v1380 = vmul.f32 %v1220, %v1377
    %v1381 = vmul.f32 %v1225, %v1377
    %v1382 = vmul.f32 %v1230, %v1377
    %v1383 = vmul.f32 %v1235, %v1377
    %v1384 = vmul.f32 %v1240, %v1377
    %v1385 = vmul.f32 %v1245, %v1377
    %v1386 = vmul.f32 %v1250, %v1377
    %v1387 = vmul.f32 %v1255, %v1377
    %v1388 = vmul.f32 %v1260, %v1377
    %v1389 = vmul.f32 %v1265, %v1377
    %v1390 = vmul.f32 %v1270, %v1377
    %v1391 = vmul.f32 %v1275, %v1377
    %v1392 = vmul.f32 %v1280, %v1377
    %v1393 = vmul.f32 %v1285, %v1377
    %v1394 = vmul.f32 %v1290, %v1377
    %v1395 = vmul.f32 %v1295, %v1377
    %v1396 = vmul.f32 %v1300, %v1377
    %v1397 = vmul.f32 %v1305, %v1377
    %v1398 = vmul.f32 %v1310, %v1377
    %v1399 = vmul.f32 %v1315, %v1377
    %v1400 = vmul.f32 %v1320, %v1377
    %v1401 = vmul.f32 %v1325, %v1377
    %v1402 = vmul.f32 %v1330, %v1377
    %v1403 = vmul.f32 %v1335, %v1377
    %v1404 = vmul.f32 %v1340, %v1377
    %v1405 = vmul.f32 %v1345, %v1377
    %v1406 = vmul.f32 %v1350, %v1377
    %v1407 = vmul.f32 %v1355, %v1377
    %v1408 = vmul.f32 %v1360, %v1377
    %v1409 = vmul.f32 %v1365, %v1377
    %v1410 = vmul.f32 %v1370, %v1377
    %v1412 = vlaneseq
    %v1413 = vshrl.u32 %v1412, 7
    %v1414 = vsub.s32 0, %v1413
    %v1415 = vrot.slane %v111, %v1414
    %v1417 = vadd.f32 %v1379, %v1415
    %v1418 = vadd.f32 %v1380, %v1415
    %v1419 = vadd.f32 %v1381, %v1415
    %v1420 = vadd.f32 %v1382, %v1415
    %v1421 = vadd.f32 %v1383, %v1415
    %v1422 = vadd.f32 %v1384, %v1415
    %v1423 = vadd.f32 %v1385, %v1415
    %v1424 = vadd.f32 %v1386, %v1415
    %v1425 = vadd.f32 %v1387, %v1415
    %v1426 = vadd.f32 %v1388, %v1415
    %v1427 = vadd.f32 %v1389, %v1415
    %v1428 = vadd.f32 %v1390, %v1415
    %v1429 = vadd.f32 %v1391, %v1415
    %v1430 = vadd.f32 %v1392, %v1415
    %v1431 = vadd.f32 %v1393, %v1415
    %v1432 = vadd.f32 %v1394, %v1415
    %v1433 = vadd.f32 %v1395, %v1415
    %v1434 = vadd.f32 %v1396, %v1415
    %v1435 = vadd.f32 %v1397, %v1415
    %v1436 = vadd.f32 %v1398, %v1415
    %v1437 = vadd.f32 %v1399, %v1415
    %v1438 = vadd.f32 %v1400, %v1415
    %v1439 = vadd.f32 %v1401, %v1415
    %v1440 = vadd.f32 %v1402, %v1415
    %v1441 = vadd.f32 %v1403, %v1415
    %v1442 = vadd.f32 %v1404, %v1415
    %v1443 = vadd.f32 %v1405, %v1415
    %v1444 = vadd.f32 %v1406, %v1415
    %v1445 = vadd.f32 %v1407, %v1415
    %v1446 = vadd.f32 %v1408, %v1415
    %v1447 = vadd.f32 %v1409, %v1415
    %v1448 = vadd.f32 %v1410, %v1415
    %v1449 = vmax.f32 %v1417, 0.0
    %v1450 = vmax.f32 %v1418, 0.0
    %v1451 = vmax.f32 %v1419, 0.0
    %v1452 = vmax.f32 %v1420, 0.0
    %v1453 = vmax.f32 %v1421, 0.0
    %v1454 = vmax.f32 %v1422, 0.0
    %v1455 = vmax.f32 %v1423, 0.0
    %v1456 = vmax.f32 %v1424, 0.0
    %v1457 = vmax.f32 %v1425, 0.0
    %v1458 = vmax.f32 %v1426, 0.0
    %v1459 = vmax.f32 %v1427, 0.0
    %v1460 = vmax.f32 %v1428, 0.0
    %v1461 = vmax.f32 %v1429, 0.0
    %v1462 = vmax.f32 %v1430, 0.0
    %v1463 = vmax.f32 %v1431, 0.0
    %v1464 = vmax.f32 %v1432, 0.0
    %v1465 = vmax.f32 %v1433, 0.0
    %v1466 = vmax.f32 %v1434, 0.0
    %v1467 = vmax.f32 %v1435, 0.0
    %v1468 = vmax.f32 %v1436, 0.0
    %v1469 = vmax.f32 %v1437, 0.0
    %v1470 = vmax.f32 %v1438, 0.0
    %v1471 = vmax.f32 %v1439, 0.0
    %v1472 = vmax.f32 %v1440, 0.0
    %v1473 = vmax.f32 %v1441, 0.0
    %v1474 = vmax.f32 %v1442, 0.0
    %v1475 = vmax.f32 %v1443, 0.0
    %v1476 = vmax.f32 %v1444, 0.0
    %v1477 = vmax.f32 %v1445, 0.0
    %v1478 = vmax.f32 %v1446, 0.0
    %v1479 = vmax.f32 %v1447, 0.0
    %v1480 = vmax.f32 %v1448, 0.0
    %v1513 = vrot.slane %v1449, 1
    %v1514 = vrot.slane %v1450, 1
    %v1515 = vsel %vm277, %v1513, %v1514
    %v1516 = vrot.slane %v1451, 1
    %v1517 = vsel %vm277, %v1514, %v1516
    %v1518 = vrot.slane %v1452, 1
    %v1519 = vsel %vm277, %v1516, %v1518
    %v1520 = vrot.slane %v1453, 1
    %v1521 = vsel %vm277, %v1518, %v1520
    %v1522 = vrot.slane %v1454, 1
    %v1523 = vsel %vm277, %v1520, %v1522
    %v1524 = vrot.slane %v1455, 1
    %v1525 = vsel %vm277, %v1522, %v1524
    %v1526 = vrot.slane %v1456, 1
    %v1527 = vsel %vm277, %v1524, %v1526
    %v1528 = vrot.slane %v1457, 1
    %v1529 = vsel %vm277, %v1526, %v1528
    %v1530 = vrot.slane %v1458, 1
    %v1531 = vsel %vm277, %v1528, %v1530
    %v1532 = vrot.slane %v1459, 1
    %v1533 = vsel %vm277, %v1530, %v1532
    %v1534 = vrot.slane %v1460, 1
    %v1535 = vsel %vm277, %v1532, %v1534
    %v1536 = vrot.slane %v1461, 1
    %v1537 = vsel %vm277, %v1534, %v1536
    %v1538 = vrot.slane %v1462, 1
    %v1539 = vsel %vm277, %v1536, %v1538
    %v1540 = vrot.slane %v1463, 1
    %v1541 = vsel %vm277, %v1538, %v1540
    %v1542 = vrot.slane %v1464, 1
    %v1543 = vsel %vm277, %v1540, %v1542
    %v1544 = vrot.slane %v1465, 1
    %v1545 = vsel %vm277, %v1542, %v1544
    %v1546 = vrot.slane %v1466, 1
    %v1547 = vsel %vm277, %v1544, %v1546
    %v1548 = vrot.slane %v1467, 1
    %v1549 = vsel %vm277, %v1546, %v1548
    %v1550 = vrot.slane %v1468, 1
    %v1551 = vsel %vm277, %v1548, %v1550
    %v1552 = vrot.slane %v1469, 1
    %v1553 = vsel %vm277, %v1550, %v1552
    %v1554 = vrot.slane %v1470, 1
    %v1555 = vsel %vm277, %v1552, %v1554
    %v1556 = vrot.slane %v1471, 1
    %v1557 = vsel %vm277, %v1554, %v1556
    %v1558 = vrot.slane %v1472, 1
    %v1559 = vsel %vm277, %v1556, %v1558
    %v1560 = vrot.slane %v1473, 1
    %v1561 = vsel %vm277, %v1558, %v1560
    %v1562 = vrot.slane %v1474, 1
    %v1563 = vsel %vm277, %v1560, %v1562
    %v1564 = vrot.slane %v1475, 1
    %v1565 = vsel %vm277, %v1562, %v1564
    %v1566 = vrot.slane %v1476, 1
    %v1567 = vsel %vm277, %v1564, %v1566
    %v1568 = vrot.slane %v1477, 1
    %v1569 = vsel %vm277, %v1566, %v1568
    %v1570 = vrot.slane %v1478, 1
    %v1571 = vsel %vm277, %v1568, %v1570
    %v1572 = vrot.slane %v1479, 1
    %v1573 = vsel %vm277, %v1570, %v1572
    %v1574 = vrot.slane %v1480, 1
    %v1575 = vsel %vm277, %v1572, %v1574
    %v1608 = vmax.f32 %v1449, %v1515
    %v1609 = vmax.f32 %v1450, %v1517
    %v1610 = vmax.f32 %v1451, %v1519
    %v1611 = vmax.f32 %v1452, %v1521
    %v1612 = vmax.f32 %v1453, %v1523
    %v1613 = vmax.f32 %v1454, %v1525
    %v1614 = vmax.f32 %v1455, %v1527
    %v1615 = vmax.f32 %v1456, %v1529
    %v1616 = vmax.f32 %v1457, %v1531
    %v1617 = vmax.f32 %v1458, %v1533
    %v1618 = vmax.f32 %v1459, %v1535
    %v1619 = vmax.f32 %v1460, %v1537
    %v1620 = vmax.f32 %v1461, %v1539
    %v1621 = vmax.f32 %v1462, %v1541
    %v1622 = vmax.f32 %v1463, %v1543
    %v1623 = vmax.f32 %v1464, %v1545
    %v1624 = vmax.f32 %v1465, %v1547
    %v1625 = vmax.f32 %v1466, %v1549
    %v1626 = vmax.f32 %v1467, %v1551
    %v1627 = vmax.f32 %v1468, %v1553
    %v1628 = vmax.f32 %v1469, %v1555
    %v1629 = vmax.f32 %v1470, %v1557
    %v1630 = vmax.f32 %v1471, %v1559
    %v1631 = vmax.f32 %v1472, %v1561
    %v1632 = vmax.f32 %v1473, %v1563
    %v1633 = vmax.f32 %v1474, %v1565
    %v1634 = vmax.f32 %v1475, %v1567
    %v1635 = vmax.f32 %v1476, %v1569
    %v1636 = vmax.f32 %v1477, %v1571
    %v1637 = vmax.f32 %v1478, %v1573
    %v1638 = vmax.f32 %v1479, %v1575
    %v1639 = vmax.f32 %v1480, %v1574
    %vm1640 = vcmask 990208
    %v1642 = vsel %vm1640, %v113, 0
    %v1645 = vsel %vm1640, %v115, 0
    %v1648 = vsel %vm1640, %v117, 0
    %v1651 = vsel %vm1640, %v119, 0
    %v1654 = vsel %vm1640, %v121, 0
    %v1657 = vsel %vm1640, %v123, 0
    %v1660 = vsel %vm1640, %v125, 0
    %v1663 = vsel %vm1640, %v127, 0
    %v1666 = vsel %vm1640, %v129, 0
    %v1669 = vsel %vm1640, %v131, 0
    %v1672 = vsel %vm1640, %v133, 0
    %v1675 = vsel %vm1640, %v135, 0
    %v1678 = vsel %vm1640, %v137, 0
    %v1681 = vsel %vm1640, %v139, 0
    %v1684 = vsel %vm1640, %v141, 0
    %v1687 = vsel %vm1640, %v143, 0
    %vm1689 = vcmask 1040384
    %v1691 = vsel %vm1689, %v1639, 0
    %1693 = vmatprep.subr.mxu0 0.0
    %1694 = vmatpush1.msra.mxu0 %v1608
    %1695 = vmatprep.subr.mxu0 0.0
    %1696 = vmatpush1.msra.mxu0 %v1609
    %1697 = vmatprep.subr.mxu0 0.0
    %1698 = vmatpush1.msra.mxu0 %v1610
    %1699 = vmatprep.subr.mxu0 0.0
    %1700 = vmatpush1.msra.mxu0 %v1611
    %1701 = vmatprep.subr.mxu0 0.0
    %1702 = vmatpush1.msra.mxu0 %v1612
    %1703 = vmatprep.subr.mxu0 0.0
    %1704 = vmatpush1.msra.mxu0 %v1613
    %1705 = vmatprep.subr.mxu0 0.0
    %1706 = vmatpush1.msra.mxu0 %v1614
    %1707 = vmatprep.subr.mxu0 0.0
    %1708 = vmatpush1.msra.mxu0 %v1615
    %1709 = vmatprep.subr.mxu0 0.0
    %1710 = vmatpush1.msra.mxu0 %v1616
    %1711 = vmatprep.subr.mxu0 0.0
    %1712 = vmatpush1.msra.mxu0 %v1617
    %1713 = vmatprep.subr.mxu0 0.0
    %1714 = vmatpush1.msra.mxu0 %v1618
    %1715 = vmatprep.subr.mxu0 0.0
    %1716 = vmatpush1.msra.mxu0 %v1619
    %1717 = vmatprep.subr.mxu0 0.0
    %1718 = vmatpush1.msra.mxu0 %v1620
    %1719 = vmatprep.subr.mxu0 0.0
    %1720 = vmatpush1.msra.mxu0 %v1621
    %1721 = vmatprep.subr.mxu0 0.0
    %1722 = vmatpush1.msra.mxu0 %v1622
    %1723 = vmatprep.subr.mxu0 0.0
    %1724 = vmatpush1.msra.mxu0 %v1623
    %1725 = vmatprep.subr.mxu0 0.0
    %1726 = vmatpush1.msra.mxu0 %v1624
    %1727 = vmatprep.subr.mxu0 0.0
    %1728 = vmatpush1.msra.mxu0 %v1625
    %1729 = vmatprep.subr.mxu0 0.0
    %1730 = vmatpush1.msra.mxu0 %v1626
    %1731 = vmatprep.subr.mxu0 0.0
    %1732 = vmatpush1.msra.mxu0 %v1627
    %1733 = vmatprep.subr.mxu0 0.0
    %1734 = vmatpush1.msra.mxu0 %v1628
    %1735 = vmatprep.subr.mxu0 0.0
    %1736 = vmatpush1.msra.mxu0 %v1629
    %1737 = vmatprep.subr.mxu0 0.0
    %1738 = vmatpush1.msra.mxu0 %v1630
    %1739 = vmatprep.subr.mxu0 0.0
    %1740 = vmatpush1.msra.mxu0 %v1631
    %1741 = vmatprep.subr.mxu0 0.0
    %1742 = vmatpush1.msra.mxu0 %v1632
    %1743 = vmatprep.subr.mxu0 0.0
    %1744 = vmatpush1.msra.mxu0 %v1633
    %1745 = vmatprep.subr.mxu0 0.0
    %1746 = vmatpush1.msra.mxu0 %v1634
    %1747 = vmatprep.subr.mxu0 0.0
    %1748 = vmatpush1.msra.mxu0 %v1635
    %1749 = vmatprep.subr.mxu0 0.0
    %1750 = vmatpush1.msra.mxu0 %v1636
    %1751 = vmatprep.subr.mxu0 0.0
    %1752 = vmatpush1.msra.mxu0 %v1637
    %1753 = vmatprep.subr.mxu0 0.0
    %1754 = vmatpush1.msra.mxu0 %v1638
    %1755 = vmatprep.subr.mxu0 0.0
    %1756 = vmatpush1.msra.mxu0 %v1691
    %1757 = vmatprep.mubr.f32.mxu0 %v1642
    %1758 = vmatmul.mubr.f32.gmra.mrb[0].mxu0 %v112
    %v1759 = vpop.f32.mrb[0].mxu0
    %v1760 = vadd.f32 0.0, %v1759
    %v1761 = vpop.f32.mrb[0].mxu0
    %1762 = vmatprep.mubr.f32.mxu0 %v1645
    %1763 = vmatmul.mubr.f32.gmra.mrb[0].mxu0 %v114
    %v1764 = vpop.f32.mrb[0].mxu0
    %v1765 = vadd.f32 0.0, %v1764
    %v1766 = vpop.f32.mrb[0].mxu0
    %1767 = vmatprep.mubr.f32.mxu0 %v1648
    %1768 = vmatmul.mubr.f32.gmra.mrb[0].mxu0 %v116
    %v1769 = vpop.f32.mrb[0].mxu0
    %v1770 = vadd.f32 0.0, %v1769
    %v1771 = vpop.f32.mrb[0].mxu0
    %1772 = vmatprep.mubr.f32.mxu0 %v1651
    %1773 = vmatmul.mubr.f32.gmra.mrb[0].mxu0 %v118
    %v1774 = vpop.f32.mrb[0].mxu0
    %v1775 = vadd.f32 0.0, %v1774
    %v1776 = vpop.f32.mrb[0].mxu0
    %1777 = vmatprep.mubr.f32.mxu0 %v1654
    %1778 = vmatmul.mubr.f32.gmra.mrb[0].mxu0 %v120
    %v1779 = vpop.f32.mrb[0].mxu0
    %v1780 = vadd.f32 0.0, %v1779
    %v1781 = vpop.f32.mrb[0].mxu0
    %1782 = vmatprep.mubr.f32.mxu0 %v1657
    %1783 = vmatmul.mubr.f32.gmra.mrb[0].mxu0 %v122
    %v1784 = vpop.f32.mrb[0].mxu0
    %v1785 = vadd.f32 0.0, %v1784
    %v1786 = vpop.f32.mrb[0].mxu0
    %1787 = vmatprep.mubr.f32.mxu0 %v1660
    %1788 = vmatmul.mubr.f32.gmra.mrb[0].mxu0 %v124
    %v1789 = vpop.f32.mrb[0].mxu0
    %v1790 = vadd.f32 0.0, %v1789
    %v1791 = vpop.f32.mrb[0].mxu0
    %1792 = vmatprep.mubr.f32.mxu0 %v1663
    %1793 = vmatmul.mubr.f32.gmra.mrb[0].mxu0 %v126
    %v1794 = vpop.f32.mrb[0].mxu0
    %v1795 = vadd.f32 0.0, %v1794
    %v1796 = vpop.f32.mrb[0].mxu0
    %1797 = vmatprep.mubr.f32.mxu0 %v1666
    %1798 = vmatmul.mubr.f32.gmra.mrb[0].mxu0 %v128
    %v1799 = vpop.f32.mrb[0].mxu0
    %v1800 = vadd.f32 0.0, %v1799
    %v1801 = vpop.f32.mrb[0].mxu0
    %1802 = vmatprep.mubr.f32.mxu0 %v1669
    %1803 = vmatmul.mubr.f32.gmra.mrb[0].mxu0 %v130
    %v1804 = vpop.f32.mrb[0].mxu0
    %v1805 = vadd.f32 0.0, %v1804
    %v1806 = vpop.f32.mrb[0].mxu0
    %1807 = vmatprep.mubr.f32.mxu0 %v1672
    %1808 = vmatmul.mubr.f32.gmra.mrb[0].mxu0 %v132
    %v1809 = vpop.f32.mrb[0].mxu0
    %v1810 = vadd.f32 0.0, %v1809
    %v1811 = vpop.f32.mrb[0].mxu0
    %1812 = vmatprep.mubr.f32.mxu0 %v1675
    %1813 = vmatmul.mubr.f32.gmra.mrb[0].mxu0 %v134
    %v1814 = vpop.f32.mrb[0].mxu0
    %v1815 = vadd.f32 0.0, %v1814
    %v1816 = vpop.f32.mrb[0].mxu0
    %1817 = vmatprep.mubr.f32.mxu0 %v1678
    %1818 = vmatmul.mubr.f32.gmra.mrb[0].mxu0 %v136
    %v1819 = vpop.f32.mrb[0].mxu0
    %v1820 = vadd.f32 0.0, %v1819
    %v1821 = vpop.f32.mrb[0].mxu0
    %1822 = vmatprep.mubr.f32.mxu0 %v1681
    %1823 = vmatmul.mubr.f32.gmra.mrb[0].mxu0 %v138
    %v1824 = vpop.f32.mrb[0].mxu0
    %v1825 = vadd.f32 0.0, %v1824
    %v1826 = vpop.f32.mrb[0].mxu0
    %1827 = vmatprep.mubr.f32.mxu0 %v1684
    %1828 = vmatmul.mubr.f32.gmra.mrb[0].mxu0 %v140
    %v1829 = vpop.f32.mrb[0].mxu0
    %v1830 = vadd.f32 0.0, %v1829
    %v1831 = vpop.f32.mrb[0].mxu0
    %1832 = vmatprep.mubr.f32.mxu0 %v1687
    %1833 = vmatmul.mubr.f32.gmra.mrb[0].mxu0 %v142
    %v1834 = vpop.f32.mrb[0].mxu0
    %v1835 = vadd.f32 0.0, %v1834
    %v1836 = vpop.f32.mrb[0].mxu0
    %1837 = vdwg.mxu0
    %1838 = vrot.lane.b32.xlu0 %v177, 127
    %v1839 = vpop.permute.xlu0 %1838
    %1840 = vrot.lane.b32.xlu0 %v179, 127
    %v1841 = vpop.permute.xlu0 %1840
    %1842 = vrot.lane.b32.xlu0 %v181, 127
    %v1843 = vpop.permute.xlu0 %1842
    %1844 = vrot.lane.b32.xlu0 %v183, 127
    %v1845 = vpop.permute.xlu0 %1844
    %1846 = vrot.lane.b32.xlu0 %v185, 127
    %v1847 = vpop.permute.xlu0 %1846
    %1848 = vrot.lane.b32.xlu0 %v187, 127
    %v1849 = vpop.permute.xlu0 %1848
    %1850 = vrot.lane.b32.xlu0 %v189, 127
    %v1851 = vpop.permute.xlu0 %1850
    %1852 = vrot.lane.b32.xlu0 %v191, 127
    %v1853 = vpop.permute.xlu0 %1852
    %1854 = vrot.lane.b32.xlu0 %v193, 127
    %v1855 = vpop.permute.xlu0 %1854
    %1856 = vrot.lane.b32.xlu0 %v195, 127
    %v1857 = vpop.permute.xlu0 %1856
    %1858 = vrot.lane.b32.xlu0 %v197, 127
    %v1859 = vpop.permute.xlu0 %1858
    %1860 = vrot.lane.b32.xlu0 %v199, 127
    %v1861 = vpop.permute.xlu0 %1860
    %1862 = vrot.lane.b32.xlu0 %v201, 127
    %v1863 = vpop.permute.xlu0 %1862
    %1864 = vrot.lane.b32.xlu0 %v203, 127
    %v1865 = vpop.permute.xlu0 %1864
    %1866 = vrot.lane.b32.xlu0 %v205, 127
    %v1867 = vpop.permute.xlu0 %1866
    %1868 = vrot.lane.b32.xlu0 %v207, 127
    %v1869 = vpop.permute.xlu0 %1868
    %1870 = vrot.lane.b32.xlu0 %v209, 127
    %v1871 = vpop.permute.xlu0 %1870
    %1872 = vrot.lane.b32.xlu0 %v211, 127
    %v1873 = vpop.permute.xlu0 %1872
    %1874 = vrot.lane.b32.xlu0 %v213, 127
    %v1875 = vpop.permute.xlu0 %1874
    %1876 = vrot.lane.b32.xlu0 %v215, 127
    %v1877 = vpop.permute.xlu0 %1876
    %1878 = vrot.lane.b32.xlu0 %v217, 127
    %v1879 = vpop.permute.xlu0 %1878
    %1880 = vrot.lane.b32.xlu0 %v219, 127
    %v1881 = vpop.permute.xlu0 %1880
    %1882 = vrot.lane.b32.xlu0 %v221, 127
    %v1883 = vpop.permute.xlu0 %1882
    %1884 = vrot.lane.b32.xlu0 %v223, 127
    %v1885 = vpop.permute.xlu0 %1884
    %1886 = vrot.lane.b32.xlu0 %v225, 127
    %v1887 = vpop.permute.xlu0 %1886
    %1888 = vrot.lane.b32.xlu0 %v227, 127
    %v1889 = vpop.permute.xlu0 %1888
    %1890 = vrot.lane.b32.xlu0 %v229, 127
    %v1891 = vpop.permute.xlu0 %1890
    %1892 = vrot.lane.b32.xlu0 %v231, 127
    %v1893 = vpop.permute.xlu0 %1892
    %1894 = vrot.lane.b32.xlu0 %v233, 127
    %v1895 = vpop.permute.xlu0 %1894
    %1896 = vrot.lane.b32.xlu0 %v235, 127
    %v1897 = vpop.permute.xlu0 %1896
    %1898 = vrot.lane.b32.xlu0 %v237, 127
    %v1899 = vpop.permute.xlu0 %1898
    %1900 = vrot.lane.b32.xlu0 %v239, 127
    %v1901 = vpop.permute.xlu0 %1900
    %v1934 = vsel %vm176, 0.0, %v1839
    %v1935 = vsel %vm273, %v1901, 0.0
    %v1938 = vrot.slane %v1934, 1
    %v1939 = vrot.slane %v1841, 1
    %v1940 = vsel %vm277, %v1938, %v1939
    %v1941 = vrot.slane %v1843, 1
    %v1942 = vsel %vm277, %v1939, %v1941
    %v1943 = vrot.slane %v1845, 1
    %v1944 = vsel %vm277, %v1941, %v1943
    %v1945 = vrot.slane %v1847, 1
    %v1946 = vsel %vm277, %v1943, %v1945
    %v1947 = vrot.slane %v1849, 1
    %v1948 = vsel %vm277, %v1945, %v1947
    %v1949 = vrot.slane %v1851, 1
    %v1950 = vsel %vm277, %v1947, %v1949
    %v1951 = vrot.slane %v1853, 1
    %v1952 = vsel %vm277, %v1949, %v1951
    %v1953 = vrot.slane %v1855, 1
    %v1954 = vsel %vm277, %v1951, %v1953
    %v1955 = vrot.slane %v1857, 1
    %v1956 = vsel %vm277, %v1953, %v1955
    %v1957 = vrot.slane %v1859, 1
    %v1958 = vsel %vm277, %v1955, %v1957
    %v1959 = vrot.slane %v1861, 1
    %v1960 = vsel %vm277, %v1957, %v1959
    %v1961 = vrot.slane %v1863, 1
    %v1962 = vsel %vm277, %v1959, %v1961
    %v1963 = vrot.slane %v1865, 1
    %v1964 = vsel %vm277, %v1961, %v1963
    %v1965 = vrot.slane %v1867, 1
    %v1966 = vsel %vm277, %v1963, %v1965
    %v1967 = vrot.slane %v1869, 1
    %v1968 = vsel %vm277, %v1965, %v1967
    %v1969 = vrot.slane %v1871, 1
    %v1970 = vsel %vm277, %v1967, %v1969
    %v1971 = vrot.slane %v1873, 1
    %v1972 = vsel %vm277, %v1969, %v1971
    %v1973 = vrot.slane %v1875, 1
    %v1974 = vsel %vm277, %v1971, %v1973
    %v1975 = vrot.slane %v1877, 1
    %v1976 = vsel %vm277, %v1973, %v1975
    %v1977 = vrot.slane %v1879, 1
    %v1978 = vsel %vm277, %v1975, %v1977
    %v1979 = vrot.slane %v1881, 1
    %v1980 = vsel %vm277, %v1977, %v1979
    %v1981 = vrot.slane %v1883, 1
    %v1982 = vsel %vm277, %v1979, %v1981
    %v1983 = vrot.slane %v1885, 1
    %v1984 = vsel %vm277, %v1981, %v1983
    %v1985 = vrot.slane %v1887, 1
    %v1986 = vsel %vm277, %v1983, %v1985
    %v1987 = vrot.slane %v1889, 1
    %v1988 = vsel %vm277, %v1985, %v1987
    %v1989 = vrot.slane %v1891, 1
    %v1990 = vsel %vm277, %v1987, %v1989
    %v1991 = vrot.slane %v1893, 1
    %v1992 = vsel %vm277, %v1989, %v1991
    %v1993 = vrot.slane %v1895, 1
    %v1994 = vsel %vm277, %v1991, %v1993
    %v1995 = vrot.slane %v1897, 1
    %v1996 = vsel %vm277, %v1993, %v1995
    %v1997 = vrot.slane %v1899, 1
    %v1998 = vsel %vm277, %v1995, %v1997
    %v1999 = vrot.slane %v1935, 1
    %v2000 = vsel %vm277, %v1997, %v1999
    %2001 = vrot.lane.b32.xlu0 %v1940, 1
    %v2002 = vpop.permute.xlu0 %2001
    %2003 = vrot.lane.b32.xlu0 %v1942, 1
    %v2004 = vpop.permute.xlu0 %2003
    %2005 = vrot.lane.b32.xlu0 %v1944, 1
    %v2006 = vpop.permute.xlu0 %2005
    %2007 = vrot.lane.b32.xlu0 %v1946, 1
    %v2008 = vpop.permute.xlu0 %2007
    %2009 = vrot.lane.b32.xlu0 %v1948, 1
    %v2010 = vpop.permute.xlu0 %2009
    %2011 = vrot.lane.b32.xlu0 %v1950, 1
    %v2012 = vpop.permute.xlu0 %2011
    %2013 = vrot.lane.b32.xlu0 %v1952, 1
    %v2014 = vpop.permute.xlu0 %2013
    %2015 = vrot.lane.b32.xlu0 %v1954, 1
    %v2016 = vpop.permute.xlu0 %2015
    %2017 = vrot.lane.b32.xlu0 %v1956, 1
    %v2018 = vpop.permute.xlu0 %2017
    %2019 = vrot.lane.b32.xlu0 %v1958, 1
    %v2020 = vpop.permute.xlu0 %2019
    %2021 = vrot.lane.b32.xlu0 %v1960, 1
    %v2022 = vpop.permute.xlu0 %2021
    %2023 = vrot.lane.b32.xlu0 %v1962, 1
    %v2024 = vpop.permute.xlu0 %2023
    %2025 = vrot.lane.b32.xlu0 %v1964, 1
    %v2026 = vpop.permute.xlu0 %2025
    %2027 = vrot.lane.b32.xlu0 %v1966, 1
    %v2028 = vpop.permute.xlu0 %2027
    %2029 = vrot.lane.b32.xlu0 %v1968, 1
    %v2030 = vpop.permute.xlu0 %2029
    %2031 = vrot.lane.b32.xlu0 %v1970, 1
    %v2032 = vpop.permute.xlu0 %2031
    %2033 = vrot.lane.b32.xlu0 %v1972, 1
    %v2034 = vpop.permute.xlu0 %2033
    %2035 = vrot.lane.b32.xlu0 %v1974, 1
    %v2036 = vpop.permute.xlu0 %2035
    %2037 = vrot.lane.b32.xlu0 %v1976, 1
    %v2038 = vpop.permute.xlu0 %2037
    %2039 = vrot.lane.b32.xlu0 %v1978, 1
    %v2040 = vpop.permute.xlu0 %2039
    %2041 = vrot.lane.b32.xlu0 %v1980, 1
    %v2042 = vpop.permute.xlu0 %2041
    %2043 = vrot.lane.b32.xlu0 %v1982, 1
    %v2044 = vpop.permute.xlu0 %2043
    %2045 = vrot.lane.b32.xlu0 %v1984, 1
    %v2046 = vpop.permute.xlu0 %2045
    %2047 = vrot.lane.b32.xlu0 %v1986, 1
    %v2048 = vpop.permute.xlu0 %2047
    %2049 = vrot.lane.b32.xlu0 %v1988, 1
    %v2050 = vpop.permute.xlu0 %2049
    %2051 = vrot.lane.b32.xlu0 %v1990, 1
    %v2052 = vpop.permute.xlu0 %2051
    %2053 = vrot.lane.b32.xlu0 %v1992, 1
    %v2054 = vpop.permute.xlu0 %2053
    %2055 = vrot.lane.b32.xlu0 %v1994, 1
    %v2056 = vpop.permute.xlu0 %2055
    %2057 = vrot.lane.b32.xlu0 %v1996, 1
    %v2058 = vpop.permute.xlu0 %2057
    %2059 = vrot.lane.b32.xlu0 %v1998, 1
    %v2060 = vpop.permute.xlu0 %2059
    %2061 = vrot.lane.b32.xlu0 %v2000, 1
    %v2062 = vpop.permute.xlu0 %2061
    %2063 = vrot.lane.b32.xlu0 %v1999, 1
    %v2064 = vpop.permute.xlu0 %2063
    %v2097 = vrot.slane %v1934, 2
    %v2098 = vrot.slane %v1841, 2
    %v2099 = vsel %vm437, %v2097, %v2098
    %v2100 = vrot.slane %v1843, 2
    %v2101 = vsel %vm437, %v2098, %v2100
    %v2102 = vrot.slane %v1845, 2
    %v2103 = vsel %vm437, %v2100, %v2102
    %v2104 = vrot.slane %v1847, 2
    %v2105 = vsel %vm437, %v2102, %v2104
    %v2106 = vrot.slane %v1849, 2
    %v2107 = vsel %vm437, %v2104, %v2106
    %v2108 = vrot.slane %v1851, 2
    %v2109 = vsel %vm437, %v2106, %v2108
    %v2110 = vrot.slane %v1853, 2
    %v2111 = vsel %vm437, %v2108, %v2110
    %v2112 = vrot.slane %v1855, 2
    %v2113 = vsel %vm437, %v2110, %v2112
    %v2114 = vrot.slane %v1857, 2
    %v2115 = vsel %vm437, %v2112, %v2114
    %v2116 = vrot.slane %v1859, 2
    %v2117 = vsel %vm437, %v2114, %v2116
    %v2118 = vrot.slane %v1861, 2
    %v2119 = vsel %vm437, %v2116, %v2118
    %v2120 = vrot.slane %v1863, 2
    %v2121 = vsel %vm437, %v2118, %v2120
    %v2122 = vrot.slane %v1865, 2
    %v2123 = vsel %vm437, %v2120, %v2122
    %v2124 = vrot.slane %v1867, 2
    %v2125 = vsel %vm437, %v2122, %v2124
    %v2126 = vrot.slane %v1869, 2
    %v2127 = vsel %vm437, %v2124, %v2126
    %v2128 = vrot.slane %v1871, 2
    %v2129 = vsel %vm437, %v2126, %v2128
    %v2130 = vrot.slane %v1873, 2
    %v2131 = vsel %vm437, %v2128, %v2130
    %v2132 = vrot.slane %v1875, 2
    %v2133 = vsel %vm437, %v2130, %v2132
    %v2134 = vrot.slane %v1877, 2
    %v2135 = vsel %vm437, %v2132, %v2134
    %v2136 = vrot.slane %v1879, 2
    %v2137 = vsel %vm437, %v2134, %v2136
    %v2138 = vrot.slane %v1881, 2
    %v2139 = vsel %vm437, %v2136, %v2138
    %v2140 = vrot.slane %v1883, 2
    %v2141 = vsel %vm437, %v2138, %v2140
    %v2142 = vrot.slane %v1885, 2
    %v2143 = vsel %vm437, %v2140, %v2142
    %v2144 = vrot.slane %v1887, 2
    %v2145 = vsel %vm437, %v2142, %v2144
    %v2146 = vrot.slane %v1889, 2
    %v2147 = vsel %vm437, %v2144, %v2146
    %v2148 = vrot.slane %v1891, 2
    %v2149 = vsel %vm437, %v2146, %v2148
    %v2150 = vrot.slane %v1893, 2
    %v2151 = vsel %vm437, %v2148, %v2150
    %v2152 = vrot.slane %v1895, 2
    %v2153 = vsel %vm437, %v2150, %v2152
    %v2154 = vrot.slane %v1897, 2
    %v2155 = vsel %vm437, %v2152, %v2154
    %v2156 = vrot.slane %v1899, 2
    %v2157 = vsel %vm437, %v2154, %v2156
    %v2158 = vrot.slane %v1935, 2
    %v2159 = vsel %vm437, %v2156, %v2158
    %2160 = vrot.lane.b32.xlu0 %v2099, 2
    %v2161 = vpop.permute.xlu0 %2160
    %2162 = vrot.lane.b32.xlu0 %v2101, 2
    %v2163 = vpop.permute.xlu0 %2162
    %2164 = vrot.lane.b32.xlu0 %v2103, 2
    %v2165 = vpop.permute.xlu0 %2164
    %2166 = vrot.lane.b32.xlu0 %v2105, 2
    %v2167 = vpop.permute.xlu0 %2166
    %2168 = vrot.lane.b32.xlu0 %v2107, 2
    %v2169 = vpop.permute.xlu0 %2168
    %2170 = vrot.lane.b32.xlu0 %v2109, 2
    %v2171 = vpop.permute.xlu0 %2170
    %2172 = vrot.lane.b32.xlu0 %v2111, 2
    %v2173 = vpop.permute.xlu0 %2172
    %2174 = vrot.lane.b32.xlu0 %v2113, 2
    %v2175 = vpop.permute.xlu0 %2174
    %2176 = vrot.lane.b32.xlu0 %v2115, 2
    %v2177 = vpop.permute.xlu0 %2176
    %2178 = vrot.lane.b32.xlu0 %v2117, 2
    %v2179 = vpop.permute.xlu0 %2178
    %2180 = vrot.lane.b32.xlu0 %v2119, 2
    %v2181 = vpop.permute.xlu0 %2180
    %2182 = vrot.lane.b32.xlu0 %v2121, 2
    %v2183 = vpop.permute.xlu0 %2182
    %2184 = vrot.lane.b32.xlu0 %v2123, 2
    %v2185 = vpop.permute.xlu0 %2184
    %2186 = vrot.lane.b32.xlu0 %v2125, 2
    %v2187 = vpop.permute.xlu0 %2186
    %2188 = vrot.lane.b32.xlu0 %v2127, 2
    %v2189 = vpop.permute.xlu0 %2188
    %2190 = vrot.lane.b32.xlu0 %v2129, 2
    %v2191 = vpop.permute.xlu0 %2190
    %2192 = vrot.lane.b32.xlu0 %v2131, 2
    %v2193 = vpop.permute.xlu0 %2192
    %2194 = vrot.lane.b32.xlu0 %v2133, 2
    %v2195 = vpop.permute.xlu0 %2194
    %2196 = vrot.lane.b32.xlu0 %v2135, 2
    %v2197 = vpop.permute.xlu0 %2196
    %2198 = vrot.lane.b32.xlu0 %v2137, 2
    %v2199 = vpop.permute.xlu0 %2198
    %2200 = vrot.lane.b32.xlu0 %v2139, 2
    %v2201 = vpop.permute.xlu0 %2200
    %2202 = vrot.lane.b32.xlu0 %v2141, 2
    %v2203 = vpop.permute.xlu0 %2202
    %2204 = vrot.lane.b32.xlu0 %v2143, 2
    %v2205 = vpop.permute.xlu0 %2204
    %2206 = vrot.lane.b32.xlu0 %v2145, 2
    %v2207 = vpop.permute.xlu0 %2206
    %2208 = vrot.lane.b32.xlu0 %v2147, 2
    %v2209 = vpop.permute.xlu0 %2208
    %2210 = vrot.lane.b32.xlu0 %v2149, 2
    %v2211 = vpop.permute.xlu0 %2210
    %2212 = vrot.lane.b32.xlu0 %v2151, 2
    %v2213 = vpop.permute.xlu0 %2212
    %2214 = vrot.lane.b32.xlu0 %v2153, 2
    %v2215 = vpop.permute.xlu0 %2214
    %2216 = vrot.lane.b32.xlu0 %v2155, 2
    %v2217 = vpop.permute.xlu0 %2216
    %2218 = vrot.lane.b32.xlu0 %v2157, 2
    %v2219 = vpop.permute.xlu0 %2218
    %2220 = vrot.lane.b32.xlu0 %v2159, 2
    %v2221 = vpop.permute.xlu0 %2220
    %2222 = vrot.lane.b32.xlu0 %v2158, 2
    %v2223 = vpop.permute.xlu0 %2222
    %v2256 = vrot.slane %v1934, 3
    %v2257 = vrot.slane %v1841, 3
    %v2258 = vsel %vm597, %v2256, %v2257
    %v2259 = vrot.slane %v1843, 3
    %v2260 = vsel %vm597, %v2257, %v2259
    %v2261 = vrot.slane %v1845, 3
    %v2262 = vsel %vm597, %v2259, %v2261
    %v2263 = vrot.slane %v1847, 3
    %v2264 = vsel %vm597, %v2261, %v2263
    %v2265 = vrot.slane %v1849, 3
    %v2266 = vsel %vm597, %v2263, %v2265
    %v2267 = vrot.slane %v1851, 3
    %v2268 = vsel %vm597, %v2265, %v2267
    %v2269 = vrot.slane %v1853, 3
    %v2270 = vsel %vm597, %v2267, %v2269
    %v2271 = vrot.slane %v1855, 3
    %v2272 = vsel %vm597, %v2269, %v2271
    %v2273 = vrot.slane %v1857, 3
    %v2274 = vsel %vm597, %v2271, %v2273
    %v2275 = vrot.slane %v1859, 3
    %v2276 = vsel %vm597, %v2273, %v2275
    %v2277 = vrot.slane %v1861, 3
    %v2278 = vsel %vm597, %v2275, %v2277
    %v2279 = vrot.slane %v1863, 3
    %v2280 = vsel %vm597, %v2277, %v2279
    %v2281 = vrot.slane %v1865, 3
    %v2282 = vsel %vm597, %v2279, %v2281
    %v2283 = vrot.slane %v1867, 3
    %v2284 = vsel %vm597, %v2281, %v2283
    %v2285 = vrot.slane %v1869, 3
    %v2286 = vsel %vm597, %v2283, %v2285
    %v2287 = vrot.slane %v1871, 3
    %v2288 = vsel %vm597, %v2285, %v2287
    %v2289 = vrot.slane %v1873, 3
    %v2290 = vsel %vm597, %v2287, %v2289
    %v2291 = vrot.slane %v1875, 3
    %v2292 = vsel %vm597, %v2289, %v2291
    %v2293 = vrot.slane %v1877, 3
    %v2294 = vsel %vm597, %v2291, %v2293
    %v2295 = vrot.slane %v1879, 3
    %v2296 = vsel %vm597, %v2293, %v2295
    %v2297 = vrot.slane %v1881, 3
    %v2298 = vsel %vm597, %v2295, %v2297
    %v2299 = vrot.slane %v1883, 3
    %v2300 = vsel %vm597, %v2297, %v2299
    %v2301 = vrot.slane %v1885, 3
    %v2302 = vsel %vm597, %v2299, %v2301
    %v2303 = vrot.slane %v1887, 3
    %v2304 = vsel %vm597, %v2301, %v2303
    %v2305 = vrot.slane %v1889, 3
    %v2306 = vsel %vm597, %v2303, %v2305
    %v2307 = vrot.slane %v1891, 3
    %v2308 = vsel %vm597, %v2305, %v2307
    %v2309 = vrot.slane %v1893, 3
    %v2310 = vsel %vm597, %v2307, %v2309
    %v2311 = vrot.slane %v1895, 3
    %v2312 = vsel %vm597, %v2309, %v2311
    %v2313 = vrot.slane %v1897, 3
    %v2314 = vsel %vm597, %v2311, %v2313
    %v2315 = vrot.slane %v1899, 3
    %v2316 = vsel %vm597, %v2313, %v2315
    %v2317 = vrot.slane %v1935, 3
    %v2318 = vsel %vm597, %v2315, %v2317
    %2319 = vrot.lane.b32.xlu0 %v2258, 3
    %v2320 = vpop.permute.xlu0 %2319
    %2321 = vrot.lane.b32.xlu0 %v2260, 3
    %v2322 = vpop.permute.xlu0 %2321
    %2323 = vrot.lane.b32.xlu0 %v2262, 3
    %v2324 = vpop.permute.xlu0 %2323
    %2325 = vrot.lane.b32.xlu0 %v2264, 3
    %v2326 = vpop.permute.xlu0 %2325
    %2327 = vrot.lane.b32.xlu0 %v2266, 3
    %v2328 = vpop.permute.xlu0 %2327
    %2329 = vrot.lane.b32.xlu0 %v2268, 3
    %v2330 = vpop.permute.xlu0 %2329
    %2331 = vrot.lane.b32.xlu0 %v2270, 3
    %v2332 = vpop.permute.xlu0 %2331
    %2333 = vrot.lane.b32.xlu0 %v2272, 3
    %v2334 = vpop.permute.xlu0 %2333
    %2335 = vrot.lane.b32.xlu0 %v2274, 3
    %v2336 = vpop.permute.xlu0 %2335
    %2337 = vrot.lane.b32.xlu0 %v2276, 3
    %v2338 = vpop.permute.xlu0 %2337
    %2339 = vrot.lane.b32.xlu0 %v2278, 3
    %v2340 = vpop.permute.xlu0 %2339
    %2341 = vrot.lane.b32.xlu0 %v2280, 3
    %v2342 = vpop.permute.xlu0 %2341
    %2343 = vrot.lane.b32.xlu0 %v2282, 3
    %v2344 = vpop.permute.xlu0 %2343
    %2345 = vrot.lane.b32.xlu0 %v2284, 3
    %v2346 = vpop.permute.xlu0 %2345
    %2347 = vrot.lane.b32.xlu0 %v2286, 3
    %v2348 = vpop.permute.xlu0 %2347
    %2349 = vrot.lane.b32.xlu0 %v2288, 3
    %v2350 = vpop.permute.xlu0 %2349
    %2351 = vrot.lane.b32.xlu0 %v2290, 3
    %v2352 = vpop.permute.xlu0 %2351
    %2353 = vrot.lane.b32.xlu0 %v2292, 3
    %v2354 = vpop.permute.xlu0 %2353
    %2355 = vrot.lane.b32.xlu0 %v2294, 3
    %v2356 = vpop.permute.xlu0 %2355
    %2357 = vrot.lane.b32.xlu0 %v2296, 3
    %v2358 = vpop.permute.xlu0 %2357
    %2359 = vrot.lane.b32.xlu0 %v2298, 3
    %v2360 = vpop.permute.xlu0 %2359
    %2361 = vrot.lane.b32.xlu0 %v2300, 3
    %v2362 = vpop.permute.xlu0 %2361
    %2363 = vrot.lane.b32.xlu0 %v2302, 3
    %v2364 = vpop.permute.xlu0 %2363
    %2365 = vrot.lane.b32.xlu0 %v2304, 3
    %v2366 = vpop.permute.xlu0 %2365
    %2367 = vrot.lane.b32.xlu0 %v2306, 3
    %v2368 = vpop.permute.xlu0 %2367
    %2369 = vrot.lane.b32.xlu0 %v2308, 3
    %v2370 = vpop.permute.xlu0 %2369
    %2371 = vrot.lane.b32.xlu0 %v2310, 3
    %v2372 = vpop.permute.xlu0 %2371
    %2373 = vrot.lane.b32.xlu0 %v2312, 3
    %v2374 = vpop.permute.xlu0 %2373
    %2375 = vrot.lane.b32.xlu0 %v2314, 3
    %v2376 = vpop.permute.xlu0 %2375
    %2377 = vrot.lane.b32.xlu0 %v2316, 3
    %v2378 = vpop.permute.xlu0 %2377
    %2379 = vrot.lane.b32.xlu0 %v2318, 3
    %v2380 = vpop.permute.xlu0 %2379
    %2381 = vrot.lane.b32.xlu0 %v2317, 3
    %v2382 = vpop.permute.xlu0 %2381
    %v2415 = vrot.slane %v1934, 4
    %v2416 = vrot.slane %v1841, 4
    %v2417 = vsel %vm273, %v2415, %v2416
    %v2418 = vrot.slane %v1843, 4
    %v2419 = vsel %vm273, %v2416, %v2418
    %v2420 = vrot.slane %v1845, 4
    %v2421 = vsel %vm273, %v2418, %v2420
    %v2422 = vrot.slane %v1847, 4
    %v2423 = vsel %vm273, %v2420, %v2422
    %v2424 = vrot.slane %v1849, 4
    %v2425 = vsel %vm273, %v2422, %v2424
    %v2426 = vrot.slane %v1851, 4
    %v2427 = vsel %vm273, %v2424, %v2426
    %v2428 = vrot.slane %v1853, 4
    %v2429 = vsel %vm273, %v2426, %v2428
    %v2430 = vrot.slane %v1855, 4
    %v2431 = vsel %vm273, %v2428, %v2430
    %v2432 = vrot.slane %v1857, 4
    %v2433 = vsel %vm273, %v2430, %v2432
    %v2434 = vrot.slane %v1859, 4
    %v2435 = vsel %vm273, %v2432, %v2434
    %v2436 = vrot.slane %v1861, 4
    %v2437 = vsel %vm273, %v2434, %v2436
    %v2438 = vrot.slane %v1863, 4
    %v2439 = vsel %vm273, %v2436, %v2438
    %v2440 = vrot.slane %v1865, 4
    %v2441 = vsel %vm273, %v2438, %v2440
    %v2442 = vrot.slane %v1867, 4
    %v2443 = vsel %vm273, %v2440, %v2442
    %v2444 = vrot.slane %v1869, 4
    %v2445 = vsel %vm273, %v2442, %v2444
    %v2446 = vrot.slane %v1871, 4
    %v2447 = vsel %vm273, %v2444, %v2446
    %v2448 = vrot.slane %v1873, 4
    %v2449 = vsel %vm273, %v2446, %v2448
    %v2450 = vrot.slane %v1875, 4
    %v2451 = vsel %vm273, %v2448, %v2450
    %v2452 = vrot.slane %v1877, 4
    %v2453 = vsel %vm273, %v2450, %v2452
    %v2454 = vrot.slane %v1879, 4
    %v2455 = vsel %vm273, %v2452, %v2454
    %v2456 = vrot.slane %v1881, 4
    %v2457 = vsel %vm273, %v2454, %v2456
    %v2458 = vrot.slane %v1883, 4
    %v2459 = vsel %vm273, %v2456, %v2458
    %v2460 = vrot.slane %v1885, 4
    %v2461 = vsel %vm273, %v2458, %v2460
    %v2462 = vrot.slane %v1887, 4
    %v2463 = vsel %vm273, %v2460, %v2462
    %v2464 = vrot.slane %v1889, 4
    %v2465 = vsel %vm273, %v2462, %v2464
    %v2466 = vrot.slane %v1891, 4
    %v2467 = vsel %vm273, %v2464, %v2466
    %v2468 = vrot.slane %v1893, 4
    %v2469 = vsel %vm273, %v2466, %v2468
    %v2470 = vrot.slane %v1895, 4
    %v2471 = vsel %vm273, %v2468, %v2470
    %v2472 = vrot.slane %v1897, 4
    %v2473 = vsel %vm273, %v2470, %v2472
    %v2474 = vrot.slane %v1899, 4
    %v2475 = vsel %vm273, %v2472, %v2474
    %v2476 = vrot.slane %v1935, 4
    %v2477 = vsel %vm273, %v2474, %v2476
    %2478 = vrot.lane.b32.xlu0 %v2417, 4
    %v2479 = vpop.permute.xlu0 %2478
    %2480 = vrot.lane.b32.xlu0 %v2419, 4
    %v2481 = vpop.permute.xlu0 %2480
    %2482 = vrot.lane.b32.xlu0 %v2421, 4
    %v2483 = vpop.permute.xlu0 %2482
    %2484 = vrot.lane.b32.xlu0 %v2423, 4
    %v2485 = vpop.permute.xlu0 %2484
    %2486 = vrot.lane.b32.xlu0 %v2425, 4
    %v2487 = vpop.permute.xlu0 %2486
    %2488 = vrot.lane.b32.xlu0 %v2427, 4
    %v2489 = vpop.permute.xlu0 %2488
    %2490 = vrot.lane.b32.xlu0 %v2429, 4
    %v2491 = vpop.permute.xlu0 %2490
    %2492 = vrot.lane.b32.xlu0 %v2431, 4
    %v2493 = vpop.permute.xlu0 %2492
    %2494 = vrot.lane.b32.xlu0 %v2433, 4
    %v2495 = vpop.permute.xlu0 %2494
    %2496 = vrot.lane.b32.xlu0 %v2435, 4
    %v2497 = vpop.permute.xlu0 %2496
    %2498 = vrot.lane.b32.xlu0 %v2437, 4
    %v2499 = vpop.permute.xlu0 %2498
    %2500 = vrot.lane.b32.xlu0 %v2439, 4
    %v2501 = vpop.permute.xlu0 %2500
    %2502 = vrot.lane.b32.xlu0 %v2441, 4
    %v2503 = vpop.permute.xlu0 %2502
    %2504 = vrot.lane.b32.xlu0 %v2443, 4
    %v2505 = vpop.permute.xlu0 %2504
    %2506 = vrot.lane.b32.xlu0 %v2445, 4
    %v2507 = vpop.permute.xlu0 %2506
    %2508 = vrot.lane.b32.xlu0 %v2447, 4
    %v2509 = vpop.permute.xlu0 %2508
    %2510 = vrot.lane.b32.xlu0 %v2449, 4
    %v2511 = vpop.permute.xlu0 %2510
    %2512 = vrot.lane.b32.xlu0 %v2451, 4
    %v2513 = vpop.permute.xlu0 %2512
    %2514 = vrot.lane.b32.xlu0 %v2453, 4
    %v2515 = vpop.permute.xlu0 %2514
    %2516 = vrot.lane.b32.xlu0 %v2455, 4
    %v2517 = vpop.permute.xlu0 %2516
    %2518 = vrot.lane.b32.xlu0 %v2457, 4
    %v2519 = vpop.permute.xlu0 %2518
    %2520 = vrot.lane.b32.xlu0 %v2459, 4
    %v2521 = vpop.permute.xlu0 %2520
    %2522 = vrot.lane.b32.xlu0 %v2461, 4
    %v2523 = vpop.permute.xlu0 %2522
    %2524 = vrot.lane.b32.xlu0 %v2463, 4
    %v2525 = vpop.permute.xlu0 %2524
    %2526 = vrot.lane.b32.xlu0 %v2465, 4
    %v2527 = vpop.permute.xlu0 %2526
    %2528 = vrot.lane.b32.xlu0 %v2467, 4
    %v2529 = vpop.permute.xlu0 %2528
    %2530 = vrot.lane.b32.xlu0 %v2469, 4
    %v2531 = vpop.permute.xlu0 %2530
    %2532 = vrot.lane.b32.xlu0 %v2471, 4
    %v2533 = vpop.permute.xlu0 %2532
    %2534 = vrot.lane.b32.xlu0 %v2473, 4
    %v2535 = vpop.permute.xlu0 %2534
    %2536 = vrot.lane.b32.xlu0 %v2475, 4
    %v2537 = vpop.permute.xlu0 %2536
    %2538 = vrot.lane.b32.xlu0 %v2477, 4
    %v2539 = vpop.permute.xlu0 %2538
    %2540 = vrot.lane.b32.xlu0 %v2476, 4
    %v2541 = vpop.permute.xlu0 %2540
    %v2574 = vsel %vm916, %v1934, %v2002
    %v2575 = vsel %vm916, %v1841, %v2004
    %v2576 = vsel %vm916, %v1843, %v2006
    %v2577 = vsel %vm916, %v1845, %v2008
    %v2578 = vsel %vm916, %v1847, %v2010
    %v2579 = vsel %vm916, %v1849, %v2012
    %v2580 = vsel %vm916, %v1851, %v2014
    %v2581 = vsel %vm916, %v1853, %v2016
    %v2582 = vsel %vm916, %v1855, %v2018
    %v2583 = vsel %vm916, %v1857, %v2020
    %v2584 = vsel %vm916, %v1859, %v2022
    %v2585 = vsel %vm916, %v1861, %v2024
    %v2586 = vsel %vm916, %v1863, %v2026
    %v2587 = vsel %vm916, %v1865, %v2028
    %v2588 = vsel %vm916, %v1867, %v2030
    %v2589 = vsel %vm916, %v1869, %v2032
    %v2590 = vsel %vm916, %v1871, %v2034
    %v2591 = vsel %vm916, %v1873, %v2036
    %v2592 = vsel %vm916, %v1875, %v2038
    %v2593 = vsel %vm916, %v1877, %v2040
    %v2594 = vsel %vm916, %v1879, %v2042
    %v2595 = vsel %vm916, %v1881, %v2044
    %v2596 = vsel %vm916, %v1883, %v2046
    %v2597 = vsel %vm916, %v1885, %v2048
    %v2598 = vsel %vm916, %v1887, %v2050
    %v2599 = vsel %vm916, %v1889, %v2052
    %v2600 = vsel %vm916, %v1891, %v2054
    %v2601 = vsel %vm916, %v1893, %v2056
    %v2602 = vsel %vm916, %v1895, %v2058
    %v2603 = vsel %vm916, %v1897, %v2060
    %v2604 = vsel %vm916, %v1899, %v2062
    %v2605 = vsel %vm916, %v1935, %v2064
    %v2606 = vsel %vm949, %v2574, %v2161
    %v2607 = vsel %vm949, %v2575, %v2163
    %v2608 = vsel %vm949, %v2576, %v2165
    %v2609 = vsel %vm949, %v2577, %v2167
    %v2610 = vsel %vm949, %v2578, %v2169
    %v2611 = vsel %vm949, %v2579, %v2171
    %v2612 = vsel %vm949, %v2580, %v2173
    %v2613 = vsel %vm949, %v2581, %v2175
    %v2614 = vsel %vm949, %v2582, %v2177
    %v2615 = vsel %vm949, %v2583, %v2179
    %v2616 = vsel %vm949, %v2584, %v2181
    %v2617 = vsel %vm949, %v2585, %v2183
    %v2618 = vsel %vm949, %v2586, %v2185
    %v2619 = vsel %vm949, %v2587, %v2187
    %v2620 = vsel %vm949, %v2588, %v2189
    %v2621 = vsel %vm949, %v2589, %v2191
    %v2622 = vsel %vm949, %v2590, %v2193
    %v2623 = vsel %vm949, %v2591, %v2195
    %v2624 = vsel %vm949, %v2592, %v2197
    %v2625 = vsel %vm949, %v2593, %v2199
    %v2626 = vsel %vm949, %v2594, %v2201
    %v2627 = vsel %vm949, %v2595, %v2203
    %v2628 = vsel %vm949, %v2596, %v2205
    %v2629 = vsel %vm949, %v2597, %v2207
    %v2630 = vsel %vm949, %v2598, %v2209
    %v2631 = vsel %vm949, %v2599, %v2211
    %v2632 = vsel %vm949, %v2600, %v2213
    %v2633 = vsel %vm949, %v2601, %v2215
    %v2634 = vsel %vm949, %v2602, %v2217
    %v2635 = vsel %vm949, %v2603, %v2219
    %v2636 = vsel %vm949, %v2604, %v2221
    %v2637 = vsel %vm949, %v2605, %v2223
    %v2638 = vsel %vm982, %v2606, %v2320
    %v2639 = vsel %vm982, %v2607, %v2322
    %v2640 = vsel %vm982, %v2608, %v2324
    %v2641 = vsel %vm982, %v2609, %v2326
    %v2642 = vsel %vm982, %v2610, %v2328
    %v2643 = vsel %vm982, %v2611, %v2330
    %v2644 = vsel %vm982, %v2612, %v2332
    %v2645 = vsel %vm982, %v2613, %v2334
    %v2646 = vsel %vm982, %v2614, %v2336
    %v2647 = vsel %vm982, %v2615, %v2338
    %v2648 = vsel %vm982, %v2616, %v2340
    %v2649 = vsel %vm982, %v2617, %v2342
    %v2650 = vsel %vm982, %v2618, %v2344
    %v2651 = vsel %vm982, %v2619, %v2346
    %v2652 = vsel %vm982, %v2620, %v2348
    %v2653 = vsel %vm982, %v2621, %v2350
    %v2654 = vsel %vm982, %v2622, %v2352
    %v2655 = vsel %vm982, %v2623, %v2354
    %v2656 = vsel %vm982, %v2624, %v2356
    %v2657 = vsel %vm982, %v2625, %v2358
    %v2658 = vsel %vm982, %v2626, %v2360
    %v2659 = vsel %vm982, %v2627, %v2362
    %v2660 = vsel %vm982, %v2628, %v2364
    %v2661 = vsel %vm982, %v2629, %v2366
    %v2662 = vsel %vm982, %v2630, %v2368
    %v2663 = vsel %vm982, %v2631, %v2370
    %v2664 = vsel %vm982, %v2632, %v2372
    %v2665 = vsel %vm982, %v2633, %v2374
    %v2666 = vsel %vm982, %v2634, %v2376
    %v2667 = vsel %vm982, %v2635, %v2378
    %v2668 = vsel %vm982, %v2636, %v2380
    %v2669 = vsel %vm982, %v2637, %v2382
    %v2670 = vsel %vm1015, %v2638, %v2479
    %v2671 = vsel %vm1015, %v2639, %v2481
    %v2672 = vsel %vm1015, %v2640, %v2483
    %v2673 = vsel %vm1015, %v2641, %v2485
    %v2674 = vsel %vm1015, %v2642, %v2487
    %v2675 = vsel %vm1015, %v2643, %v2489
    %v2676 = vsel %vm1015, %v2644, %v2491
    %v2677 = vsel %vm1015, %v2645, %v2493
    %v2678 = vsel %vm1015, %v2646, %v2495
    %v2679 = vsel %vm1015, %v2647, %v2497
    %v2680 = vsel %vm1015, %v2648, %v2499
    %v2681 = vsel %vm1015, %v2649, %v2501
    %v2682 = vsel %vm1015, %v2650, %v2503
    %v2683 = vsel %vm1015, %v2651, %v2505
    %v2684 = vsel %vm1015, %v2652, %v2507
    %v2685 = vsel %vm1015, %v2653, %v2509
    %v2686 = vsel %vm1015, %v2654, %v2511
    %v2687 = vsel %vm1015, %v2655, %v2513
    %v2688 = vsel %vm1015, %v2656, %v2515
    %v2689 = vsel %vm1015, %v2657, %v2517
    %v2690 = vsel %vm1015, %v2658, %v2519
    %v2691 = vsel %vm1015, %v2659, %v2521
    %v2692 = vsel %vm1015, %v2660, %v2523
    %v2693 = vsel %vm1015, %v2661, %v2525
    %v2694 = vsel %vm1015, %v2662, %v2527
    %v2695 = vsel %vm1015, %v2663, %v2529
    %v2696 = vsel %vm1015, %v2664, %v2531
    %v2697 = vsel %vm1015, %v2665, %v2533
    %v2698 = vsel %vm1015, %v2666, %v2535
    %v2699 = vsel %vm1015, %v2667, %v2537
    %v2700 = vsel %vm1015, %v2668, %v2539
    %v2701 = vsel %vm1015, %v2669, %v2541
    %v2703 = vsel %vm1048, %v2670, 0
    %v2706 = vsel %vm1048, %v2671, 0
    %v2709 = vsel %vm1048, %v2672, 0
    %v2712 = vsel %vm1048, %v2673, 0
    %v2715 = vsel %vm1048, %v2674, 0
    %v2718 = vsel %vm1048, %v2675, 0
    %v2721 = vsel %vm1048, %v2676, 0
    %v2724 = vsel %vm1048, %v2677, 0
    %v2727 = vsel %vm1048, %v2678, 0
    %v2730 = vsel %vm1048, %v2679, 0
    %v2733 = vsel %vm1048, %v2680, 0
    %v2736 = vsel %vm1048, %v2681, 0
    %v2739 = vsel %vm1048, %v2682, 0
    %v2742 = vsel %vm1048, %v2683, 0
    %v2745 = vsel %vm1048, %v2684, 0
    %v2748 = vsel %vm1048, %v2685, 0
    %v2751 = vsel %vm1048, %v2686, 0
    %v2754 = vsel %vm1048, %v2687, 0
    %v2757 = vsel %vm1048, %v2688, 0
    %v2760 = vsel %vm1048, %v2689, 0
    %v2763 = vsel %vm1048, %v2690, 0
    %v2766 = vsel %vm1048, %v2691, 0
    %v2769 = vsel %vm1048, %v2692, 0
    %v2772 = vsel %vm1048, %v2693, 0
    %v2775 = vsel %vm1048, %v2694, 0
    %v2778 = vsel %vm1048, %v2695, 0
    %v2781 = vsel %vm1048, %v2696, 0
    %v2784 = vsel %vm1048, %v2697, 0
    %v2787 = vsel %vm1048, %v2698, 0
    %v2790 = vsel %vm1048, %v2699, 0
    %v2793 = vsel %vm1048, %v2700, 0
    %v2796 = vsel %vm1048, %v2701, 0
    %2798 = vmatprep.subr.mxu0 0.0
    %2799 = vmatpush1.msra.mxu0 %v1146
    %2800 = vmatprep.subr.mxu0 0.0
    %2801 = vmatpush1.msra.mxu0 0.0
    %2802 = vmatprep.subr.mxu0 0.0
    %2803 = vmatpush1.msra.mxu0 0.0
    %2804 = vmatprep.subr.mxu0 0.0
    %2805 = vmatpush1.msra.mxu0 0.0
    %2806 = vmatprep.subr.mxu0 0.0
    %2807 = vmatpush1.msra.mxu0 0.0
    %2808 = vmatprep.subr.mxu0 0.0
    %2809 = vmatpush1.msra.mxu0 0.0
    %2810 = vmatprep.subr.mxu0 0.0
    %2811 = vmatpush1.msra.mxu0 0.0
    %2812 = vmatprep.subr.mxu0 0.0
    %2813 = vmatpush1.msra.mxu0 0.0
    %2814 = vmatprep.subr.mxu0 0.0
    %2815 = vmatpush1.msra.mxu0 0.0
    %2816 = vmatprep.subr.mxu0 0.0
    %2817 = vmatpush1.msra.mxu0 0.0
    %2818 = vmatprep.subr.mxu0 0.0
    %2819 = vmatpush1.msra.mxu0 0.0
    %2820 = vmatprep.subr.mxu0 0.0
    %2821 = vmatpush1.msra.mxu0 0.0
    %2822 = vmatprep.subr.mxu0 0.0
    %2823 = vmatpush1.msra.mxu0 0.0
    %2824 = vmatprep.subr.mxu0 0.0
    %2825 = vmatpush1.msra.mxu0 0.0
    %2826 = vmatprep.subr.mxu0 0.0
    %2827 = vmatpush1.msra.mxu0 0.0
    %2828 = vmatprep.subr.mxu0 0.0
    %2829 = vmatpush1.msra.mxu0 0.0
    %2830 = vmatprep.subr.mxu0 0.0
    %2831 = vmatpush1.msra.mxu0 0.0
    %2832 = vmatprep.subr.mxu0 0.0
    %2833 = vmatpush1.msra.mxu0 0.0
    %2834 = vmatprep.subr.mxu0 0.0
    %2835 = vmatpush1.msra.mxu0 0.0
    %2836 = vmatprep.subr.mxu0 0.0
    %2837 = vmatpush1.msra.mxu0 0.0
    %2838 = vmatprep.subr.mxu0 0.0
    %2839 = vmatpush1.msra.mxu0 0.0
    %2840 = vmatprep.subr.mxu0 0.0
    %2841 = vmatpush1.msra.mxu0 0.0
    %2842 = vmatprep.subr.mxu0 0.0
    %2843 = vmatpush1.msra.mxu0 0.0
    %2844 = vmatprep.subr.mxu0 0.0
    %2845 = vmatpush1.msra.mxu0 0.0
    %2846 = vmatprep.subr.mxu0 0.0
    %2847 = vmatpush1.msra.mxu0 0.0
    %2848 = vmatprep.subr.mxu0 0.0
    %2849 = vmatpush1.msra.mxu0 0.0
    %2850 = vmatprep.subr.mxu0 0.0
    %2851 = vmatpush1.msra.mxu0 0.0
    %2852 = vmatprep.subr.mxu0 0.0
    %2853 = vmatpush1.msra.mxu0 0.0
    %2854 = vmatprep.subr.mxu0 0.0
    %2855 = vmatpush1.msra.mxu0 0.0
    %2856 = vmatprep.subr.mxu0 0.0
    %2857 = vmatpush1.msra.mxu0 0.0
    %2858 = vmatprep.subr.mxu0 0.0
    %2859 = vmatpush1.msra.mxu0 0.0
    %2860 = vmatprep.subr.mxu0 0.0
    %2861 = vmatpush1.msra.mxu0 0.0
    %2862 = vmatprep.mubr.f32.mxu0 0.0
    %2863 = vmatmul.mubr.f32.gmra.mrb[0].mxu0 %v2703
    %v2864 = vpop.f32.mrb[0].mxu0
    %v2865 = vadd.f32 0.0, %v2864
    %v2866 = vpop.f32.mrb[0].mxu0
    %2867 = vmatprep.mubr.f32.mxu0 0.0
    %2868 = vmatmul.mubr.f32.gmra.mrb[0].mxu0 %v2706
    %v2869 = vpop.f32.mrb[0].mxu0
    %v2870 = vadd.f32 0.0, %v2869
    %v2871 = vpop.f32.mrb[0].mxu0
    %2872 = vmatprep.mubr.f32.mxu0 0.0
    %2873 = vmatmul.mubr.f32.gmra.mrb[0].mxu0 %v2709
    %v2874 = vpop.f32.mrb[0].mxu0
    %v2875 = vadd.f32 0.0, %v2874
    %v2876 = vpop.f32.mrb[0].mxu0
    %2877 = vmatprep.mubr.f32.mxu0 0.0
    %2878 = vmatmul.mubr.f32.gmra.mrb[0].mxu0 %v2712
    %v2879 = vpop.f32.mrb[0].mxu0
    %v2880 = vadd.f32 0.0, %v2879
    %v2881 = vpop.f32.mrb[0].mxu0
    %2882 = vmatprep.mubr.f32.mxu0 0.0
    %2883 = vmatmul.mubr.f32.gmra.mrb[0].mxu0 %v2715
    %v2884 = vpop.f32.mrb[0].mxu0
    %v2885 = vadd.f32 0.0, %v2884
    %v2886 = vpop.f32.mrb[0].mxu0
    %2887 = vmatprep.mubr.f32.mxu0 0.0
    %2888 = vmatmul.mubr.f32.gmra.mrb[0].mxu0 %v2718
    %v2889 = vpop.f32.mrb[0].mxu0
    %v2890 = vadd.f32 0.0, %v2889
    %v2891 = vpop.f32.mrb[0].mxu0
    %2892 = vmatprep.mubr.f32.mxu0 0.0
    %2893 = vmatmul.mubr.f32.gmra.mrb[0].mxu0 %v2721
    %v2894 = vpop.f32.mrb[0].mxu0
    %v2895 = vadd.f32 0.0, %v2894
    %v2896 = vpop.f32.mrb[0].mxu0
    %2897 = vmatprep.mubr.f32.mxu0 0.0
    %2898 = vmatmul.mubr.f32.gmra.mrb[0].mxu0 %v2724
    %v2899 = vpop.f32.mrb[0].mxu0
    %v2900 = vadd.f32 0.0, %v2899
    %v2901 = vpop.f32.mrb[0].mxu0
    %2902 = vmatprep.mubr.f32.mxu0 0.0
    %2903 = vmatmul.mubr.f32.gmra.mrb[0].mxu0 %v2727
    %v2904 = vpop.f32.mrb[0].mxu0
    %v2905 = vadd.f32 0.0, %v2904
    %v2906 = vpop.f32.mrb[0].mxu0
    %2907 = vmatprep.mubr.f32.mxu0 0.0
    %2908 = vmatmul.mubr.f32.gmra.mrb[0].mxu0 %v2730
    %v2909 = vpop.f32.mrb[0].mxu0
    %v2910 = vadd.f32 0.0, %v2909
    %v2911 = vpop.f32.mrb[0].mxu0
    %2912 = vmatprep.mubr.f32.mxu0 0.0
    %2913 = vmatmul.mubr.f32.gmra.mrb[0].mxu0 %v2733
    %v2914 = vpop.f32.mrb[0].mxu0
    %v2915 = vadd.f32 0.0, %v2914
    %v2916 = vpop.f32.mrb[0].mxu0
    %2917 = vmatprep.mubr.f32.mxu0 0.0
    %2918 = vmatmul.mubr.f32.gmra.mrb[0].mxu0 %v2736
    %v2919 = vpop.f32.mrb[0].mxu0
    %v2920 = vadd.f32 0.0, %v2919
    %v2921 = vpop.f32.mrb[0].mxu0
    %2922 = vmatprep.mubr.f32.mxu0 0.0
    %2923 = vmatmul.mubr.f32.gmra.mrb[0].mxu0 %v2739
    %v2924 = vpop.f32.mrb[0].mxu0
    %v2925 = vadd.f32 0.0, %v2924
    %v2926 = vpop.f32.mrb[0].mxu0
    %2927 = vmatprep.mubr.f32.mxu0 0.0
    %2928 = vmatmul.mubr.f32.gmra.mrb[0].mxu0 %v2742
    %v2929 = vpop.f32.mrb[0].mxu0
    %v2930 = vadd.f32 0.0, %v2929
    %v2931 = vpop.f32.mrb[0].mxu0
    %2932 = vmatprep.mubr.f32.mxu0 0.0
    %2933 = vmatmul.mubr.f32.gmra.mrb[0].mxu0 %v2745
    %v2934 = vpop.f32.mrb[0].mxu0
    %v2935 = vadd.f32 0.0, %v2934
    %v2936 = vpop.f32.mrb[0].mxu0
    %2937 = vmatprep.mubr.f32.mxu0 0.0
    %2938 = vmatmul.mubr.f32.gmra.mrb[0].mxu0 %v2748
    %v2939 = vpop.f32.mrb[0].mxu0
    %v2940 = vadd.f32 0.0, %v2939
    %v2941 = vpop.f32.mrb[0].mxu0
    %2942 = vmatprep.mubr.f32.mxu0 0.0
    %2943 = vmatmul.mubr.f32.gmra.mrb[0].mxu0 %v2751
    %v2944 = vpop.f32.mrb[0].mxu0
    %v2945 = vadd.f32 0.0, %v2944
    %v2946 = vpop.f32.mrb[0].mxu0
    %2947 = vmatprep.mubr.f32.mxu0 0.0
    %2948 = vmatmul.mubr.f32.gmra.mrb[0].mxu0 %v2754
    %v2949 = vpop.f32.mrb[0].mxu0
    %v2950 = vadd.f32 0.0, %v2949
    %v2951 = vpop.f32.mrb[0].mxu0
    %2952 = vmatprep.mubr.f32.mxu0 0.0
    %2953 = vmatmul.mubr.f32.gmra.mrb[0].mxu0 %v2757
    %v2954 = vpop.f32.mrb[0].mxu0
    %v2955 = vadd.f32 0.0, %v2954
    %v2956 = vpop.f32.mrb[0].mxu0
    %2957 = vmatprep.mubr.f32.mxu0 0.0
    %2958 = vmatmul.mubr.f32.gmra.mrb[0].mxu0 %v2760
    %v2959 = vpop.f32.mrb[0].mxu0
    %v2960 = vadd.f32 0.0, %v2959
    %v2961 = vpop.f32.mrb[0].mxu0
    %2962 = vmatprep.mubr.f32.mxu0 0.0
    %2963 = vmatmul.mubr.f32.gmra.mrb[0].mxu0 %v2763
    %v2964 = vpop.f32.mrb[0].mxu0
    %v2965 = vadd.f32 0.0, %v2964
    %v2966 = vpop.f32.mrb[0].mxu0
    %2967 = vmatprep.mubr.f32.mxu0 0.0
    %2968 = vmatmul.mubr.f32.gmra.mrb[0].mxu0 %v2766
    %v2969 = vpop.f32.mrb[0].mxu0
    %v2970 = vadd.f32 0.0, %v2969
    %v2971 = vpop.f32.mrb[0].mxu0
    %2972 = vmatprep.mubr.f32.mxu0 0.0
    %2973 = vmatmul.mubr.f32.gmra.mrb[0].mxu0 %v2769
    %v2974 = vpop.f32.mrb[0].mxu0
    %v2975 = vadd.f32 0.0, %v2974
    %v2976 = vpop.f32.mrb[0].mxu0
    %2977 = vmatprep.mubr.f32.mxu0 0.0
    %2978 = vmatmul.mubr.f32.gmra.mrb[0].mxu0 %v2772
    %v2979 = vpop.f32.mrb[0].mxu0
    %v2980 = vadd.f32 0.0, %v2979
    %v2981 = vpop.f32.mrb[0].mxu0
    %2982 = vmatprep.mubr.f32.mxu0 0.0
    %2983 = vmatmul.mubr.f32.gmra.mrb[0].mxu0 %v2775
    %v2984 = vpop.f32.mrb[0].mxu0
    %v2985 = vadd.f32 0.0, %v2984
    %v2986 = vpop.f32.mrb[0].mxu0
    %2987 = vmatprep.mubr.f32.mxu0 0.0
    %2988 = vmatmul.mubr.f32.gmra.mrb[0].mxu0 %v2778
    %v2989 = vpop.f32.mrb[0].mxu0
    %v2990 = vadd.f32 0.0, %v2989
    %v2991 = vpop.f32.mrb[0].mxu0
    %2992 = vmatprep.mubr.f32.mxu0 0.0
    %2993 = vmatmul.mubr.f32.gmra.mrb[0].mxu0 %v2781
    %v2994 = vpop.f32.mrb[0].mxu0
    %v2995 = vadd.f32 0.0, %v2994
    %v2996 = vpop.f32.mrb[0].mxu0
    %2997 = vmatprep.mubr.f32.mxu0 0.0
    %2998 = vmatmul.mubr.f32.gmra.mrb[0].mxu0 %v2784
    %v2999 = vpop.f32.mrb[0].mxu0
    %v3000 = vadd.f32 0.0, %v2999
    %v3001 = vpop.f32.mrb[0].mxu0
    %3002 = vmatprep.mubr.f32.mxu0 0.0
    %3003 = vmatmul.mubr.f32.gmra.mrb[0].mxu0 %v2787
    %v3004 = vpop.f32.mrb[0].mxu0
    %v3005 = vadd.f32 0.0, %v3004
    %v3006 = vpop.f32.mrb[0].mxu0
    %3007 = vmatprep.mubr.f32.mxu0 0.0
    %3008 = vmatmul.mubr.f32.gmra.mrb[0].mxu0 %v2790
    %v3009 = vpop.f32.mrb[0].mxu0
    %v3010 = vadd.f32 0.0, %v3009
    %v3011 = vpop.f32.mrb[0].mxu0
    %3012 = vmatprep.mubr.f32.mxu0 0.0
    %3013 = vmatmul.mubr.f32.gmra.mrb[0].mxu0 %v2793
    %v3014 = vpop.f32.mrb[0].mxu0
    %v3015 = vadd.f32 0.0, %v3014
    %v3016 = vpop.f32.mrb[0].mxu0
    %3017 = vmatprep.mubr.f32.mxu0 0.0
    %3018 = vmatmul.mubr.f32.gmra.mrb[0].mxu0 %v2796
    %v3019 = vpop.f32.mrb[0].mxu0
    %v3020 = vadd.f32 0.0, %v3019
    %v3021 = vpop.f32.mrb[0].mxu0
    %3022 = vdwg.mxu0
    %v3023 = vmul.f32 %v2865, %v1377
    %v3024 = vmul.f32 %v2870, %v1377
    %v3025 = vmul.f32 %v2875, %v1377
    %v3026 = vmul.f32 %v2880, %v1377
    %v3027 = vmul.f32 %v2885, %v1377
    %v3028 = vmul.f32 %v2890, %v1377
    %v3029 = vmul.f32 %v2895, %v1377
    %v3030 = vmul.f32 %v2900, %v1377
    %v3031 = vmul.f32 %v2905, %v1377
    %v3032 = vmul.f32 %v2910, %v1377
    %v3033 = vmul.f32 %v2915, %v1377
    %v3034 = vmul.f32 %v2920, %v1377
    %v3035 = vmul.f32 %v2925, %v1377
    %v3036 = vmul.f32 %v2930, %v1377
    %v3037 = vmul.f32 %v2935, %v1377
    %v3038 = vmul.f32 %v2940, %v1377
    %v3039 = vmul.f32 %v2945, %v1377
    %v3040 = vmul.f32 %v2950, %v1377
    %v3041 = vmul.f32 %v2955, %v1377
    %v3042 = vmul.f32 %v2960, %v1377
    %v3043 = vmul.f32 %v2965, %v1377
    %v3044 = vmul.f32 %v2970, %v1377
    %v3045 = vmul.f32 %v2975, %v1377
    %v3046 = vmul.f32 %v2980, %v1377
    %v3047 = vmul.f32 %v2985, %v1377
    %v3048 = vmul.f32 %v2990, %v1377
    %v3049 = vmul.f32 %v2995, %v1377
    %v3050 = vmul.f32 %v3000, %v1377
    %v3051 = vmul.f32 %v3005, %v1377
    %v3052 = vmul.f32 %v3010, %v1377
    %v3053 = vmul.f32 %v3015, %v1377
    %v3054 = vmul.f32 %v3020, %v1377
    %v3055 = vadd.f32 %v3023, %v1415
    %v3056 = vadd.f32 %v3024, %v1415
    %v3057 = vadd.f32 %v3025, %v1415
    %v3058 = vadd.f32 %v3026, %v1415
    %v3059 = vadd.f32 %v3027, %v1415
    %v3060 = vadd.f32 %v3028, %v1415
    %v3061 = vadd.f32 %v3029, %v1415
    %v3062 = vadd.f32 %v3030, %v1415
    %v3063 = vadd.f32 %v3031, %v1415
    %v3064 = vadd.f32 %v3032, %v1415
    %v3065 = vadd.f32 %v3033, %v1415
    %v3066 = vadd.f32 %v3034, %v1415
    %v3067 = vadd.f32 %v3035, %v1415
    %v3068 = vadd.f32 %v3036, %v1415
    %v3069 = vadd.f32 %v3037, %v1415
    %v3070 = vadd.f32 %v3038, %v1415
    %v3071 = vadd.f32 %v3039, %v1415
    %v3072 = vadd.f32 %v3040, %v1415
    %v3073 = vadd.f32 %v3041, %v1415
    %v3074 = vadd.f32 %v3042, %v1415
    %v3075 = vadd.f32 %v3043, %v1415
    %v3076 = vadd.f32 %v3044, %v1415
    %v3077 = vadd.f32 %v3045, %v1415
    %v3078 = vadd.f32 %v3046, %v1415
    %v3079 = vadd.f32 %v3047, %v1415
    %v3080 = vadd.f32 %v3048, %v1415
    %v3081 = vadd.f32 %v3049, %v1415
    %v3082 = vadd.f32 %v3050, %v1415
    %v3083 = vadd.f32 %v3051, %v1415
    %v3084 = vadd.f32 %v3052, %v1415
    %v3085 = vadd.f32 %v3053, %v1415
    %v3086 = vadd.f32 %v3054, %v1415
    %v3087 = vmax.f32 %v3055, 0.0
    %v3088 = vmax.f32 %v3056, 0.0
    %v3089 = vmax.f32 %v3057, 0.0
    %v3090 = vmax.f32 %v3058, 0.0
    %v3091 = vmax.f32 %v3059, 0.0
    %v3092 = vmax.f32 %v3060, 0.0
    %v3093 = vmax.f32 %v3061, 0.0
    %v3094 = vmax.f32 %v3062, 0.0
    %v3095 = vmax.f32 %v3063, 0.0
    %v3096 = vmax.f32 %v3064, 0.0
    %v3097 = vmax.f32 %v3065, 0.0
    %v3098 = vmax.f32 %v3066, 0.0
    %v3099 = vmax.f32 %v3067, 0.0
    %v3100 = vmax.f32 %v3068, 0.0
    %v3101 = vmax.f32 %v3069, 0.0
    %v3102 = vmax.f32 %v3070, 0.0
    %v3103 = vmax.f32 %v3071, 0.0
    %v3104 = vmax.f32 %v3072, 0.0
    %v3105 = vmax.f32 %v3073, 0.0
    %v3106 = vmax.f32 %v3074, 0.0
    %v3107 = vmax.f32 %v3075, 0.0
    %v3108 = vmax.f32 %v3076, 0.0
    %v3109 = vmax.f32 %v3077, 0.0
    %v3110 = vmax.f32 %v3078, 0.0
    %v3111 = vmax.f32 %v3079, 0.0
    %v3112 = vmax.f32 %v3080, 0.0
    %v3113 = vmax.f32 %v3081, 0.0
    %v3114 = vmax.f32 %v3082, 0.0
    %v3115 = vmax.f32 %v3083, 0.0
    %v3116 = vmax.f32 %v3084, 0.0
    %v3117 = vmax.f32 %v3085, 0.0
    %v3118 = vmax.f32 %v3086, 0.0
    %v3151 = vrot.slane %v3087, 1
    %v3152 = vrot.slane %v3088, 1
    %v3153 = vsel %vm277, %v3151, %v3152
    %v3154 = vrot.slane %v3089, 1
    %v3155 = vsel %vm277, %v3152, %v3154
    %v3156 = vrot.slane %v3090, 1
    %v3157 = vsel %vm277, %v3154, %v3156
    %v3158 = vrot.slane %v3091, 1
    %v3159 = vsel %vm277, %v3156, %v3158
    %v3160 = vrot.slane %v3092, 1
    %v3161 = vsel %vm277, %v3158, %v3160
    %v3162 = vrot.slane %v3093, 1
    %v3163 = vsel %vm277, %v3160, %v3162
    %v3164 = vrot.slane %v3094, 1
    %v3165 = vsel %vm277, %v3162, %v3164
    %v3166 = vrot.slane %v3095, 1
    %v3167 = vsel %vm277, %v3164, %v3166
    %v3168 = vrot.slane %v3096, 1
    %v3169 = vsel %vm277, %v3166, %v3168
    %v3170 = vrot.slane %v3097, 1
    %v3171 = vsel %vm277, %v3168, %v3170
    %v3172 = vrot.slane %v3098, 1
    %v3173 = vsel %vm277, %v3170, %v3172
    %v3174 = vrot.slane %v3099, 1
    %v3175 = vsel %vm277, %v3172, %v3174
    %v3176 = vrot.slane %v3100, 1
    %v3177 = vsel %vm277, %v3174, %v3176
    %v3178 = vrot.slane %v3101, 1
    %v3179 = vsel %vm277, %v3176, %v3178
    %v3180 = vrot.slane %v3102, 1
    %v3181 = vsel %vm277, %v3178, %v3180
    %v3182 = vrot.slane %v3103, 1
    %v3183 = vsel %vm277, %v3180, %v3182
    %v3184 = vrot.slane %v3104, 1
    %v3185 = vsel %vm277, %v3182, %v3184
    %v3186 = vrot.slane %v3105, 1
    %v3187 = vsel %vm277, %v3184, %v3186
    %v3188 = vrot.slane %v3106, 1
    %v3189 = vsel %vm277, %v3186, %v3188
    %v3190 = vrot.slane %v3107, 1
    %v3191 = vsel %vm277, %v3188, %v3190
    %v3192 = vrot.slane %v3108, 1
    %v3193 = vsel %vm277, %v3190, %v3192
    %v3194 = vrot.slane %v3109, 1
    %v3195 = vsel %vm277, %v3192, %v3194
    %v3196 = vrot.slane %v3110, 1
    %v3197 = vsel %vm277, %v3194, %v3196
    %v3198 = vrot.slane %v3111, 1
    %v3199 = vsel %vm277, %v3196, %v3198
    %v3200 = vrot.slane %v3112, 1
    %v3201 = vsel %vm277, %v3198, %v3200
    %v3202 = vrot.slane %v3113, 1
    %v3203 = vsel %vm277, %v3200, %v3202
    %v3204 = vrot.slane %v3114, 1
    %v3205 = vsel %vm277, %v3202, %v3204
    %v3206 = vrot.slane %v3115, 1
    %v3207 = vsel %vm277, %v3204, %v3206
    %v3208 = vrot.slane %v3116, 1
    %v3209 = vsel %vm277, %v3206, %v3208
    %v3210 = vrot.slane %v3117, 1
    %v3211 = vsel %vm277, %v3208, %v3210
    %v3212 = vrot.slane %v3118, 1
    %v3213 = vsel %vm277, %v3210, %v3212
    %v3246 = vmax.f32 %v3087, %v3153
    %v3247 = vmax.f32 %v3088, %v3155
    %v3248 = vmax.f32 %v3089, %v3157
    %v3249 = vmax.f32 %v3090, %v3159
    %v3250 = vmax.f32 %v3091, %v3161
    %v3251 = vmax.f32 %v3092, %v3163
    %v3252 = vmax.f32 %v3093, %v3165
    %v3253 = vmax.f32 %v3094, %v3167
    %v3254 = vmax.f32 %v3095, %v3169
    %v3255 = vmax.f32 %v3096, %v3171
    %v3256 = vmax.f32 %v3097, %v3173
    %v3257 = vmax.f32 %v3098, %v3175
    %v3258 = vmax.f32 %v3099, %v3177
    %v3259 = vmax.f32 %v3100, %v3179
    %v3260 = vmax.f32 %v3101, %v3181
    %v3261 = vmax.f32 %v3102, %v3183
    %v3262 = vmax.f32 %v3103, %v3185
    %v3263 = vmax.f32 %v3104, %v3187
    %v3264 = vmax.f32 %v3105, %v3189
    %v3265 = vmax.f32 %v3106, %v3191
    %v3266 = vmax.f32 %v3107, %v3193
    %v3267 = vmax.f32 %v3108, %v3195
    %v3268 = vmax.f32 %v3109, %v3197
    %v3269 = vmax.f32 %v3110, %v3199
    %v3270 = vmax.f32 %v3111, %v3201
    %v3271 = vmax.f32 %v3112, %v3203
    %v3272 = vmax.f32 %v3113, %v3205
    %v3273 = vmax.f32 %v3114, %v3207
    %v3274 = vmax.f32 %v3115, %v3209
    %v3275 = vmax.f32 %v3116, %v3211
    %v3276 = vmax.f32 %v3117, %v3213
    %v3277 = vmax.f32 %v3118, %v3212
    %v3279 = vsel %vm1689, %v3277, 0
    %3281 = vmatprep.subr.mxu0 0.0
    %3282 = vmatpush1.msra.mxu0 %v3246
    %3283 = vmatprep.subr.mxu0 0.0
    %3284 = vmatpush1.msra.mxu0 %v3247
    %3285 = vmatprep.subr.mxu0 0.0
    %3286 = vmatpush1.msra.mxu0 %v3248
    %3287 = vmatprep.subr.mxu0 0.0
    %3288 = vmatpush1.msra.mxu0 %v3249
    %3289 = vmatprep.subr.mxu0 0.0
    %3290 = vmatpush1.msra.mxu0 %v3250
    %3291 = vmatprep.subr.mxu0 0.0
    %3292 = vmatpush1.msra.mxu0 %v3251
    %3293 = vmatprep.subr.mxu0 0.0
    %3294 = vmatpush1.msra.mxu0 %v3252
    %3295 = vmatprep.subr.mxu0 0.0
    %3296 = vmatpush1.msra.mxu0 %v3253
    %3297 = vmatprep.subr.mxu0 0.0
    %3298 = vmatpush1.msra.mxu0 %v3254
    %3299 = vmatprep.subr.mxu0 0.0
    %3300 = vmatpush1.msra.mxu0 %v3255
    %3301 = vmatprep.subr.mxu0 0.0
    %3302 = vmatpush1.msra.mxu0 %v3256
    %3303 = vmatprep.subr.mxu0 0.0
    %3304 = vmatpush1.msra.mxu0 %v3257
    %3305 = vmatprep.subr.mxu0 0.0
    %3306 = vmatpush1.msra.mxu0 %v3258
    %3307 = vmatprep.subr.mxu0 0.0
    %3308 = vmatpush1.msra.mxu0 %v3259
    %3309 = vmatprep.subr.mxu0 0.0
    %3310 = vmatpush1.msra.mxu0 %v3260
    %3311 = vmatprep.subr.mxu0 0.0
    %3312 = vmatpush1.msra.mxu0 %v3261
    %3313 = vmatprep.subr.mxu0 0.0
    %3314 = vmatpush1.msra.mxu0 %v3262
    %3315 = vmatprep.subr.mxu0 0.0
    %3316 = vmatpush1.msra.mxu0 %v3263
    %3317 = vmatprep.subr.mxu0 0.0
    %3318 = vmatpush1.msra.mxu0 %v3264
    %3319 = vmatprep.subr.mxu0 0.0
    %3320 = vmatpush1.msra.mxu0 %v3265
    %3321 = vmatprep.subr.mxu0 0.0
    %3322 = vmatpush1.msra.mxu0 %v3266
    %3323 = vmatprep.subr.mxu0 0.0
    %3324 = vmatpush1.msra.mxu0 %v3267
    %3325 = vmatprep.subr.mxu0 0.0
    %3326 = vmatpush1.msra.mxu0 %v3268
    %3327 = vmatprep.subr.mxu0 0.0
    %3328 = vmatpush1.msra.mxu0 %v3269
    %3329 = vmatprep.subr.mxu0 0.0
    %3330 = vmatpush1.msra.mxu0 %v3270
    %3331 = vmatprep.subr.mxu0 0.0
    %3332 = vmatpush1.msra.mxu0 %v3271
    %3333 = vmatprep.subr.mxu0 0.0
    %3334 = vmatpush1.msra.mxu0 %v3272
    %3335 = vmatprep.subr.mxu0 0.0
    %3336 = vmatpush1.msra.mxu0 %v3273
    %3337 = vmatprep.subr.mxu0 0.0
    %3338 = vmatpush1.msra.mxu0 %v3274
    %3339 = vmatprep.subr.mxu0 0.0
    %3340 = vmatpush1.msra.mxu0 %v3275
    %3341 = vmatprep.subr.mxu0 0.0
    %3342 = vmatpush1.msra.mxu0 %v3276
    %3343 = vmatprep.subr.mxu0 0.0
    %3344 = vmatpush1.msra.mxu0 %v3279
    %3345 = vmatprep.mubr.f32.mxu0 %v1642
    %3346 = vmatmul.mubr.f32.gmra.mrb[0].mxu0 %v112
    %v3347 = vpop.f32.mrb[0].mxu0
    %v3348 = vadd.f32 0.0, %v3347
    %v3349 = vpop.f32.mrb[0].mxu0
    %3350 = vmatprep.mubr.f32.mxu0 %v1645
    %3351 = vmatmul.mubr.f32.gmra.mrb[0].mxu0 %v114
    %v3352 = vpop.f32.mrb[0].mxu0
    %v3353 = vadd.f32 0.0, %v3352
    %v3354 = vpop.f32.mrb[0].mxu0
    %3355 = vmatprep.mubr.f32.mxu0 %v1648
    %3356 = vmatmul.mubr.f32.gmra.mrb[0].mxu0 %v116
    %v3357 = vpop.f32.mrb[0].mxu0
    %v3358 = vadd.f32 0.0, %v3357
    %v3359 = vpop.f32.mrb[0].mxu0
    %3360 = vmatprep.mubr.f32.mxu0 %v1651
    %3361 = vmatmul.mubr.f32.gmra.mrb[0].mxu0 %v118
    %v3362 = vpop.f32.mrb[0].mxu0
    %v3363 = vadd.f32 0.0, %v3362
    %v3364 = vpop.f32.mrb[0].mxu0
    %3365 = vmatprep.mubr.f32.mxu0 %v1654
    %3366 = vmatmul.mubr.f32.gmra.mrb[0].mxu0 %v120
    %v3367 = vpop.f32.mrb[0].mxu0
    %v3368 = vadd.f32 0.0, %v3367
    %v3369 = vpop.f32.mrb[0].mxu0
    %3370 = vmatprep.mubr.f32.mxu0 %v1657
    %3371 = vmatmul.mubr.f32.gmra.mrb[0].mxu0 %v122
    %v3372 = vpop.f32.mrb[0].mxu0
    %v3373 = vadd.f32 0.0, %v3372
    %v3374 = vpop.f32.mrb[0].mxu0
    %3375 = vmatprep.mubr.f32.mxu0 %v1660
    %3376 = vmatmul.mubr.f32.gmra.mrb[0].mxu0 %v124
    %v3377 = vpop.f32.mrb[0].mxu0
    %v3378 = vadd.f32 0.0, %v3377
    %v3379 = vpop.f32.mrb[0].mxu0
    %3380 = vmatprep.mubr.f32.mxu0 %v1663
    %3381 = vmatmul.mubr.f32.gmra.mrb[0].mxu0 %v126
    %v3382 = vpop.f32.mrb[0].mxu0
    %v3383 = vadd.f32 0.0, %v3382
    %v3384 = vpop.f32.mrb[0].mxu0
    %3385 = vmatprep.mubr.f32.mxu0 %v1666
    %3386 = vmatmul.mubr.f32.gmra.mrb[0].mxu0 %v128
    %v3387 = vpop.f32.mrb[0].mxu0
    %v3388 = vadd.f32 0.0, %v3387
    %v3389 = vpop.f32.mrb[0].mxu0
    %3390 = vmatprep.mubr.f32.mxu0 %v1669
    %3391 = vmatmul.mubr.f32.gmra.mrb[0].mxu0 %v130
    %v3392 = vpop.f32.mrb[0].mxu0
    %v3393 = vadd.f32 0.0, %v3392
    %v3394 = vpop.f32.mrb[0].mxu0
    %3395 = vmatprep.mubr.f32.mxu0 %v1672
    %3396 = vmatmul.mubr.f32.gmra.mrb[0].mxu0 %v132
    %v3397 = vpop.f32.mrb[0].mxu0
    %v3398 = vadd.f32 0.0, %v3397
    %v3399 = vpop.f32.mrb[0].mxu0
    %3400 = vmatprep.mubr.f32.mxu0 %v1675
    %3401 = vmatmul.mubr.f32.gmra.mrb[0].mxu0 %v134
    %v3402 = vpop.f32.mrb[0].mxu0
    %v3403 = vadd.f32 0.0, %v3402
    %v3404 = vpop.f32.mrb[0].mxu0
    %3405 = vmatprep.mubr.f32.mxu0 %v1678
    %3406 = vmatmul.mubr.f32.gmra.mrb[0].mxu0 %v136
    %v3407 = vpop.f32.mrb[0].mxu0
    %v3408 = vadd.f32 0.0, %v3407
    %v3409 = vpop.f32.mrb[0].mxu0
    %3410 = vmatprep.mubr.f32.mxu0 %v1681
    %3411 = vmatmul.mubr.f32.gmra.mrb[0].mxu0 %v138
    %v3412 = vpop.f32.mrb[0].mxu0
    %v3413 = vadd.f32 0.0, %v3412
    %v3414 = vpop.f32.mrb[0].mxu0
    %3415 = vmatprep.mubr.f32.mxu0 %v1684
    %3416 = vmatmul.mubr.f32.gmra.mrb[0].mxu0 %v140
    %v3417 = vpop.f32.mrb[0].mxu0
    %v3418 = vadd.f32 0.0, %v3417
    %v3419 = vpop.f32.mrb[0].mxu0
    %3420 = vmatprep.mubr.f32.mxu0 %v1687
    %3421 = vmatmul.mubr.f32.gmra.mrb[0].mxu0 %v142
    %v3422 = vpop.f32.mrb[0].mxu0
    %v3423 = vadd.f32 0.0, %v3422
    %v3424 = vpop.f32.mrb[0].mxu0
    %3425 = vdwg.mxu0
    %v3426 = vld [vmem:[%s5] sm:$0xff]
    %v3427 = vld [vmem:[%s5 + $0x8] sm:$0xff]
    %v3428 = vld [vmem:[%s5 + $0x10] sm:$0xff]
    %v3429 = vld [vmem:[%s5 + $0x18] sm:$0xff]
    %v3430 = vld [vmem:[%s5 + $0x20] sm:$0xff]
    %v3431 = vld [vmem:[%s6] sm:$0x1]
    %v3432 = vld [vmem:[%s7] sm:$0x1]
    %v3433 = vld [vmem:[%s8] sm:$0xff]
    %v3434 = vld [vmem:[%s8 + $0x8] sm:$0xff]
    %v3435 = vld [vmem:[%s8 + $0x10] sm:$0xff]
    %v3436 = vld [vmem:[%s8 + $0x18] sm:$0x1]
    %v3453 = vrot.slane %v1760, 6
    %v3454 = vrot.slane %v1765, 6
    %v3455 = vsel %vm176, %v3453, %v3454
    %v3456 = vrot.slane %v1770, 6
    %v3457 = vsel %vm176, %v3454, %v3456
    %v3458 = vrot.slane %v1775, 6
    %v3459 = vsel %vm176, %v3456, %v3458
    %v3460 = vrot.slane %v1780, 6
    %v3461 = vsel %vm176, %v3458, %v3460
    %v3462 = vrot.slane %v1785, 6
    %v3463 = vsel %vm176, %v3460, %v3462
    %v3464 = vrot.slane %v1790, 6
    %v3465 = vsel %vm176, %v3462, %v3464
    %v3466 = vrot.slane %v1795, 6
    %v3467 = vsel %vm176, %v3464, %v3466
    %v3468 = vrot.slane %v1800, 6
    %v3469 = vsel %vm176, %v3466, %v3468
    %v3470 = vrot.slane %v1805, 6
    %v3471 = vsel %vm176, %v3468, %v3470
    %v3472 = vrot.slane %v1810, 6
    %v3473 = vsel %vm176, %v3470, %v3472
    %v3474 = vrot.slane %v1815, 6
    %v3475 = vsel %vm176, %v3472, %v3474
    %v3476 = vrot.slane %v1820, 6
    %v3477 = vsel %vm176, %v3474, %v3476
    %v3478 = vrot.slane %v1825, 6
    %v3479 = vsel %vm176, %v3476, %v3478
    %v3480 = vrot.slane %v1830, 6
    %v3481 = vsel %vm176, %v3478, %v3480
    %v3482 = vrot.slane %v1835, 6
    %v3483 = vsel %vm176, %v3480, %v3482
    %v3500 = vsel %vm176, 0.0, %v3453
    %v3501 = vsel %vm277, %v3483, 0.0
    %v3504 = vrot.slane %v3500, 1
    %v3505 = vrot.slane %v3455, 1
    %v3506 = vsel %vm277, %v3504, %v3505
    %v3507 = vrot.slane %v3457, 1
    %v3508 = vsel %vm277, %v3505, %v3507
    %v3509 = vrot.slane %v3459, 1
    %v3510 = vsel %vm277, %v3507, %v3509
    %v3511 = vrot.slane %v3461, 1
    %v3512 = vsel %vm277, %v3509, %v3511
    %v3513 = vrot.slane %v3463, 1
    %v3514 = vsel %vm277, %v3511, %v3513
    %v3515 = vrot.slane %v3465, 1
    %v3516 = vsel %vm277, %v3513, %v3515
    %v3517 = vrot.slane %v3467, 1
    %v3518 = vsel %vm277, %v3515, %v3517
    %v3519 = vrot.slane %v3469, 1
    %v3520 = vsel %vm277, %v3517, %v3519
    %v3521 = vrot.slane %v3471, 1
    %v3522 = vsel %vm277, %v3519, %v3521
    %v3523 = vrot.slane %v3473, 1
    %v3524 = vsel %vm277, %v3521, %v3523
    %v3525 = vrot.slane %v3475, 1
    %v3526 = vsel %vm277, %v3523, %v3525
    %v3527 = vrot.slane %v3477, 1
    %v3528 = vsel %vm277, %v3525, %v3527
    %v3529 = vrot.slane %v3479, 1
    %v3530 = vsel %vm277, %v3527, %v3529
    %v3531 = vrot.slane %v3481, 1
    %v3532 = vsel %vm277, %v3529, %v3531
    %v3533 = vrot.slane %v3501, 1
    %v3534 = vsel %vm277, %v3531, %v3533
    %3535 = vrot.lane.b32.xlu0 %v3506, 8
    %v3536 = vpop.permute.xlu0 %3535
    %3537 = vrot.lane.b32.xlu0 %v3508, 8
    %v3538 = vpop.permute.xlu0 %3537
    %3539 = vrot.lane.b32.xlu0 %v3510, 8
    %v3540 = vpop.permute.xlu0 %3539
    %3541 = vrot.lane.b32.xlu0 %v3512, 8
    %v3542 = vpop.permute.xlu0 %3541
    %3543 = vrot.lane.b32.xlu0 %v3514, 8
    %v3544 = vpop.permute.xlu0 %3543
    %3545 = vrot.lane.b32.xlu0 %v3516, 8
    %v3546 = vpop.permute.xlu0 %3545
    %3547 = vrot.lane.b32.xlu0 %v3518, 8
    %v3548 = vpop.permute.xlu0 %3547
    %3549 = vrot.lane.b32.xlu0 %v3520, 8
    %v3550 = vpop.permute.xlu0 %3549
    %3551 = vrot.lane.b32.xlu0 %v3522, 8
    %v3552 = vpop.permute.xlu0 %3551
    %3553 = vrot.lane.b32.xlu0 %v3524, 8
    %v3554 = vpop.permute.xlu0 %3553
    %3555 = vrot.lane.b32.xlu0 %v3526, 8
    %v3556 = vpop.permute.xlu0 %3555
    %3557 = vrot.lane.b32.xlu0 %v3528, 8
    %v3558 = vpop.permute.xlu0 %3557
    %3559 = vrot.lane.b32.xlu0 %v3530, 8
    %v3560 = vpop.permute.xlu0 %3559
    %3561 = vrot.lane.b32.xlu0 %v3532, 8
    %v3562 = vpop.permute.xlu0 %3561
    %3563 = vrot.lane.b32.xlu0 %v3534, 8
    %v3564 = vpop.permute.xlu0 %3563
    %3565 = vrot.lane.b32.xlu0 %v3533, 8
    %v3566 = vpop.permute.xlu0 %3565
    %v3583 = vrot.slane %v3500, 2
    %v3584 = vrot.slane %v3455, 2
    %v3585 = vsel %vm437, %v3583, %v3584
    %v3586 = vrot.slane %v3457, 2
    %v3587 = vsel %vm437, %v3584, %v3586
    %v3588 = vrot.slane %v3459, 2
    %v3589 = vsel %vm437, %v3586, %v3588
    %v3590 = vrot.slane %v3461, 2
    %v3591 = vsel %vm437, %v3588, %v3590
    %v3592 = vrot.slane %v3463, 2
    %v3593 = vsel %vm437, %v3590, %v3592
    %v3594 = vrot.slane %v3465, 2
    %v3595 = vsel %vm437, %v3592, %v3594
    %v3596 = vrot.slane %v3467, 2
    %v3597 = vsel %vm437, %v3594, %v3596
    %v3598 = vrot.slane %v3469, 2
    %v3599 = vsel %vm437, %v3596, %v3598
    %v3600 = vrot.slane %v3471, 2
    %v3601 = vsel %vm437, %v3598, %v3600
    %v3602 = vrot.slane %v3473, 2
    %v3603 = vsel %vm437, %v3600, %v3602
    %v3604 = vrot.slane %v3475, 2
    %v3605 = vsel %vm437, %v3602, %v3604
    %v3606 = vrot.slane %v3477, 2
    %v3607 = vsel %vm437, %v3604, %v3606
    %v3608 = vrot.slane %v3479, 2
    %v3609 = vsel %vm437, %v3606, %v3608
    %v3610 = vrot.slane %v3481, 2
    %v3611 = vsel %vm437, %v3608, %v3610
    %v3612 = vrot.slane %v3501, 2
    %v3613 = vsel %vm437, %v3610, %v3612
    %3614 = vrot.lane.b32.xlu0 %v3585, 16
    %v3615 = vpop.permute.xlu0 %3614
    %3616 = vrot.lane.b32.xlu0 %v3587, 16
    %v3617 = vpop.permute.xlu0 %3616
    %3618 = vrot.lane.b32.xlu0 %v3589, 16
    %v3619 = vpop.permute.xlu0 %3618
    %3620 = vrot.lane.b32.xlu0 %v3591, 16
    %v3621 = vpop.permute.xlu0 %3620
    %3622 = vrot.lane.b32.xlu0 %v3593, 16
    %v3623 = vpop.permute.xlu0 %3622
    %3624 = vrot.lane.b32.xlu0 %v3595, 16
    %v3625 = vpop.permute.xlu0 %3624
    %3626 = vrot.lane.b32.xlu0 %v3597, 16
    %v3627 = vpop.permute.xlu0 %3626
    %3628 = vrot.lane.b32.xlu0 %v3599, 16
    %v3629 = vpop.permute.xlu0 %3628
    %3630 = vrot.lane.b32.xlu0 %v3601, 16
    %v3631 = vpop.permute.xlu0 %3630
    %3632 = vrot.lane.b32.xlu0 %v3603, 16
    %v3633 = vpop.permute.xlu0 %3632
    %3634 = vrot.lane.b32.xlu0 %v3605, 16
    %v3635 = vpop.permute.xlu0 %3634
    %3636 = vrot.lane.b32.xlu0 %v3607, 16
    %v3637 = vpop.permute.xlu0 %3636
    %3638 = vrot.lane.b32.xlu0 %v3609, 16
    %v3639 = vpop.permute.xlu0 %3638
    %3640 = vrot.lane.b32.xlu0 %v3611, 16
    %v3641 = vpop.permute.xlu0 %3640
    %3642 = vrot.lane.b32.xlu0 %v3613, 16
    %v3643 = vpop.permute.xlu0 %3642
    %3644 = vrot.lane.b32.xlu0 %v3612, 16
    %v3645 = vpop.permute.xlu0 %3644
    %v3662 = vrot.slane %v3500, 3
    %v3663 = vrot.slane %v3455, 3
    %v3664 = vsel %vm597, %v3662, %v3663
    %v3665 = vrot.slane %v3457, 3
    %v3666 = vsel %vm597, %v3663, %v3665
    %v3667 = vrot.slane %v3459, 3
    %v3668 = vsel %vm597, %v3665, %v3667
    %v3669 = vrot.slane %v3461, 3
    %v3670 = vsel %vm597, %v3667, %v3669
    %v3671 = vrot.slane %v3463, 3
    %v3672 = vsel %vm597, %v3669, %v3671
    %v3673 = vrot.slane %v3465, 3
    %v3674 = vsel %vm597, %v3671, %v3673
    %v3675 = vrot.slane %v3467, 3
    %v3676 = vsel %vm597, %v3673, %v3675
    %v3677 = vrot.slane %v3469, 3
    %v3678 = vsel %vm597, %v3675, %v3677
    %v3679 = vrot.slane %v3471, 3
    %v3680 = vsel %vm597, %v3677, %v3679
    %v3681 = vrot.slane %v3473, 3
    %v3682 = vsel %vm597, %v3679, %v3681
    %v3683 = vrot.slane %v3475, 3
    %v3684 = vsel %vm597, %v3681, %v3683
    %v3685 = vrot.slane %v3477, 3
    %v3686 = vsel %vm597, %v3683, %v3685
    %v3687 = vrot.slane %v3479, 3
    %v3688 = vsel %vm597, %v3685, %v3687
    %v3689 = vrot.slane %v3481, 3
    %v3690 = vsel %vm597, %v3687, %v3689
    %v3691 = vrot.slane %v3501, 3
    %v3692 = vsel %vm597, %v3689, %v3691
    %3693 = vrot.lane.b32.xlu0 %v3664, 24
    %v3694 = vpop.permute.xlu0 %3693
    %3695 = vrot.lane.b32.xlu0 %v3666, 24
    %v3696 = vpop.permute.xlu0 %3695
    %3697 = vrot.lane.b32.xlu0 %v3668, 24
    %v3698 = vpop.permute.xlu0 %3697
    %3699 = vrot.lane.b32.xlu0 %v3670, 24
    %v3700 = vpop.permute.xlu0 %3699
    %3701 = vrot.lane.b32.xlu0 %v3672, 24
    %v3702 = vpop.permute.xlu0 %3701
    %3703 = vrot.lane.b32.xlu0 %v3674, 24
    %v3704 = vpop.permute.xlu0 %3703
    %3705 = vrot.lane.b32.xlu0 %v3676, 24
    %v3706 = vpop.permute.xlu0 %3705
    %3707 = vrot.lane.b32.xlu0 %v3678, 24
    %v3708 = vpop.permute.xlu0 %3707
    %3709 = vrot.lane.b32.xlu0 %v3680, 24
    %v3710 = vpop.permute.xlu0 %3709
    %3711 = vrot.lane.b32.xlu0 %v3682, 24
    %v3712 = vpop.permute.xlu0 %3711
    %3713 = vrot.lane.b32.xlu0 %v3684, 24
    %v3714 = vpop.permute.xlu0 %3713
    %3715 = vrot.lane.b32.xlu0 %v3686, 24
    %v3716 = vpop.permute.xlu0 %3715
    %3717 = vrot.lane.b32.xlu0 %v3688, 24
    %v3718 = vpop.permute.xlu0 %3717
    %3719 = vrot.lane.b32.xlu0 %v3690, 24
    %v3720 = vpop.permute.xlu0 %3719
    %3721 = vrot.lane.b32.xlu0 %v3692, 24
    %v3722 = vpop.permute.xlu0 %3721
    %3723 = vrot.lane.b32.xlu0 %v3691, 24
    %v3724 = vpop.permute.xlu0 %3723
    %v3742 = vrot.slane %v3500, 4
    %v3743 = vrot.slane %v3455, 4
    %v3744 = vsel %vm273, %v3742, %v3743
    %v3745 = vrot.slane %v3457, 4
    %v3746 = vsel %vm273, %v3743, %v3745
    %v3747 = vrot.slane %v3459, 4
    %v3748 = vsel %vm273, %v3745, %v3747
    %v3749 = vrot.slane %v3461, 4
    %v3750 = vsel %vm273, %v3747, %v3749
    %v3751 = vrot.slane %v3463, 4
    %v3752 = vsel %vm273, %v3749, %v3751
    %v3753 = vrot.slane %v3465, 4
    %v3754 = vsel %vm273, %v3751, %v3753
    %v3755 = vrot.slane %v3467, 4
    %v3756 = vsel %vm273, %v3753, %v3755
    %v3757 = vrot.slane %v3469, 4
    %v3758 = vsel %vm273, %v3755, %v3757
    %v3759 = vrot.slane %v3471, 4
    %v3760 = vsel %vm273, %v3757, %v3759
    %v3761 = vrot.slane %v3473, 4
    %v3762 = vsel %vm273, %v3759, %v3761
    %v3763 = vrot.slane %v3475, 4
    %v3764 = vsel %vm273, %v3761, %v3763
    %v3765 = vrot.slane %v3477, 4
    %v3766 = vsel %vm273, %v3763, %v3765
    %v3767 = vrot.slane %v3479, 4
    %v3768 = vsel %vm273, %v3765, %v3767
    %v3769 = vrot.slane %v3481, 4
    %v3770 = vsel %vm273, %v3767, %v3769
    %v3771 = vrot.slane %v3501, 4
    %v3772 = vsel %vm273, %v3769, %v3771
    %v3773 = vrot.slane 0.0, 4
    %v3774 = vsel %vm273, %v3771, %v3773
    %3775 = vrot.lane.b32.xlu0 %v3744, 32
    %v3776 = vpop.permute.xlu0 %3775
    %3777 = vrot.lane.b32.xlu0 %v3746, 32
    %v3778 = vpop.permute.xlu0 %3777
    %3779 = vrot.lane.b32.xlu0 %v3748, 32
    %v3780 = vpop.permute.xlu0 %3779
    %3781 = vrot.lane.b32.xlu0 %v3750, 32
    %v3782 = vpop.permute.xlu0 %3781
    %3783 = vrot.lane.b32.xlu0 %v3752, 32
    %v3784 = vpop.permute.xlu0 %3783
    %3785 = vrot.lane.b32.xlu0 %v3754, 32
    %v3786 = vpop.permute.xlu0 %3785
    %3787 = vrot.lane.b32.xlu0 %v3756, 32
    %v3788 = vpop.permute.xlu0 %3787
    %3789 = vrot.lane.b32.xlu0 %v3758, 32
    %v3790 = vpop.permute.xlu0 %3789
    %3791 = vrot.lane.b32.xlu0 %v3760, 32
    %v3792 = vpop.permute.xlu0 %3791
    %3793 = vrot.lane.b32.xlu0 %v3762, 32
    %v3794 = vpop.permute.xlu0 %3793
    %3795 = vrot.lane.b32.xlu0 %v3764, 32
    %v3796 = vpop.permute.xlu0 %3795
    %3797 = vrot.lane.b32.xlu0 %v3766, 32
    %v3798 = vpop.permute.xlu0 %3797
    %3799 = vrot.lane.b32.xlu0 %v3768, 32
    %v3800 = vpop.permute.xlu0 %3799
    %3801 = vrot.lane.b32.xlu0 %v3770, 32
    %v3802 = vpop.permute.xlu0 %3801
    %3803 = vrot.lane.b32.xlu0 %v3772, 32
    %v3804 = vpop.permute.xlu0 %3803
    %3805 = vrot.lane.b32.xlu0 %v3774, 32
    %v3806 = vpop.permute.xlu0 %3805
    %vm3823 = vcmask 64512
    %v3824 = vsel %vm3823, %v3500, %v3536
    %v3825 = vsel %vm3823, %v3455, %v3538
    %v3826 = vsel %vm3823, %v3457, %v3540
    %v3827 = vsel %vm3823, %v3459, %v3542
    %v3828 = vsel %vm3823, %v3461, %v3544
    %v3829 = vsel %vm3823, %v3463, %v3546
    %v3830 = vsel %vm3823, %v3465, %v3548
    %v3831 = vsel %vm3823, %v3467, %v3550
    %v3832 = vsel %vm3823, %v3469, %v3552
    %v3833 = vsel %vm3823, %v3471, %v3554
    %v3834 = vsel %vm3823, %v3473, %v3556
    %v3835 = vsel %vm3823, %v3475, %v3558
    %v3836 = vsel %vm3823, %v3477, %v3560
    %v3837 = vsel %vm3823, %v3479, %v3562
    %v3838 = vsel %vm3823, %v3481, %v3564
    %v3839 = vsel %vm3823, %v3501, %v3566
    %vm3840 = vcmask 130048
    %v3841 = vsel %vm3840, %v3824, %v3615
    %v3842 = vsel %vm3840, %v3825, %v3617
    %v3843 = vsel %vm3840, %v3826, %v3619
    %v3844 = vsel %vm3840, %v3827, %v3621
    %v3845 = vsel %vm3840, %v3828, %v3623
    %v3846 = vsel %vm3840, %v3829, %v3625
    %v3847 = vsel %vm3840, %v3830, %v3627
    %v3848 = vsel %vm3840, %v3831, %v3629
    %v3849 = vsel %vm3840, %v3832, %v3631
    %v3850 = vsel %vm3840, %v3833, %v3633
    %v3851 = vsel %vm3840, %v3834, %v3635
    %v3852 = vsel %vm3840, %v3835, %v3637
    %v3853 = vsel %vm3840, %v3836, %v3639
    %v3854 = vsel %vm3840, %v3837, %v3641
    %v3855 = vsel %vm3840, %v3838, %v3643
    %v3856 = vsel %vm3840, %v3839, %v3645
    %vm3857 = vcmask 195584
    %v3858 = vsel %vm3857, %v3841, %v3694
    %v3859 = vsel %vm3857, %v3842, %v3696
    %v3860 = vsel %vm3857, %v3843, %v3698
    %v3861 = vsel %vm3857, %v3844, %v3700
    %v3862 = vsel %vm3857, %v3845, %v3702
    %v3863 = vsel %vm3857, %v3846, %v3704
    %v3864 = vsel %vm3857, %v3847, %v3706
    %v3865 = vsel %vm3857, %v3848, %v3708
    %v3866 = vsel %vm3857, %v3849, %v3710
    %v3867 = vsel %vm3857, %v3850, %v3712
    %v3868 = vsel %vm3857, %v3851, %v3714
    %v3869 = vsel %vm3857, %v3852, %v3716
    %v3870 = vsel %vm3857, %v3853, %v3718
    %v3871 = vsel %vm3857, %v3854, %v3720
    %v3872 = vsel %vm3857, %v3855, %v3722
    %v3873 = vsel %vm3857, %v3856, %v3724
    %vm3874 = vcmask 261120
    %v3875 = vsel %vm3874, %v3858, %v3776
    %v3876 = vsel %vm3874, %v3859, %v3778
    %v3877 = vsel %vm3874, %v3860, %v3780
    %v3878 = vsel %vm3874, %v3861, %v3782
    %v3879 = vsel %vm3874, %v3862, %v3784
    %v3880 = vsel %vm3874, %v3863, %v3786
    %v3881 = vsel %vm3874, %v3864, %v3788
    %v3882 = vsel %vm3874, %v3865, %v3790
    %v3883 = vsel %vm3874, %v3866, %v3792
    %v3884 = vsel %vm3874, %v3867, %v3794
    %v3885 = vsel %vm3874, %v3868, %v3796
    %v3886 = vsel %vm3874, %v3869, %v3798
    %v3887 = vsel %vm3874, %v3870, %v3800
    %v3888 = vsel %vm3874, %v3871, %v3802
    %v3889 = vsel %vm3874, %v3872, %v3804
    %v3890 = vsel %vm3874, %v3873, %v3806
    %vm3891 = vcmask 326656
    %v3893 = vsel %vm3891, %v3875, 0
    %v3896 = vsel %vm3891, %v3876, 0
    %v3899 = vsel %vm3891, %v3877, 0
    %v3902 = vsel %vm3891, %v3878, 0
    %v3905 = vsel %vm3891, %v3879, 0
    %v3908 = vsel %vm3891, %v3880, 0
    %v3911 = vsel %vm3891, %v3881, 0
    %v3914 = vsel %vm3891, %v3882, 0
    %v3917 = vsel %vm3891, %v3883, 0
    %v3920 = vsel %vm3891, %v3884, 0
    %v3923 = vsel %vm3891, %v3885, 0
    %v3926 = vsel %vm3891, %v3886, 0
    %v3929 = vsel %vm3891, %v3887, 0
    %v3932 = vsel %vm3891, %v3888, 0
    %v3935 = vsel %vm3891, %v3889, 0
    %v3938 = vsel %vm3891, %v3890, 0
    %3940 = vmatprep.subr.mxu0 0.0
    %3941 = vmatpush1.msra.mxu0 %v3426
    %3942 = vmatprep.subr.mxu0 0.0
    %3943 = vmatpush1.msra.mxu0 %v3427
    %3944 = vmatprep.subr.mxu0 0.0
    %3945 = vmatpush1.msra.mxu0 %v3428
    %3946 = vmatprep.subr.mxu0 0.0
    %3947 = vmatpush1.msra.mxu0 %v3429
    %3948 = vmatprep.subr.mxu0 0.0
    %3949 = vmatpush1.msra.mxu0 %v3430
    %3950 = vmatprep.subr.mxu0 0.0
    %3951 = vmatpush1.msra.mxu0 0.0
    %3952 = vmatprep.subr.mxu0 0.0
    %3953 = vmatpush1.msra.mxu0 0.0
    %3954 = vmatprep.subr.mxu0 0.0
    %3955 = vmatpush1.msra.mxu0 0.0
    %3956 = vmatprep.subr.mxu0 0.0
    %3957 = vmatpush1.msra.mxu0 0.0
    %3958 = vmatprep.subr.mxu0 0.0
    %3959 = vmatpush1.msra.mxu0 0.0
    %3960 = vmatprep.subr.mxu0 0.0
    %3961 = vmatpush1.msra.mxu0 0.0
    %3962 = vmatprep.subr.mxu0 0.0
    %3963 = vmatpush1.msra.mxu0 0.0
    %3964 = vmatprep.subr.mxu0 0.0
    %3965 = vmatpush1.msra.mxu0 0.0
    %3966 = vmatprep.subr.mxu0 0.0
    %3967 = vmatpush1.msra.mxu0 0.0
    %3968 = vmatprep.subr.mxu0 0.0
    %3969 = vmatpush1.msra.mxu0 0.0
    %3970 = vmatprep.subr.mxu0 0.0
    %3971 = vmatpush1.msra.mxu0 0.0
    %3972 = vmatprep.subr.mxu0 0.0
    %3973 = vmatpush1.msra.mxu0 0.0
    %3974 = vmatprep.subr.mxu0 0.0
    %3975 = vmatpush1.msra.mxu0 0.0
    %3976 = vmatprep.subr.mxu0 0.0
    %3977 = vmatpush1.msra.mxu0 0.0
    %3978 = vmatprep.subr.mxu0 0.0
    %3979 = vmatpush1.msra.mxu0 0.0
    %3980 = vmatprep.subr.mxu0 0.0
    %3981 = vmatpush1.msra.mxu0 0.0
    %3982 = vmatprep.subr.mxu0 0.0
    %3983 = vmatpush1.msra.mxu0 0.0
    %3984 = vmatprep.subr.mxu0 0.0
    %3985 = vmatpush1.msra.mxu0 0.0
    %3986 = vmatprep.subr.mxu0 0.0
    %3987 = vmatpush1.msra.mxu0 0.0
    %3988 = vmatprep.subr.mxu0 0.0
    %3989 = vmatpush1.msra.mxu0 0.0
    %3990 = vmatprep.subr.mxu0 0.0
    %3991 = vmatpush1.msra.mxu0 0.0
    %3992 = vmatprep.subr.mxu0 0.0
    %3993 = vmatpush1.msra.mxu0 0.0
    %3994 = vmatprep.subr.mxu0 0.0
    %3995 = vmatpush1.msra.mxu0 0.0
    %3996 = vmatprep.subr.mxu0 0.0
    %3997 = vmatpush1.msra.mxu0 0.0
    %3998 = vmatprep.subr.mxu0 0.0
    %3999 = vmatpush1.msra.mxu0 0.0
    %4000 = vmatprep.subr.mxu0 0.0
    %4001 = vmatpush1.msra.mxu0 0.0
    %4002 = vmatprep.subr.mxu0 0.0
    %4003 = vmatpush1.msra.mxu0 0.0
    %4004 = vmatprep.mubr.f32.mxu0 0.0
    %4005 = vmatmul.mubr.f32.gmra.mrb[0].mxu0 %v3893
    %v4006 = vpop.f32.mrb[0].mxu0
    %v4007 = vadd.f32 0.0, %v4006
    %v4008 = vpop.f32.mrb[0].mxu0
    %4009 = vmatprep.mubr.f32.mxu0 0.0
    %4010 = vmatmul.mubr.f32.gmra.mrb[0].mxu0 %v3896
    %v4011 = vpop.f32.mrb[0].mxu0
    %v4012 = vadd.f32 0.0, %v4011
    %v4013 = vpop.f32.mrb[0].mxu0
    %4014 = vmatprep.mubr.f32.mxu0 0.0
    %4015 = vmatmul.mubr.f32.gmra.mrb[0].mxu0 %v3899
    %v4016 = vpop.f32.mrb[0].mxu0
    %v4017 = vadd.f32 0.0, %v4016
    %v4018 = vpop.f32.mrb[0].mxu0
    %4019 = vmatprep.mubr.f32.mxu0 0.0
    %4020 = vmatmul.mubr.f32.gmra.mrb[0].mxu0 %v3902
    %v4021 = vpop.f32.mrb[0].mxu0
    %v4022 = vadd.f32 0.0, %v4021
    %v4023 = vpop.f32.mrb[0].mxu0
    %4024 = vmatprep.mubr.f32.mxu0 0.0
    %4025 = vmatmul.mubr.f32.gmra.mrb[0].mxu0 %v3905
    %v4026 = vpop.f32.mrb[0].mxu0
    %v4027 = vadd.f32 0.0, %v4026
    %v4028 = vpop.f32.mrb[0].mxu0
    %4029 = vmatprep.mubr.f32.mxu0 0.0
    %4030 = vmatmul.mubr.f32.gmra.mrb[0].mxu0 %v3908
    %v4031 = vpop.f32.mrb[0].mxu0
    %v4032 = vadd.f32 0.0, %v4031
    %v4033 = vpop.f32.mrb[0].mxu0
    %4034 = vmatprep.mubr.f32.mxu0 0.0
    %4035 = vmatmul.mubr.f32.gmra.mrb[0].mxu0 %v3911
    %v4036 = vpop.f32.mrb[0].mxu0
    %v4037 = vadd.f32 0.0, %v4036
    %v4038 = vpop.f32.mrb[0].mxu0
    %4039 = vmatprep.mubr.f32.mxu0 0.0
    %4040 = vmatmul.mubr.f32.gmra.mrb[0].mxu0 %v3914
    %v4041 = vpop.f32.mrb[0].mxu0
    %v4042 = vadd.f32 0.0, %v4041
    %v4043 = vpop.f32.mrb[0].mxu0
    %4044 = vmatprep.mubr.f32.mxu0 0.0
    %4045 = vmatmul.mubr.f32.gmra.mrb[0].mxu0 %v3917
    %v4046 = vpop.f32.mrb[0].mxu0
    %v4047 = vadd.f32 0.0, %v4046
    %v4048 = vpop.f32.mrb[0].mxu0
    %4049 = vmatprep.mubr.f32.mxu0 0.0
    %4050 = vmatmul.mubr.f32.gmra.mrb[0].mxu0 %v3920
    %v4051 = vpop.f32.mrb[0].mxu0
    %v4052 = vadd.f32 0.0, %v4051
    %v4053 = vpop.f32.mrb[0].mxu0
    %4054 = vmatprep.mubr.f32.mxu0 0.0
    %4055 = vmatmul.mubr.f32.gmra.mrb[0].mxu0 %v3923
    %v4056 = vpop.f32.mrb[0].mxu0
    %v4057 = vadd.f32 0.0, %v4056
    %v4058 = vpop.f32.mrb[0].mxu0
    %4059 = vmatprep.mubr.f32.mxu0 0.0
    %4060 = vmatmul.mubr.f32.gmra.mrb[0].mxu0 %v3926
    %v4061 = vpop.f32.mrb[0].mxu0
    %v4062 = vadd.f32 0.0, %v4061
    %v4063 = vpop.f32.mrb[0].mxu0
    %4064 = vmatprep.mubr.f32.mxu0 0.0
    %4065 = vmatmul.mubr.f32.gmra.mrb[0].mxu0 %v3929
    %v4066 = vpop.f32.mrb[0].mxu0
    %v4067 = vadd.f32 0.0, %v4066
    %v4068 = vpop.f32.mrb[0].mxu0
    %4069 = vmatprep.mubr.f32.mxu0 0.0
    %4070 = vmatmul.mubr.f32.gmra.mrb[0].mxu0 %v3932
    %v4071 = vpop.f32.mrb[0].mxu0
    %v4072 = vadd.f32 0.0, %v4071
    %v4073 = vpop.f32.mrb[0].mxu0
    %4074 = vmatprep.mubr.f32.mxu0 0.0
    %4075 = vmatmul.mubr.f32.gmra.mrb[0].mxu0 %v3935
    %v4076 = vpop.f32.mrb[0].mxu0
    %v4077 = vadd.f32 0.0, %v4076
    %v4078 = vpop.f32.mrb[0].mxu0
    %4079 = vmatprep.mubr.f32.mxu0 0.0
    %4080 = vmatmul.mubr.f32.gmra.mrb[0].mxu0 %v3938
    %v4081 = vpop.f32.mrb[0].mxu0
    %v4082 = vadd.f32 0.0, %v4081
    %v4083 = vpop.f32.mrb[0].mxu0
    %4084 = vdwg.mxu0
    %v4086 = vlaneseq
    %v4087 = vshrl.u32 %v4086, 7
    %v4088 = vsub.s32 0, %v4087
    %v4089 = vrot.slane %v3431, %v4088
    %v4091 = vmul.f32 %v4007, %v4089
    %v4092 = vmul.f32 %v4012, %v4089
    %v4093 = vmul.f32 %v4017, %v4089
    %v4094 = vmul.f32 %v4022, %v4089
    %v4095 = vmul.f32 %v4027, %v4089
    %v4096 = vmul.f32 %v4032, %v4089
    %v4097 = vmul.f32 %v4037, %v4089
    %v4098 = vmul.f32 %v4042, %v4089
    %v4099 = vmul.f32 %v4047, %v4089
    %v4100 = vmul.f32 %v4052, %v4089
    %v4101 = vmul.f32 %v4057, %v4089
    %v4102 = vmul.f32 %v4062, %v4089
    %v4103 = vmul.f32 %v4067, %v4089
    %v4104 = vmul.f32 %v4072, %v4089
    %v4105 = vmul.f32 %v4077, %v4089
    %v4106 = vmul.f32 %v4082, %v4089
    %v4108 = vlaneseq
    %v4109 = vshrl.u32 %v4108, 7
    %v4110 = vsub.s32 0, %v4109
    %v4111 = vrot.slane %v3432, %v4110
    %v4113 = vadd.f32 %v4091, %v4111
    %v4114 = vadd.f32 %v4092, %v4111
    %v4115 = vadd.f32 %v4093, %v4111
    %v4116 = vadd.f32 %v4094, %v4111
    %v4117 = vadd.f32 %v4095, %v4111
    %v4118 = vadd.f32 %v4096, %v4111
    %v4119 = vadd.f32 %v4097, %v4111
    %v4120 = vadd.f32 %v4098, %v4111
    %v4121 = vadd.f32 %v4099, %v4111
    %v4122 = vadd.f32 %v4100, %v4111
    %v4123 = vadd.f32 %v4101, %v4111
    %v4124 = vadd.f32 %v4102, %v4111
    %v4125 = vadd.f32 %v4103, %v4111
    %v4126 = vadd.f32 %v4104, %v4111
    %v4127 = vadd.f32 %v4105, %v4111
    %v4128 = vadd.f32 %v4106, %v4111
    %v4129 = vmax.f32 %v4113, 0.0
    %v4130 = vmax.f32 %v4114, 0.0
    %v4131 = vmax.f32 %v4115, 0.0
    %v4132 = vmax.f32 %v4116, 0.0
    %v4133 = vmax.f32 %v4117, 0.0
    %v4134 = vmax.f32 %v4118, 0.0
    %v4135 = vmax.f32 %v4119, 0.0
    %v4136 = vmax.f32 %v4120, 0.0
    %v4137 = vmax.f32 %v4121, 0.0
    %v4138 = vmax.f32 %v4122, 0.0
    %v4139 = vmax.f32 %v4123, 0.0
    %v4140 = vmax.f32 %v4124, 0.0
    %v4141 = vmax.f32 %v4125, 0.0
    %v4142 = vmax.f32 %v4126, 0.0
    %v4143 = vmax.f32 %v4127, 0.0
    %v4144 = vmax.f32 %v4128, 0.0
    %v4161 = vrot.slane %v4129, 1
    %v4162 = vrot.slane %v4130, 1
    %v4163 = vsel %vm277, %v4161, %v4162
    %v4164 = vrot.slane %v4131, 1
    %v4165 = vsel %vm277, %v4162, %v4164
    %v4166 = vrot.slane %v4132, 1
    %v4167 = vsel %vm277, %v4164, %v4166
    %v4168 = vrot.slane %v4133, 1
    %v4169 = vsel %vm277, %v4166, %v4168
    %v4170 = vrot.slane %v4134, 1
    %v4171 = vsel %vm277, %v4168, %v4170
    %v4172 = vrot.slane %v4135, 1
    %v4173 = vsel %vm277, %v4170, %v4172
    %v4174 = vrot.slane %v4136, 1
    %v4175 = vsel %vm277, %v4172, %v4174
    %v4176 = vrot.slane %v4137, 1
    %v4177 = vsel %vm277, %v4174, %v4176
    %v4178 = vrot.slane %v4138, 1
    %v4179 = vsel %vm277, %v4176, %v4178
    %v4180 = vrot.slane %v4139, 1
    %v4181 = vsel %vm277, %v4178, %v4180
    %v4182 = vrot.slane %v4140, 1
    %v4183 = vsel %vm277, %v4180, %v4182
    %v4184 = vrot.slane %v4141, 1
    %v4185 = vsel %vm277, %v4182, %v4184
    %v4186 = vrot.slane %v4142, 1
    %v4187 = vsel %vm277, %v4184, %v4186
    %v4188 = vrot.slane %v4143, 1
    %v4189 = vsel %vm277, %v4186, %v4188
    %v4190 = vrot.slane %v4144, 1
    %v4191 = vsel %vm277, %v4188, %v4190
    %v4208 = vmax.f32 %v4129, %v4163
    %v4209 = vmax.f32 %v4130, %v4165
    %v4210 = vmax.f32 %v4131, %v4167
    %v4211 = vmax.f32 %v4132, %v4169
    %v4212 = vmax.f32 %v4133, %v4171
    %v4213 = vmax.f32 %v4134, %v4173
    %v4214 = vmax.f32 %v4135, %v4175
    %v4215 = vmax.f32 %v4136, %v4177
    %v4216 = vmax.f32 %v4137, %v4179
    %v4217 = vmax.f32 %v4138, %v4181
    %v4218 = vmax.f32 %v4139, %v4183
    %v4219 = vmax.f32 %v4140, %v4185
    %v4220 = vmax.f32 %v4141, %v4187
    %v4221 = vmax.f32 %v4142, %v4189
    %v4222 = vmax.f32 %v4143, %v4191
    %v4223 = vmax.f32 %v4144, %v4190
    %v4224 = vrot.slane %v4129, 2
    %v4225 = vrot.slane %v4130, 2
    %v4226 = vsel %vm437, %v4224, %v4225
    %v4227 = vrot.slane %v4131, 2
    %v4228 = vsel %vm437, %v4225, %v4227
    %v4229 = vrot.slane %v4132, 2
    %v4230 = vsel %vm437, %v4227, %v4229
    %v4231 = vrot.slane %v4133, 2
    %v4232 = vsel %vm437, %v4229, %v4231
    %v4233 = vrot.slane %v4134, 2
    %v4234 = vsel %vm437, %v4231, %v4233
    %v4235 = vrot.slane %v4135, 2
    %v4236 = vsel %vm437, %v4233, %v4235
    %v4237 = vrot.slane %v4136, 2
    %v4238 = vsel %vm437, %v4235, %v4237
    %v4239 = vrot.slane %v4137, 2
    %v4240 = vsel %vm437, %v4237, %v4239
    %v4241 = vrot.slane %v4138, 2
    %v4242 = vsel %vm437, %v4239, %v4241
    %v4243 = vrot.slane %v4139, 2
    %v4244 = vsel %vm437, %v4241, %v4243
    %v4245 = vrot.slane %v4140, 2
    %v4246 = vsel %vm437, %v4243, %v4245
    %v4247 = vrot.slane %v4141, 2
    %v4248 = vsel %vm437, %v4245, %v4247
    %v4249 = vrot.slane %v4142, 2
    %v4250 = vsel %vm437, %v4247, %v4249
    %v4251 = vrot.slane %v4143, 2
    %v4252 = vsel %vm437, %v4249, %v4251
    %v4253 = vrot.slane %v4144, 2
    %v4254 = vsel %vm437, %v4251, %v4253
    %v4271 = vmax.f32 %v4208, %v4226
    %v4272 = vmax.f32 %v4209, %v4228
    %v4273 = vmax.f32 %v4210, %v4230
    %v4274 = vmax.f32 %v4211, %v4232
    %v4275 = vmax.f32 %v4212, %v4234
    %v4276 = vmax.f32 %v4213, %v4236
    %v4277 = vmax.f32 %v4214, %v4238
    %v4278 = vmax.f32 %v4215, %v4240
    %v4279 = vmax.f32 %v4216, %v4242
    %v4280 = vmax.f32 %v4217, %v4244
    %v4281 = vmax.f32 %v4218, %v4246
    %v4282 = vmax.f32 %v4219, %v4248
    %v4283 = vmax.f32 %v4220, %v4250
    %v4284 = vmax.f32 %v4221, %v4252
    %v4285 = vmax.f32 %v4222, %v4254
    %v4286 = vmax.f32 %v4223, %v4253
    %v4287 = vrot.slane %v4129, 3
    %v4288 = vrot.slane %v4130, 3
    %v4289 = vsel %vm597, %v4287, %v4288
    %v4290 = vrot.slane %v4131, 3
    %v4291 = vsel %vm597, %v4288, %v4290
    %v4292 = vrot.slane %v4132, 3
    %v4293 = vsel %vm597, %v4290, %v4292
    %v4294 = vrot.slane %v4133, 3
    %v4295 = vsel %vm597, %v4292, %v4294
    %v4296 = vrot.slane %v4134, 3
    %v4297 = vsel %vm597, %v4294, %v4296
    %v4298 = vrot.slane %v4135, 3
    %v4299 = vsel %vm597, %v4296, %v4298
    %v4300 = vrot.slane %v4136, 3
    %v4301 = vsel %vm597, %v4298, %v4300
    %v4302 = vrot.slane %v4137, 3
    %v4303 = vsel %vm597, %v4300, %v4302
    %v4304 = vrot.slane %v4138, 3
    %v4305 = vsel %vm597, %v4302, %v4304
    %v4306 = vrot.slane %v4139, 3
    %v4307 = vsel %vm597, %v4304, %v4306
    %v4308 = vrot.slane %v4140, 3
    %v4309 = vsel %vm597, %v4306, %v4308
    %v4310 = vrot.slane %v4141, 3
    %v4311 = vsel %vm597, %v4308, %v4310
    %v4312 = vrot.slane %v4142, 3
    %v4313 = vsel %vm597, %v4310, %v4312
    %v4314 = vrot.slane %v4143, 3
    %v4315 = vsel %vm597, %v4312, %v4314
    %v4316 = vrot.slane %v4144, 3
    %v4317 = vsel %vm597, %v4314, %v4316
    %v4334 = vmax.f32 %v4271, %v4289
    %v4335 = vmax.f32 %v4272, %v4291
    %v4336 = vmax.f32 %v4273, %v4293
    %v4337 = vmax.f32 %v4274, %v4295
    %v4338 = vmax.f32 %v4275, %v4297
    %v4339 = vmax.f32 %v4276, %v4299
    %v4340 = vmax.f32 %v4277, %v4301
    %v4341 = vmax.f32 %v4278, %v4303
    %v4342 = vmax.f32 %v4279, %v4305
    %v4343 = vmax.f32 %v4280, %v4307
    %v4344 = vmax.f32 %v4281, %v4309
    %v4345 = vmax.f32 %v4282, %v4311
    %v4346 = vmax.f32 %v4283, %v4313
    %v4347 = vmax.f32 %v4284, %v4315
    %v4348 = vmax.f32 %v4285, %v4317
    %v4349 = vmax.f32 %v4286, %v4316
    %v4350 = vrot.slane %v4129, 4
    %v4351 = vrot.slane %v4130, 4
    %v4352 = vsel %vm273, %v4350, %v4351
    %v4353 = vrot.slane %v4131, 4
    %v4354 = vsel %vm273, %v4351, %v4353
    %v4355 = vrot.slane %v4132, 4
    %v4356 = vsel %vm273, %v4353, %v4355
    %v4357 = vrot.slane %v4133, 4
    %v4358 = vsel %vm273, %v4355, %v4357
    %v4359 = vrot.slane %v4134, 4
    %v4360 = vsel %vm273, %v4357, %v4359
    %v4361 = vrot.slane %v4135, 4
    %v4362 = vsel %vm273, %v4359, %v4361
    %v4363 = vrot.slane %v4136, 4
    %v4364 = vsel %vm273, %v4361, %v4363
    %v4365 = vrot.slane %v4137, 4
    %v4366 = vsel %vm273, %v4363, %v4365
    %v4367 = vrot.slane %v4138, 4
    %v4368 = vsel %vm273, %v4365, %v4367
    %v4369 = vrot.slane %v4139, 4
    %v4370 = vsel %vm273, %v4367, %v4369
    %v4371 = vrot.slane %v4140, 4
    %v4372 = vsel %vm273, %v4369, %v4371
    %v4373 = vrot.slane %v4141, 4
    %v4374 = vsel %vm273, %v4371, %v4373
    %v4375 = vrot.slane %v4142, 4
    %v4376 = vsel %vm273, %v4373, %v4375
    %v4377 = vrot.slane %v4143, 4
    %v4378 = vsel %vm273, %v4375, %v4377
    %v4379 = vrot.slane %v4144, 4
    %v4380 = vsel %vm273, %v4377, %v4379
    %v4397 = vmax.f32 %v4334, %v4352
    %v4398 = vmax.f32 %v4335, %v4354
    %v4399 = vmax.f32 %v4336, %v4356
    %v4400 = vmax.f32 %v4337, %v4358
    %v4401 = vmax.f32 %v4338, %v4360
    %v4402 = vmax.f32 %v4339, %v4362
    %v4403 = vmax.f32 %v4340, %v4364
    %v4404 = vmax.f32 %v4341, %v4366
    %v4405 = vmax.f32 %v4342, %v4368
    %v4406 = vmax.f32 %v4343, %v4370
    %v4407 = vmax.f32 %v4344, %v4372
    %v4408 = vmax.f32 %v4345, %v4374
    %v4409 = vmax.f32 %v4346, %v4376
    %v4410 = vmax.f32 %v4347, %v4378
    %v4411 = vmax.f32 %v4348, %v4380
    %v4412 = vmax.f32 %v4349, %v4379
    %v4414 = vsel %vm1640, %v3433, 0
    %v4417 = vsel %vm1640, %v3434, 0
    %v4420 = vsel %vm1640, %v3435, 0
    %v4423 = vsel %vm1640, %v3436, 0
    %v4426 = vsel %vm1689, %v4412, 0
    %4428 = vmatprep.subr.mxu0 0.0
    %4429 = vmatpush1.msra.mxu0 %v4397
    %4430 = vmatprep.subr.mxu0 0.0
    %4431 = vmatpush1.msra.mxu0 %v4398
    %4432 = vmatprep.subr.mxu0 0.0
    %4433 = vmatpush1.msra.mxu0 %v4399
    %4434 = vmatprep.subr.mxu0 0.0
    %4435 = vmatpush1.msra.mxu0 %v4400
    %4436 = vmatprep.subr.mxu0 0.0
    %4437 = vmatpush1.msra.mxu0 %v4401
    %4438 = vmatprep.subr.mxu0 0.0
    %4439 = vmatpush1.msra.mxu0 %v4402
    %4440 = vmatprep.subr.mxu0 0.0
    %4441 = vmatpush1.msra.mxu0 %v4403
    %4442 = vmatprep.subr.mxu0 0.0
    %4443 = vmatpush1.msra.mxu0 %v4404
    %4444 = vmatprep.subr.mxu0 0.0
    %4445 = vmatpush1.msra.mxu0 %v4405
    %4446 = vmatprep.subr.mxu0 0.0
    %4447 = vmatpush1.msra.mxu0 %v4406
    %4448 = vmatprep.subr.mxu0 0.0
    %4449 = vmatpush1.msra.mxu0 %v4407
    %4450 = vmatprep.subr.mxu0 0.0
    %4451 = vmatpush1.msra.mxu0 %v4408
    %4452 = vmatprep.subr.mxu0 0.0
    %4453 = vmatpush1.msra.mxu0 %v4409
    %4454 = vmatprep.subr.mxu0 0.0
    %4455 = vmatpush1.msra.mxu0 %v4410
    %4456 = vmatprep.subr.mxu0 0.0
    %4457 = vmatpush1.msra.mxu0 %v4411
    %4458 = vmatprep.subr.mxu0 0.0
    %4459 = vmatpush1.msra.mxu0 %v4426
    %4460 = vmatprep.subr.mxu0 0.0
    %4461 = vmatpush1.msra.mxu0 0.0
    %4462 = vmatprep.subr.mxu0 0.0
    %4463 = vmatpush1.msra.mxu0 0.0
    %4464 = vmatprep.subr.mxu0 0.0
    %4465 = vmatpush1.msra.mxu0 0.0
    %4466 = vmatprep.subr.mxu0 0.0
    %4467 = vmatpush1.msra.mxu0 0.0
    %4468 = vmatprep.subr.mxu0 0.0
    %4469 = vmatpush1.msra.mxu0 0.0
    %4470 = vmatprep.subr.mxu0 0.0
    %4471 = vmatpush1.msra.mxu0 0.0
    %4472 = vmatprep.subr.mxu0 0.0
    %4473 = vmatpush1.msra.mxu0 0.0
    %4474 = vmatprep.subr.mxu0 0.0
    %4475 = vmatpush1.msra.mxu0 0.0
    %4476 = vmatprep.subr.mxu0 0.0
    %4477 = vmatpush1.msra.mxu0 0.0
    %4478 = vmatprep.subr.mxu0 0.0
    %4479 = vmatpush1.msra.mxu0 0.0
    %4480 = vmatprep.subr.mxu0 0.0
    %4481 = vmatpush1.msra.mxu0 0.0
    %4482 = vmatprep.subr.mxu0 0.0
    %4483 = vmatpush1.msra.mxu0 0.0
    %4484 = vmatprep.subr.mxu0 0.0
    %4485 = vmatpush1.msra.mxu0 0.0
    %4486 = vmatprep.subr.mxu0 0.0
    %4487 = vmatpush1.msra.mxu0 0.0
    %4488 = vmatprep.subr.mxu0 0.0
    %4489 = vmatpush1.msra.mxu0 0.0
    %4490 = vmatprep.subr.mxu0 0.0
    %4491 = vmatpush1.msra.mxu0 0.0
    %4492 = vmatprep.mubr.f32.mxu0 0.0
    %4493 = vmatmul.mubr.f32.gmra.mrb[0].mxu0 %v4414
    %v4494 = vpop.f32.mrb[0].mxu0
    %v4495 = vadd.f32 0.0, %v4494
    %v4496 = vpop.f32.mrb[0].mxu0
    %4497 = vmatprep.mubr.f32.mxu0 0.0
    %4498 = vmatmul.mubr.f32.gmra.mrb[0].mxu0 %v4417
    %v4499 = vpop.f32.mrb[0].mxu0
    %v4500 = vadd.f32 0.0, %v4499
    %v4501 = vpop.f32.mrb[0].mxu0
    %4502 = vmatprep.mubr.f32.mxu0 0.0
    %4503 = vmatmul.mubr.f32.gmra.mrb[0].mxu0 %v4420
    %v4504 = vpop.f32.mrb[0].mxu0
    %v4505 = vadd.f32 0.0, %v4504
    %v4506 = vpop.f32.mrb[0].mxu0
    %4507 = vmatprep.mubr.f32.mxu0 0.0
    %4508 = vmatmul.mubr.f32.gmra.mrb[0].mxu0 %v4423
    %v4509 = vpop.f32.mrb[0].mxu0
    %v4510 = vadd.f32 0.0, %v4509
    %v4511 = vpop.f32.mrb[0].mxu0
    %4512 = vdwg.mxu0
    %v4529 = vrot.slane %v3348, 6
    %v4530 = vrot.slane %v3353, 6
    %v4531 = vsel %vm176, %v4529, %v4530
    %v4532 = vrot.slane %v3358, 6
    %v4533 = vsel %vm176, %v4530, %v4532
    %v4534 = vrot.slane %v3363, 6
    %v4535 = vsel %vm176, %v4532, %v4534
    %v4536 = vrot.slane %v3368, 6
    %v4537 = vsel %vm176, %v4534, %v4536
    %v4538 = vrot.slane %v3373, 6
    %v4539 = vsel %vm176, %v4536, %v4538
    %v4540 = vrot.slane %v3378, 6
    %v4541 = vsel %vm176, %v4538, %v4540
    %v4542 = vrot.slane %v3383, 6
    %v4543 = vsel %vm176, %v4540, %v4542
    %v4544 = vrot.slane %v3388, 6
    %v4545 = vsel %vm176, %v4542, %v4544
    %v4546 = vrot.slane %v3393, 6
    %v4547 = vsel %vm176, %v4544, %v4546
    %v4548 = vrot.slane %v3398, 6
    %v4549 = vsel %vm176, %v4546, %v4548
    %v4550 = vrot.slane %v3403, 6
    %v4551 = vsel %vm176, %v4548, %v4550
    %v4552 = vrot.slane %v3408, 6
    %v4553 = vsel %vm176, %v4550, %v4552
    %v4554 = vrot.slane %v3413, 6
    %v4555 = vsel %vm176, %v4552, %v4554
    %v4556 = vrot.slane %v3418, 6
    %v4557 = vsel %vm176, %v4554, %v4556
    %v4558 = vrot.slane %v3423, 6
    %v4559 = vsel %vm176, %v4556, %v4558
    %v4576 = vsel %vm176, 0.0, %v4529
    %v4577 = vsel %vm277, %v4559, 0.0
    %v4580 = vrot.slane %v4576, 1
    %v4581 = vrot.slane %v4531, 1
    %v4582 = vsel %vm277, %v4580, %v4581
    %v4583 = vrot.slane %v4533, 1
    %v4584 = vsel %vm277, %v4581, %v4583
    %v4585 = vrot.slane %v4535, 1
    %v4586 = vsel %vm277, %v4583, %v4585
    %v4587 = vrot.slane %v4537, 1
    %v4588 = vsel %vm277, %v4585, %v4587
    %v4589 = vrot.slane %v4539, 1
    %v4590 = vsel %vm277, %v4587, %v4589
    %v4591 = vrot.slane %v4541, 1
    %v4592 = vsel %vm277, %v4589, %v4591
    %v4593 = vrot.slane %v4543, 1
    %v4594 = vsel %vm277, %v4591, %v4593
    %v4595 = vrot.slane %v4545, 1
    %v4596 = vsel %vm277, %v4593, %v4595
    %v4597 = vrot.slane %v4547, 1
    %v4598 = vsel %vm277, %v4595, %v4597
    %v4599 = vrot.slane %v4549, 1
    %v4600 = vsel %vm277, %v4597, %v4599
    %v4601 = vrot.slane %v4551, 1
    %v4602 = vsel %vm277, %v4599, %v4601
    %v4603 = vrot.slane %v4553, 1
    %v4604 = vsel %vm277, %v4601, %v4603
    %v4605 = vrot.slane %v4555, 1
    %v4606 = vsel %vm277, %v4603, %v4605
    %v4607 = vrot.slane %v4557, 1
    %v4608 = vsel %vm277, %v4605, %v4607
    %v4609 = vrot.slane %v4577, 1
    %v4610 = vsel %vm277, %v4607, %v4609
    %4611 = vrot.lane.b32.xlu0 %v4582, 8
    %v4612 = vpop.permute.xlu0 %4611
    %4613 = vrot.lane.b32.xlu0 %v4584, 8
    %v4614 = vpop.permute.xlu0 %4613
    %4615 = vrot.lane.b32.xlu0 %v4586, 8
    %v4616 = vpop.permute.xlu0 %4615
    %4617 = vrot.lane.b32.xlu0 %v4588, 8
    %v4618 = vpop.permute.xlu0 %4617
    %4619 = vrot.lane.b32.xlu0 %v4590, 8
    %v4620 = vpop.permute.xlu0 %4619
    %4621 = vrot.lane.b32.xlu0 %v4592, 8
    %v4622 = vpop.permute.xlu0 %4621
    %4623 = vrot.lane.b32.xlu0 %v4594, 8
    %v4624 = vpop.permute.xlu0 %4623
    %4625 = vrot.lane.b32.xlu0 %v4596, 8
    %v4626 = vpop.permute.xlu0 %4625
    %4627 = vrot.lane.b32.xlu0 %v4598, 8
    %v4628 = vpop.permute.xlu0 %4627
    %4629 = vrot.lane.b32.xlu0 %v4600, 8
    %v4630 = vpop.permute.xlu0 %4629
    %4631 = vrot.lane.b32.xlu0 %v4602, 8
    %v4632 = vpop.permute.xlu0 %4631
    %4633 = vrot.lane.b32.xlu0 %v4604, 8
    %v4634 = vpop.permute.xlu0 %4633
    %4635 = vrot.lane.b32.xlu0 %v4606, 8
    %v4636 = vpop.permute.xlu0 %4635
    %4637 = vrot.lane.b32.xlu0 %v4608, 8
    %v4638 = vpop.permute.xlu0 %4637
    %4639 = vrot.lane.b32.xlu0 %v4610, 8
    %v4640 = vpop.permute.xlu0 %4639
    %4641 = vrot.lane.b32.xlu0 %v4609, 8
    %v4642 = vpop.permute.xlu0 %4641
    %v4659 = vrot.slane %v4576, 2
    %v4660 = vrot.slane %v4531, 2
    %v4661 = vsel %vm437, %v4659, %v4660
    %v4662 = vrot.slane %v4533, 2
    %v4663 = vsel %vm437, %v4660, %v4662
    %v4664 = vrot.slane %v4535, 2
    %v4665 = vsel %vm437, %v4662, %v4664
    %v4666 = vrot.slane %v4537, 2
    %v4667 = vsel %vm437, %v4664, %v4666
    %v4668 = vrot.slane %v4539, 2
    %v4669 = vsel %vm437, %v4666, %v4668
    %v4670 = vrot.slane %v4541, 2
    %v4671 = vsel %vm437, %v4668, %v4670
    %v4672 = vrot.slane %v4543, 2
    %v4673 = vsel %vm437, %v4670, %v4672
    %v4674 = vrot.slane %v4545, 2
    %v4675 = vsel %vm437, %v4672, %v4674
    %v4676 = vrot.slane %v4547, 2
    %v4677 = vsel %vm437, %v4674, %v4676
    %v4678 = vrot.slane %v4549, 2
    %v4679 = vsel %vm437, %v4676, %v4678
    %v4680 = vrot.slane %v4551, 2
    %v4681 = vsel %vm437, %v4678, %v4680
    %v4682 = vrot.slane %v4553, 2
    %v4683 = vsel %vm437, %v4680, %v4682
    %v4684 = vrot.slane %v4555, 2
    %v4685 = vsel %vm437, %v4682, %v4684
    %v4686 = vrot.slane %v4557, 2
    %v4687 = vsel %vm437, %v4684, %v4686
    %v4688 = vrot.slane %v4577, 2
    %v4689 = vsel %vm437, %v4686, %v4688
    %4690 = vrot.lane.b32.xlu0 %v4661, 16
    %v4691 = vpop.permute.xlu0 %4690
    %4692 = vrot.lane.b32.xlu0 %v4663, 16
    %v4693 = vpop.permute.xlu0 %4692
    %4694 = vrot.lane.b32.xlu0 %v4665, 16
    %v4695 = vpop.permute.xlu0 %4694
    %4696 = vrot.lane.b32.xlu0 %v4667, 16
    %v4697 = vpop.permute.xlu0 %4696
    %4698 = vrot.lane.b32.xlu0 %v4669, 16
    %v4699 = vpop.permute.xlu0 %4698
    %4700 = vrot.lane.b32.xlu0 %v4671, 16
    %v4701 = vpop.permute.xlu0 %4700
    %4702 = vrot.lane.b32.xlu0 %v4673, 16
    %v4703 = vpop.permute.xlu0 %4702
    %4704 = vrot.lane.b32.xlu0 %v4675, 16
    %v4705 = vpop.permute.xlu0 %4704
    %4706 = vrot.lane.b32.xlu0 %v4677, 16
    %v4707 = vpop.permute.xlu0 %4706
    %4708 = vrot.lane.b32.xlu0 %v4679, 16
    %v4709 = vpop.permute.xlu0 %4708
    %4710 = vrot.lane.b32.xlu0 %v4681, 16
    %v4711 = vpop.permute.xlu0 %4710
    %4712 = vrot.lane.b32.xlu0 %v4683, 16
    %v4713 = vpop.permute.xlu0 %4712
    %4714 = vrot.lane.b32.xlu0 %v4685, 16
    %v4715 = vpop.permute.xlu0 %4714
    %4716 = vrot.lane.b32.xlu0 %v4687, 16
    %v4717 = vpop.permute.xlu0 %4716
    %4718 = vrot.lane.b32.xlu0 %v4689, 16
    %v4719 = vpop.permute.xlu0 %4718
    %4720 = vrot.lane.b32.xlu0 %v4688, 16
    %v4721 = vpop.permute.xlu0 %4720
    %v4738 = vrot.slane %v4576, 3
    %v4739 = vrot.slane %v4531, 3
    %v4740 = vsel %vm597, %v4738, %v4739
    %v4741 = vrot.slane %v4533, 3
    %v4742 = vsel %vm597, %v4739, %v4741
    %v4743 = vrot.slane %v4535, 3
    %v4744 = vsel %vm597, %v4741, %v4743
    %v4745 = vrot.slane %v4537, 3
    %v4746 = vsel %vm597, %v4743, %v4745
    %v4747 = vrot.slane %v4539, 3
    %v4748 = vsel %vm597, %v4745, %v4747
    %v4749 = vrot.slane %v4541, 3
    %v4750 = vsel %vm597, %v4747, %v4749
    %v4751 = vrot.slane %v4543, 3
    %v4752 = vsel %vm597, %v4749, %v4751
    %v4753 = vrot.slane %v4545, 3
    %v4754 = vsel %vm597, %v4751, %v4753
    %v4755 = vrot.slane %v4547, 3
    %v4756 = vsel %vm597, %v4753, %v4755
    %v4757 = vrot.slane %v4549, 3
    %v4758 = vsel %vm597, %v4755, %v4757
    %v4759 = vrot.slane %v4551, 3
    %v4760 = vsel %vm597, %v4757, %v4759
    %v4761 = vrot.slane %v4553, 3
    %v4762 = vsel %vm597, %v4759, %v4761
    %v4763 = vrot.slane %v4555, 3
    %v4764 = vsel %vm597, %v4761, %v4763
    %v4765 = vrot.slane %v4557, 3
    %v4766 = vsel %vm597, %v4763, %v4765
    %v4767 = vrot.slane %v4577, 3
    %v4768 = vsel %vm597, %v4765, %v4767
    %4769 = vrot.lane.b32.xlu0 %v4740, 24
    %v4770 = vpop.permute.xlu0 %4769
    %4771 = vrot.lane.b32.xlu0 %v4742, 24
    %v4772 = vpop.permute.xlu0 %4771
    %4773 = vrot.lane.b32.xlu0 %v4744, 24
    %v4774 = vpop.permute.xlu0 %4773
    %4775 = vrot.lane.b32.xlu0 %v4746, 24
    %v4776 = vpop.permute.xlu0 %4775
    %4777 = vrot.lane.b32.xlu0 %v4748, 24
    %v4778 = vpop.permute.xlu0 %4777
    %4779 = vrot.lane.b32.xlu0 %v4750, 24
    %v4780 = vpop.permute.xlu0 %4779
    %4781 = vrot.lane.b32.xlu0 %v4752, 24
    %v4782 = vpop.permute.xlu0 %4781
    %4783 = vrot.lane.b32.xlu0 %v4754, 24
    %v4784 = vpop.permute.xlu0 %4783
    %4785 = vrot.lane.b32.xlu0 %v4756, 24
    %v4786 = vpop.permute.xlu0 %4785
    %4787 = vrot.lane.b32.xlu0 %v4758, 24
    %v4788 = vpop.permute.xlu0 %4787
    %4789 = vrot.lane.b32.xlu0 %v4760, 24
    %v4790 = vpop.permute.xlu0 %4789
    %4791 = vrot.lane.b32.xlu0 %v4762, 24
    %v4792 = vpop.permute.xlu0 %4791
    %4793 = vrot.lane.b32.xlu0 %v4764, 24
    %v4794 = vpop.permute.xlu0 %4793
    %4795 = vrot.lane.b32.xlu0 %v4766, 24
    %v4796 = vpop.permute.xlu0 %4795
    %4797 = vrot.lane.b32.xlu0 %v4768, 24
    %v4798 = vpop.permute.xlu0 %4797
    %4799 = vrot.lane.b32.xlu0 %v4767, 24
    %v4800 = vpop.permute.xlu0 %4799
    %v4817 = vrot.slane %v4576, 4
    %v4818 = vrot.slane %v4531, 4
    %v4819 = vsel %vm273, %v4817, %v4818
    %v4820 = vrot.slane %v4533, 4
    %v4821 = vsel %vm273, %v4818, %v4820
    %v4822 = vrot.slane %v4535, 4
    %v4823 = vsel %vm273, %v4820, %v4822
    %v4824 = vrot.slane %v4537, 4
    %v4825 = vsel %vm273, %v4822, %v4824
    %v4826 = vrot.slane %v4539, 4
    %v4827 = vsel %vm273, %v4824, %v4826
    %v4828 = vrot.slane %v4541, 4
    %v4829 = vsel %vm273, %v4826, %v4828
    %v4830 = vrot.slane %v4543, 4
    %v4831 = vsel %vm273, %v4828, %v4830
    %v4832 = vrot.slane %v4545, 4
    %v4833 = vsel %vm273, %v4830, %v4832
    %v4834 = vrot.slane %v4547, 4
    %v4835 = vsel %vm273, %v4832, %v4834
    %v4836 = vrot.slane %v4549, 4
    %v4837 = vsel %vm273, %v4834, %v4836
    %v4838 = vrot.slane %v4551, 4
    %v4839 = vsel %vm273, %v4836, %v4838
    %v4840 = vrot.slane %v4553, 4
    %v4841 = vsel %vm273, %v4838, %v4840
    %v4842 = vrot.slane %v4555, 4
    %v4843 = vsel %vm273, %v4840, %v4842
    %v4844 = vrot.slane %v4557, 4
    %v4845 = vsel %vm273, %v4842, %v4844
    %v4846 = vrot.slane %v4577, 4
    %v4847 = vsel %vm273, %v4844, %v4846
    %v4848 = vsel %vm273, %v4846, %v3773
    %4849 = vrot.lane.b32.xlu0 %v4819, 32
    %v4850 = vpop.permute.xlu0 %4849
    %4851 = vrot.lane.b32.xlu0 %v4821, 32
    %v4852 = vpop.permute.xlu0 %4851
    %4853 = vrot.lane.b32.xlu0 %v4823, 32
    %v4854 = vpop.permute.xlu0 %4853
    %4855 = vrot.lane.b32.xlu0 %v4825, 32
    %v4856 = vpop.permute.xlu0 %4855
    %4857 = vrot.lane.b32.xlu0 %v4827, 32
    %v4858 = vpop.permute.xlu0 %4857
    %4859 = vrot.lane.b32.xlu0 %v4829, 32
    %v4860 = vpop.permute.xlu0 %4859
    %4861 = vrot.lane.b32.xlu0 %v4831, 32
    %v4862 = vpop.permute.xlu0 %4861
    %4863 = vrot.lane.b32.xlu0 %v4833, 32
    %v4864 = vpop.permute.xlu0 %4863
    %4865 = vrot.lane.b32.xlu0 %v4835, 32
    %v4866 = vpop.permute.xlu0 %4865
    %4867 = vrot.lane.b32.xlu0 %v4837, 32
    %v4868 = vpop.permute.xlu0 %4867
    %4869 = vrot.lane.b32.xlu0 %v4839, 32
    %v4870 = vpop.permute.xlu0 %4869
    %4871 = vrot.lane.b32.xlu0 %v4841, 32
    %v4872 = vpop.permute.xlu0 %4871
    %4873 = vrot.lane.b32.xlu0 %v4843, 32
    %v4874 = vpop.permute.xlu0 %4873
    %4875 = vrot.lane.b32.xlu0 %v4845, 32
    %v4876 = vpop.permute.xlu0 %4875
    %4877 = vrot.lane.b32.xlu0 %v4847, 32
    %v4878 = vpop.permute.xlu0 %4877
    %4879 = vrot.lane.b32.xlu0 %v4848, 32
    %v4880 = vpop.permute.xlu0 %4879
    %v4897 = vsel %vm3823, %v4576, %v4612
    %v4898 = vsel %vm3823, %v4531, %v4614
    %v4899 = vsel %vm3823, %v4533, %v4616
    %v4900 = vsel %vm3823, %v4535, %v4618
    %v4901 = vsel %vm3823, %v4537, %v4620
    %v4902 = vsel %vm3823, %v4539, %v4622
    %v4903 = vsel %vm3823, %v4541, %v4624
    %v4904 = vsel %vm3823, %v4543, %v4626
    %v4905 = vsel %vm3823, %v4545, %v4628
    %v4906 = vsel %vm3823, %v4547, %v4630
    %v4907 = vsel %vm3823, %v4549, %v4632
    %v4908 = vsel %vm3823, %v4551, %v4634
    %v4909 = vsel %vm3823, %v4553, %v4636
    %v4910 = vsel %vm3823, %v4555, %v4638
    %v4911 = vsel %vm3823, %v4557, %v4640
    %v4912 = vsel %vm3823, %v4577, %v4642
    %v4913 = vsel %vm3840, %v4897, %v4691
    %v4914 = vsel %vm3840, %v4898, %v4693
    %v4915 = vsel %vm3840, %v4899, %v4695
    %v4916 = vsel %vm3840, %v4900, %v4697
    %v4917 = vsel %vm3840, %v4901, %v4699
    %v4918 = vsel %vm3840, %v4902, %v4701
    %v4919 = vsel %vm3840, %v4903, %v4703
    %v4920 = vsel %vm3840, %v4904, %v4705
    %v4921 = vsel %vm3840, %v4905, %v4707
    %v4922 = vsel %vm3840, %v4906, %v4709
    %v4923 = vsel %vm3840, %v4907, %v4711
    %v4924 = vsel %vm3840, %v4908, %v4713
    %v4925 = vsel %vm3840, %v4909, %v4715
    %v4926 = vsel %vm3840, %v4910, %v4717
    %v4927 = vsel %vm3840, %v4911, %v4719
    %v4928 = vsel %vm3840, %v4912, %v4721
    %v4929 = vsel %vm3857, %v4913, %v4770
    %v4930 = vsel %vm3857, %v4914, %v4772
    %v4931 = vsel %vm3857, %v4915, %v4774
    %v4932 = vsel %vm3857, %v4916, %v4776
    %v4933 = vsel %vm3857, %v4917, %v4778
    %v4934 = vsel %vm3857, %v4918, %v4780
    %v4935 = vsel %vm3857, %v4919, %v4782
    %v4936 = vsel %vm3857, %v4920, %v4784
    %v4937 = vsel %vm3857, %v4921, %v4786
    %v4938 = vsel %vm3857, %v4922, %v4788
    %v4939 = vsel %vm3857, %v4923, %v4790
    %v4940 = vsel %vm3857, %v4924, %v4792
    %v4941 = vsel %vm3857, %v4925, %v4794
    %v4942 = vsel %vm3857, %v4926, %v4796
    %v4943 = vsel %vm3857, %v4927, %v4798
    %v4944 = vsel %vm3857, %v4928, %v4800
    %v4945 = vsel %vm3874, %v4929, %v4850
    %v4946 = vsel %vm3874, %v4930, %v4852
    %v4947 = vsel %vm3874, %v4931, %v4854
    %v4948 = vsel %vm3874, %v4932, %v4856
    %v4949 = vsel %vm3874, %v4933, %v4858
    %v4950 = vsel %vm3874, %v4934, %v4860
    %v4951 = vsel %vm3874, %v4935, %v4862
    %v4952 = vsel %vm3874, %v4936, %v4864
    %v4953 = vsel %vm3874, %v4937, %v4866
    %v4954 = vsel %vm3874, %v4938, %v4868
    %v4955 = vsel %vm3874, %v4939, %v4870
    %v4956 = vsel %vm3874, %v4940, %v4872
    %v4957 = vsel %vm3874, %v4941, %v4874
    %v4958 = vsel %vm3874, %v4942, %v4876
    %v4959 = vsel %vm3874, %v4943, %v4878
    %v4960 = vsel %vm3874, %v4944, %v4880
    %v4962 = vsel %vm3891, %v4945, 0
    %v4965 = vsel %vm3891, %v4946, 0
    %v4968 = vsel %vm3891, %v4947, 0
    %v4971 = vsel %vm3891, %v4948, 0
    %v4974 = vsel %vm3891, %v4949, 0
    %v4977 = vsel %vm3891, %v4950, 0
    %v4980 = vsel %vm3891, %v4951, 0
    %v4983 = vsel %vm3891, %v4952, 0
    %v4986 = vsel %vm3891, %v4953, 0
    %v4989 = vsel %vm3891, %v4954, 0
    %v4992 = vsel %vm3891, %v4955, 0
    %v4995 = vsel %vm3891, %v4956, 0
    %v4998 = vsel %vm3891, %v4957, 0
    %v5001 = vsel %vm3891, %v4958, 0
    %v5004 = vsel %vm3891, %v4959, 0
    %v5007 = vsel %vm3891, %v4960, 0
    %5009 = vmatprep.subr.mxu0 0.0
    %5010 = vmatpush1.msra.mxu0 %v3426
    %5011 = vmatprep.subr.mxu0 0.0
    %5012 = vmatpush1.msra.mxu0 %v3427
    %5013 = vmatprep.subr.mxu0 0.0
    %5014 = vmatpush1.msra.mxu0 %v3428
    %5015 = vmatprep.subr.mxu0 0.0
    %5016 = vmatpush1.msra.mxu0 %v3429
    %5017 = vmatprep.subr.mxu0 0.0
    %5018 = vmatpush1.msra.mxu0 %v3430
    %5019 = vmatprep.subr.mxu0 0.0
    %5020 = vmatpush1.msra.mxu0 0.0
    %5021 = vmatprep.subr.mxu0 0.0
    %5022 = vmatpush1.msra.mxu0 0.0
    %5023 = vmatprep.subr.mxu0 0.0
    %5024 = vmatpush1.msra.mxu0 0.0
    %5025 = vmatprep.subr.mxu0 0.0
    %5026 = vmatpush1.msra.mxu0 0.0
    %5027 = vmatprep.subr.mxu0 0.0
    %5028 = vmatpush1.msra.mxu0 0.0
    %5029 = vmatprep.subr.mxu0 0.0
    %5030 = vmatpush1.msra.mxu0 0.0
    %5031 = vmatprep.subr.mxu0 0.0
    %5032 = vmatpush1.msra.mxu0 0.0
    %5033 = vmatprep.subr.mxu0 0.0
    %5034 = vmatpush1.msra.mxu0 0.0
    %5035 = vmatprep.subr.mxu0 0.0
    %5036 = vmatpush1.msra.mxu0 0.0
    %5037 = vmatprep.subr.mxu0 0.0
    %5038 = vmatpush1.msra.mxu0 0.0
    %5039 = vmatprep.subr.mxu0 0.0
    %5040 = vmatpush1.msra.mxu0 0.0
    %5041 = vmatprep.subr.mxu0 0.0
    %5042 = vmatpush1.msra.mxu0 0.0
    %5043 = vmatprep.subr.mxu0 0.0
    %5044 = vmatpush1.msra.mxu0 0.0
    %5045 = vmatprep.subr.mxu0 0.0
    %5046 = vmatpush1.msra.mxu0 0.0
    %5047 = vmatprep.subr.mxu0 0.0
    %5048 = vmatpush1.msra.mxu0 0.0
    %5049 = vmatprep.subr.mxu0 0.0
    %5050 = vmatpush1.msra.mxu0 0.0
    %5051 = vmatprep.subr.mxu0 0.0
    %5052 = vmatpush1.msra.mxu0 0.0
    %5053 = vmatprep.subr.mxu0 0.0
    %5054 = vmatpush1.msra.mxu0 0.0
    %5055 = vmatprep.subr.mxu0 0.0
    %5056 = vmatpush1.msra.mxu0 0.0
    %5057 = vmatprep.subr.mxu0 0.0
    %5058 = vmatpush1.msra.mxu0 0.0
    %5059 = vmatprep.subr.mxu0 0.0
    %5060 = vmatpush1.msra.mxu0 0.0
    %5061 = vmatprep.subr.mxu0 0.0
    %5062 = vmatpush1.msra.mxu0 0.0
    %5063 = vmatprep.subr.mxu0 0.0
    %5064 = vmatpush1.msra.mxu0 0.0
    %5065 = vmatprep.subr.mxu0 0.0
    %5066 = vmatpush1.msra.mxu0 0.0
    %5067 = vmatprep.subr.mxu0 0.0
    %5068 = vmatpush1.msra.mxu0 0.0
    %5069 = vmatprep.subr.mxu0 0.0
    %5070 = vmatpush1.msra.mxu0 0.0
    %5071 = vmatprep.subr.mxu0 0.0
    %5072 = vmatpush1.msra.mxu0 0.0
    %5073 = vmatprep.mubr.f32.mxu0 0.0
    %5074 = vmatmul.mubr.f32.gmra.mrb[0].mxu0 %v4962
    %v5075 = vpop.f32.mrb[0].mxu0
    %v5076 = vadd.f32 0.0, %v5075
    %v5077 = vpop.f32.mrb[0].mxu0
    %5078 = vmatprep.mubr.f32.mxu0 0.0
    %5079 = vmatmul.mubr.f32.gmra.mrb[0].mxu0 %v4965
    %v5080 = vpop.f32.mrb[0].mxu0
    %v5081 = vadd.f32 0.0, %v5080
    %v5082 = vpop.f32.mrb[0].mxu0
    %5083 = vmatprep.mubr.f32.mxu0 0.0
    %5084 = vmatmul.mubr.f32.gmra.mrb[0].mxu0 %v4968
    %v5085 = vpop.f32.mrb[0].mxu0
    %v5086 = vadd.f32 0.0, %v5085
    %v5087 = vpop.f32.mrb[0].mxu0
    %5088 = vmatprep.mubr.f32.mxu0 0.0
    %5089 = vmatmul.mubr.f32.gmra.mrb[0].mxu0 %v4971
    %v5090 = vpop.f32.mrb[0].mxu0
    %v5091 = vadd.f32 0.0, %v5090
    %v5092 = vpop.f32.mrb[0].mxu0
    %5093 = vmatprep.mubr.f32.mxu0 0.0
    %5094 = vmatmul.mubr.f32.gmra.mrb[0].mxu0 %v4974
    %v5095 = vpop.f32.mrb[0].mxu0
    %v5096 = vadd.f32 0.0, %v5095
    %v5097 = vpop.f32.mrb[0].mxu0
    %5098 = vmatprep.mubr.f32.mxu0 0.0
    %5099 = vmatmul.mubr.f32.gmra.mrb[0].mxu0 %v4977
    %v5100 = vpop.f32.mrb[0].mxu0
    %v5101 = vadd.f32 0.0, %v5100
    %v5102 = vpop.f32.mrb[0].mxu0
    %5103 = vmatprep.mubr.f32.mxu0 0.0
    %5104 = vmatmul.mubr.f32.gmra.mrb[0].mxu0 %v4980
    %v5105 = vpop.f32.mrb[0].mxu0
    %v5106 = vadd.f32 0.0, %v5105
    %v5107 = vpop.f32.mrb[0].mxu0
    %5108 = vmatprep.mubr.f32.mxu0 0.0
    %5109 = vmatmul.mubr.f32.gmra.mrb[0].mxu0 %v4983
    %v5110 = vpop.f32.mrb[0].mxu0
    %v5111 = vadd.f32 0.0, %v5110
    %v5112 = vpop.f32.mrb[0].mxu0
    %5113 = vmatprep.mubr.f32.mxu0 0.0
    %5114 = vmatmul.mubr.f32.gmra.mrb[0].mxu0 %v4986
    %v5115 = vpop.f32.mrb[0].mxu0
    %v5116 = vadd.f32 0.0, %v5115
    %v5117 = vpop.f32.mrb[0].mxu0
    %5118 = vmatprep.mubr.f32.mxu0 0.0
    %5119 = vmatmul.mubr.f32.gmra.mrb[0].mxu0 %v4989
    %v5120 = vpop.f32.mrb[0].mxu0
    %v5121 = vadd.f32 0.0, %v5120
    %v5122 = vpop.f32.mrb[0].mxu0
    %5123 = vmatprep.mubr.f32.mxu0 0.0
    %5124 = vmatmul.mubr.f32.gmra.mrb[0].mxu0 %v4992
    %v5125 = vpop.f32.mrb[0].mxu0
    %v5126 = vadd.f32 0.0, %v5125
    %v5127 = vpop.f32.mrb[0].mxu0
    %5128 = vmatprep.mubr.f32.mxu0 0.0
    %5129 = vmatmul.mubr.f32.gmra.mrb[0].mxu0 %v4995
    %v5130 = vpop.f32.mrb[0].mxu0
    %v5131 = vadd.f32 0.0, %v5130
    %v5132 = vpop.f32.mrb[0].mxu0
    %5133 = vmatprep.mubr.f32.mxu0 0.0
    %5134 = vmatmul.mubr.f32.gmra.mrb[0].mxu0 %v4998
    %v5135 = vpop.f32.mrb[0].mxu0
    %v5136 = vadd.f32 0.0, %v5135
    %v5137 = vpop.f32.mrb[0].mxu0
    %5138 = vmatprep.mubr.f32.mxu0 0.0
    %5139 = vmatmul.mubr.f32.gmra.mrb[0].mxu0 %v5001
    %v5140 = vpop.f32.mrb[0].mxu0
    %v5141 = vadd.f32 0.0, %v5140
    %v5142 = vpop.f32.mrb[0].mxu0
    %5143 = vmatprep.mubr.f32.mxu0 0.0
    %5144 = vmatmul.mubr.f32.gmra.mrb[0].mxu0 %v5004
    %v5145 = vpop.f32.mrb[0].mxu0
    %v5146 = vadd.f32 0.0, %v5145
    %v5147 = vpop.f32.mrb[0].mxu0
    %5148 = vmatprep.mubr.f32.mxu0 0.0
    %5149 = vmatmul.mubr.f32.gmra.mrb[0].mxu0 %v5007
    %v5150 = vpop.f32.mrb[0].mxu0
    %v5151 = vadd.f32 0.0, %v5150
    %v5152 = vpop.f32.mrb[0].mxu0
    %5153 = vdwg.mxu0
    %v5154 = vmul.f32 %v5076, %v4089
    %v5155 = vmul.f32 %v5081, %v4089
    %v5156 = vmul.f32 %v5086, %v4089
    %v5157 = vmul.f32 %v5091, %v4089
    %v5158 = vmul.f32 %v5096, %v4089
    %v5159 = vmul.f32 %v5101, %v4089
    %v5160 = vmul.f32 %v5106, %v4089
    %v5161 = vmul.f32 %v5111, %v4089
    %v5162 = vmul.f32 %v5116, %v4089
    %v5163 = vmul.f32 %v5121, %v4089
    %v5164 = vmul.f32 %v5126, %v4089
    %v5165 = vmul.f32 %v5131, %v4089
    %v5166 = vmul.f32 %v5136, %v4089
    %v5167 = vmul.f32 %v5141, %v4089
    %v5168 = vmul.f32 %v5146, %v4089
    %v5169 = vmul.f32 %v5151, %v4089
    %v5170 = vadd.f32 %v5154, %v4111
    %v5171 = vadd.f32 %v5155, %v4111
    %v5172 = vadd.f32 %v5156, %v4111
    %v5173 = vadd.f32 %v5157, %v4111
    %v5174 = vadd.f32 %v5158, %v4111
    %v5175 = vadd.f32 %v5159, %v4111
    %v5176 = vadd.f32 %v5160, %v4111
    %v5177 = vadd.f32 %v5161, %v4111
    %v5178 = vadd.f32 %v5162, %v4111
    %v5179 = vadd.f32 %v5163, %v4111
    %v5180 = vadd.f32 %v5164, %v4111
    %v5181 = vadd.f32 %v5165, %v4111
    %v5182 = vadd.f32 %v5166, %v4111
    %v5183 = vadd.f32 %v5167, %v4111
    %v5184 = vadd.f32 %v5168, %v4111
    %v5185 = vadd.f32 %v5169, %v4111
    %v5186 = vmax.f32 %v5170, 0.0
    %v5187 = vmax.f32 %v5171, 0.0
    %v5188 = vmax.f32 %v5172, 0.0
    %v5189 = vmax.f32 %v5173, 0.0
    %v5190 = vmax.f32 %v5174, 0.0
    %v5191 = vmax.f32 %v5175, 0.0
    %v5192 = vmax.f32 %v5176, 0.0
    %v5193 = vmax.f32 %v5177, 0.0
    %v5194 = vmax.f32 %v5178, 0.0
    %v5195 = vmax.f32 %v5179, 0.0
    %v5196 = vmax.f32 %v5180, 0.0
    %v5197 = vmax.f32 %v5181, 0.0
    %v5198 = vmax.f32 %v5182, 0.0
    %v5199 = vmax.f32 %v5183, 0.0
    %v5200 = vmax.f32 %v5184, 0.0
    %v5201 = vmax.f32 %v5185, 0.0
    %v5218 = vrot.slane %v5186, 1
    %v5219 = vrot.slane %v5187, 1
    %v5220 = vsel %vm277, %v5218, %v5219
    %v5221 = vrot.slane %v5188, 1
    %v5222 = vsel %vm277, %v5219, %v5221
    %v5223 = vrot.slane %v5189, 1
    %v5224 = vsel %vm277, %v5221, %v5223
    %v5225 = vrot.slane %v5190, 1
    %v5226 = vsel %vm277, %v5223, %v5225
    %v5227 = vrot.slane %v5191, 1
    %v5228 = vsel %vm277, %v5225, %v5227
    %v5229 = vrot.slane %v5192, 1
    %v5230 = vsel %vm277, %v5227, %v5229
    %v5231 = vrot.slane %v5193, 1
    %v5232 = vsel %vm277, %v5229, %v5231
    %v5233 = vrot.slane %v5194, 1
    %v5234 = vsel %vm277, %v5231, %v5233
    %v5235 = vrot.slane %v5195, 1
    %v5236 = vsel %vm277, %v5233, %v5235
    %v5237 = vrot.slane %v5196, 1
    %v5238 = vsel %vm277, %v5235, %v5237
    %v5239 = vrot.slane %v5197, 1
    %v5240 = vsel %vm277, %v5237, %v5239
    %v5241 = vrot.slane %v5198, 1
    %v5242 = vsel %vm277, %v5239, %v5241
    %v5243 = vrot.slane %v5199, 1
    %v5244 = vsel %vm277, %v5241, %v5243
    %v5245 = vrot.slane %v5200, 1
    %v5246 = vsel %vm277, %v5243, %v5245
    %v5247 = vrot.slane %v5201, 1
    %v5248 = vsel %vm277, %v5245, %v5247
    %v5265 = vmax.f32 %v5186, %v5220
    %v5266 = vmax.f32 %v5187, %v5222
    %v5267 = vmax.f32 %v5188, %v5224
    %v5268 = vmax.f32 %v5189, %v5226
    %v5269 = vmax.f32 %v5190, %v5228
    %v5270 = vmax.f32 %v5191, %v5230
    %v5271 = vmax.f32 %v5192, %v5232
    %v5272 = vmax.f32 %v5193, %v5234
    %v5273 = vmax.f32 %v5194, %v5236
    %v5274 = vmax.f32 %v5195, %v5238
    %v5275 = vmax.f32 %v5196, %v5240
    %v5276 = vmax.f32 %v5197, %v5242
    %v5277 = vmax.f32 %v5198, %v5244
    %v5278 = vmax.f32 %v5199, %v5246
    %v5279 = vmax.f32 %v5200, %v5248
    %v5280 = vmax.f32 %v5201, %v5247
    %v5281 = vrot.slane %v5186, 2
    %v5282 = vrot.slane %v5187, 2
    %v5283 = vsel %vm437, %v5281, %v5282
    %v5284 = vrot.slane %v5188, 2
    %v5285 = vsel %vm437, %v5282, %v5284
    %v5286 = vrot.slane %v5189, 2
    %v5287 = vsel %vm437, %v5284, %v5286
    %v5288 = vrot.slane %v5190, 2
    %v5289 = vsel %vm437, %v5286, %v5288
    %v5290 = vrot.slane %v5191, 2
    %v5291 = vsel %vm437, %v5288, %v5290
    %v5292 = vrot.slane %v5192, 2
    %v5293 = vsel %vm437, %v5290, %v5292
    %v5294 = vrot.slane %v5193, 2
    %v5295 = vsel %vm437, %v5292, %v5294
    %v5296 = vrot.slane %v5194, 2
    %v5297 = vsel %vm437, %v5294, %v5296
    %v5298 = vrot.slane %v5195, 2
    %v5299 = vsel %vm437, %v5296, %v5298
    %v5300 = vrot.slane %v5196, 2
    %v5301 = vsel %vm437, %v5298, %v5300
    %v5302 = vrot.slane %v5197, 2
    %v5303 = vsel %vm437, %v5300, %v5302
    %v5304 = vrot.slane %v5198, 2
    %v5305 = vsel %vm437, %v5302, %v5304
    %v5306 = vrot.slane %v5199, 2
    %v5307 = vsel %vm437, %v5304, %v5306
    %v5308 = vrot.slane %v5200, 2
    %v5309 = vsel %vm437, %v5306, %v5308
    %v5310 = vrot.slane %v5201, 2
    %v5311 = vsel %vm437, %v5308, %v5310
    %v5328 = vmax.f32 %v5265, %v5283
    %v5329 = vmax.f32 %v5266, %v5285
    %v5330 = vmax.f32 %v5267, %v5287
    %v5331 = vmax.f32 %v5268, %v5289
    %v5332 = vmax.f32 %v5269, %v5291
    %v5333 = vmax.f32 %v5270, %v5293
    %v5334 = vmax.f32 %v5271, %v5295
    %v5335 = vmax.f32 %v5272, %v5297
    %v5336 = vmax.f32 %v5273, %v5299
    %v5337 = vmax.f32 %v5274, %v5301
    %v5338 = vmax.f32 %v5275, %v5303
    %v5339 = vmax.f32 %v5276, %v5305
    %v5340 = vmax.f32 %v5277, %v5307
    %v5341 = vmax.f32 %v5278, %v5309
    %v5342 = vmax.f32 %v5279, %v5311
    %v5343 = vmax.f32 %v5280, %v5310
    %v5344 = vrot.slane %v5186, 3
    %v5345 = vrot.slane %v5187, 3
    %v5346 = vsel %vm597, %v5344, %v5345
    %v5347 = vrot.slane %v5188, 3
    %v5348 = vsel %vm597, %v5345, %v5347
    %v5349 = vrot.slane %v5189, 3
    %v5350 = vsel %vm597, %v5347, %v5349
    %v5351 = vrot.slane %v5190, 3
    %v5352 = vsel %vm597, %v5349, %v5351
    %v5353 = vrot.slane %v5191, 3
    %v5354 = vsel %vm597, %v5351, %v5353
    %v5355 = vrot.slane %v5192, 3
    %v5356 = vsel %vm597, %v5353, %v5355
    %v5357 = vrot.slane %v5193, 3
    %v5358 = vsel %vm597, %v5355, %v5357
    %v5359 = vrot.slane %v5194, 3
    %v5360 = vsel %vm597, %v5357, %v5359
    %v5361 = vrot.slane %v5195, 3
    %v5362 = vsel %vm597, %v5359, %v5361
    %v5363 = vrot.slane %v5196, 3
    %v5364 = vsel %vm597, %v5361, %v5363
    %v5365 = vrot.slane %v5197, 3
    %v5366 = vsel %vm597, %v5363, %v5365
    %v5367 = vrot.slane %v5198, 3
    %v5368 = vsel %vm597, %v5365, %v5367
    %v5369 = vrot.slane %v5199, 3
    %v5370 = vsel %vm597, %v5367, %v5369
    %v5371 = vrot.slane %v5200, 3
    %v5372 = vsel %vm597, %v5369, %v5371
    %v5373 = vrot.slane %v5201, 3
    %v5374 = vsel %vm597, %v5371, %v5373
    %v5391 = vmax.f32 %v5328, %v5346
    %v5392 = vmax.f32 %v5329, %v5348
    %v5393 = vmax.f32 %v5330, %v5350
    %v5394 = vmax.f32 %v5331, %v5352
    %v5395 = vmax.f32 %v5332, %v5354
    %v5396 = vmax.f32 %v5333, %v5356
    %v5397 = vmax.f32 %v5334, %v5358
    %v5398 = vmax.f32 %v5335, %v5360
    %v5399 = vmax.f32 %v5336, %v5362
    %v5400 = vmax.f32 %v5337, %v5364
    %v5401 = vmax.f32 %v5338, %v5366
    %v5402 = vmax.f32 %v5339, %v5368
    %v5403 = vmax.f32 %v5340, %v5370
    %v5404 = vmax.f32 %v5341, %v5372
    %v5405 = vmax.f32 %v5342, %v5374
    %v5406 = vmax.f32 %v5343, %v5373
    %v5407 = vrot.slane %v5186, 4
    %v5408 = vrot.slane %v5187, 4
    %v5409 = vsel %vm273, %v5407, %v5408
    %v5410 = vrot.slane %v5188, 4
    %v5411 = vsel %vm273, %v5408, %v5410
    %v5412 = vrot.slane %v5189, 4
    %v5413 = vsel %vm273, %v5410, %v5412
    %v5414 = vrot.slane %v5190, 4
    %v5415 = vsel %vm273, %v5412, %v5414
    %v5416 = vrot.slane %v5191, 4
    %v5417 = vsel %vm273, %v5414, %v5416
    %v5418 = vrot.slane %v5192, 4
    %v5419 = vsel %vm273, %v5416, %v5418
    %v5420 = vrot.slane %v5193, 4
    %v5421 = vsel %vm273, %v5418, %v5420
    %v5422 = vrot.slane %v5194, 4
    %v5423 = vsel %vm273, %v5420, %v5422
    %v5424 = vrot.slane %v5195, 4
    %v5425 = vsel %vm273, %v5422, %v5424
    %v5426 = vrot.slane %v5196, 4
    %v5427 = vsel %vm273, %v5424, %v5426
    %v5428 = vrot.slane %v5197, 4
    %v5429 = vsel %vm273, %v5426, %v5428
    %v5430 = vrot.slane %v5198, 4
    %v5431 = vsel %vm273, %v5428, %v5430
    %v5432 = vrot.slane %v5199, 4
    %v5433 = vsel %vm273, %v5430, %v5432
    %v5434 = vrot.slane %v5200, 4
    %v5435 = vsel %vm273, %v5432, %v5434
    %v5436 = vrot.slane %v5201, 4
    %v5437 = vsel %vm273, %v5434, %v5436
    %v5454 = vmax.f32 %v5391, %v5409
    %v5455 = vmax.f32 %v5392, %v5411
    %v5456 = vmax.f32 %v5393, %v5413
    %v5457 = vmax.f32 %v5394, %v5415
    %v5458 = vmax.f32 %v5395, %v5417
    %v5459 = vmax.f32 %v5396, %v5419
    %v5460 = vmax.f32 %v5397, %v5421
    %v5461 = vmax.f32 %v5398, %v5423
    %v5462 = vmax.f32 %v5399, %v5425
    %v5463 = vmax.f32 %v5400, %v5427
    %v5464 = vmax.f32 %v5401, %v5429
    %v5465 = vmax.f32 %v5402, %v5431
    %v5466 = vmax.f32 %v5403, %v5433
    %v5467 = vmax.f32 %v5404, %v5435
    %v5468 = vmax.f32 %v5405, %v5437
    %v5469 = vmax.f32 %v5406, %v5436
    %v5471 = vsel %vm1689, %v5469, 0
    %5473 = vmatprep.subr.mxu0 0.0
    %5474 = vmatpush1.msra.mxu0 %v5454
    %5475 = vmatprep.subr.mxu0 0.0
    %5476 = vmatpush1.msra.mxu0 %v5455
    %5477 = vmatprep.subr.mxu0 0.0
    %5478 = vmatpush1.msra.mxu0 %v5456
    %5479 = vmatprep.subr.mxu0 0.0
    %5480 = vmatpush1.msra.mxu0 %v5457
    %5481 = vmatprep.subr.mxu0 0.0
    %5482 = vmatpush1.msra.mxu0 %v5458
    %5483 = vmatprep.subr.mxu0 0.0
    %5484 = vmatpush1.msra.mxu0 %v5459
    %5485 = vmatprep.subr.mxu0 0.0
    %5486 = vmatpush1.msra.mxu0 %v5460
    %5487 = vmatprep.subr.mxu0 0.0
    %5488 = vmatpush1.msra.mxu0 %v5461
    %5489 = vmatprep.subr.mxu0 0.0
    %5490 = vmatpush1.msra.mxu0 %v5462
    %5491 = vmatprep.subr.mxu0 0.0
    %5492 = vmatpush1.msra.mxu0 %v5463
    %5493 = vmatprep.subr.mxu0 0.0
    %5494 = vmatpush1.msra.mxu0 %v5464
    %5495 = vmatprep.subr.mxu0 0.0
    %5496 = vmatpush1.msra.mxu0 %v5465
    %5497 = vmatprep.subr.mxu0 0.0
    %5498 = vmatpush1.msra.mxu0 %v5466
    %5499 = vmatprep.subr.mxu0 0.0
    %5500 = vmatpush1.msra.mxu0 %v5467
    %5501 = vmatprep.subr.mxu0 0.0
    %5502 = vmatpush1.msra.mxu0 %v5468
    %5503 = vmatprep.subr.mxu0 0.0
    %5504 = vmatpush1.msra.mxu0 %v5471
    %5505 = vmatprep.subr.mxu0 0.0
    %5506 = vmatpush1.msra.mxu0 0.0
    %5507 = vmatprep.subr.mxu0 0.0
    %5508 = vmatpush1.msra.mxu0 0.0
    %5509 = vmatprep.subr.mxu0 0.0
    %5510 = vmatpush1.msra.mxu0 0.0
    %5511 = vmatprep.subr.mxu0 0.0
    %5512 = vmatpush1.msra.mxu0 0.0
    %5513 = vmatprep.subr.mxu0 0.0
    %5514 = vmatpush1.msra.mxu0 0.0
    %5515 = vmatprep.subr.mxu0 0.0
    %5516 = vmatpush1.msra.mxu0 0.0
    %5517 = vmatprep.subr.mxu0 0.0
    %5518 = vmatpush1.msra.mxu0 0.0
    %5519 = vmatprep.subr.mxu0 0.0
    %5520 = vmatpush1.msra.mxu0 0.0
    %5521 = vmatprep.subr.mxu0 0.0
    %5522 = vmatpush1.msra.mxu0 0.0
    %5523 = vmatprep.subr.mxu0 0.0
    %5524 = vmatpush1.msra.mxu0 0.0
    %5525 = vmatprep.subr.mxu0 0.0
    %5526 = vmatpush1.msra.mxu0 0.0
    %5527 = vmatprep.subr.mxu0 0.0
    %5528 = vmatpush1.msra.mxu0 0.0
    %5529 = vmatprep.subr.mxu0 0.0
    %5530 = vmatpush1.msra.mxu0 0.0
    %5531 = vmatprep.subr.mxu0 0.0
    %5532 = vmatpush1.msra.mxu0 0.0
    %5533 = vmatprep.subr.mxu0 0.0
    %5534 = vmatpush1.msra.mxu0 0.0
    %5535 = vmatprep.subr.mxu0 0.0
    %5536 = vmatpush1.msra.mxu0 0.0
    %5537 = vmatprep.mubr.f32.mxu0 0.0
    %5538 = vmatmul.mubr.f32.gmra.mrb[0].mxu0 %v4414
    %v5539 = vpop.f32.mrb[0].mxu0
    %v5540 = vadd.f32 0.0, %v5539
    %v5541 = vpop.f32.mrb[0].mxu0
    %5542 = vmatprep.mubr.f32.mxu0 0.0
    %5543 = vmatmul.mubr.f32.gmra.mrb[0].mxu0 %v4417
    %v5544 = vpop.f32.mrb[0].mxu0
    %v5545 = vadd.f32 0.0, %v5544
    %v5546 = vpop.f32.mrb[0].mxu0
    %5547 = vmatprep.mubr.f32.mxu0 0.0
    %5548 = vmatmul.mubr.f32.gmra.mrb[0].mxu0 %v4420
    %v5549 = vpop.f32.mrb[0].mxu0
    %v5550 = vadd.f32 0.0, %v5549
    %v5551 = vpop.f32.mrb[0].mxu0
    %5552 = vmatprep.mubr.f32.mxu0 0.0
    %5553 = vmatmul.mubr.f32.gmra.mrb[0].mxu0 %v4423
    %v5554 = vpop.f32.mrb[0].mxu0
    %v5555 = vadd.f32 0.0, %v5554
    %v5556 = vpop.f32.mrb[0].mxu0
    %5557 = vdwg.mxu0
    %v5558 = vld [vmem:[%s9] sm:$0xff]
    %v5559 = vld [vmem:[%s9 + $0x8] sm:$0xff]
    %v5560 = vld [vmem:[%s9 + $0x10] sm:$0xff]
    %v5561 = vld [vmem:[%s9 + $0x18] sm:$0xff]
    %v5562 = vld [vmem:[%s9 + $0x20] sm:$0xff]
    %v5563 = vld [vmem:[%s9 + $0x28] sm:$0xff]
    %v5564 = vld [vmem:[%s9 + $0x30] sm:$0xff]
    %v5565 = vld [vmem:[%s9 + $0x38] sm:$0xff]
    %v5566 = vld [vmem:[%s9 + $0x40] sm:$0xff]
    %v5567 = vld [vmem:[%s9 + $0x48] sm:$0xff]
    %v5568 = vld [vmem:[%s10] sm:$0x1]
    %v5569 = vld [vmem:[%s11] sm:$0x1]
    %v5570 = vld [vmem:[%s12] sm:$0x1f]
    %v5575 = vrot.slane %v4495, 6
    %v5576 = vrot.slane %v4500, 6
    %v5577 = vsel %vm176, %v5575, %v5576
    %v5578 = vrot.slane %v4505, 6
    %v5579 = vsel %vm176, %v5576, %v5578
    %v5580 = vrot.slane %v4510, 6
    %v5581 = vsel %vm176, %v5578, %v5580
    %v5586 = vsel %vm176, 0.0, %v5575
    %vm5587 = vcmask 1042432
    %v5588 = vsel %vm5587, %v5581, 0.0
    %v5591 = vrot.slane %v5586, 1
    %v5592 = vrot.slane %v5577, 1
    %v5593 = vsel %vm277, %v5591, %v5592
    %v5594 = vrot.slane %v5579, 1
    %v5595 = vsel %vm277, %v5592, %v5594
    %v5596 = vrot.slane %v5588, 1
    %v5597 = vsel %vm277, %v5594, %v5596
    %5598 = vrot.lane.b32.xlu0 %v5593, 16
    %v5599 = vpop.permute.xlu0 %5598
    %5600 = vrot.lane.b32.xlu0 %v5595, 16
    %v5601 = vpop.permute.xlu0 %5600
    %5602 = vrot.lane.b32.xlu0 %v5597, 16
    %v5603 = vpop.permute.xlu0 %5602
    %5604 = vrot.lane.b32.xlu0 %v5596, 16
    %v5605 = vpop.permute.xlu0 %5604
    %v5610 = vrot.slane %v5586, 2
    %v5611 = vrot.slane %v5577, 2
    %v5612 = vsel %vm437, %v5610, %v5611
    %v5613 = vrot.slane %v5579, 2
    %v5614 = vsel %vm437, %v5611, %v5613
    %v5615 = vrot.slane %v5588, 2
    %v5616 = vsel %vm437, %v5613, %v5615
    %5617 = vrot.lane.b32.xlu0 %v5612, 32
    %v5618 = vpop.permute.xlu0 %5617
    %5619 = vrot.lane.b32.xlu0 %v5614, 32
    %v5620 = vpop.permute.xlu0 %5619
    %5621 = vrot.lane.b32.xlu0 %v5616, 32
    %v5622 = vpop.permute.xlu0 %5621
    %5623 = vrot.lane.b32.xlu0 %v5615, 32
    %v5624 = vpop.permute.xlu0 %5623
    %v5629 = vrot.slane %v5586, 3
    %v5630 = vrot.slane %v5577, 3
    %v5631 = vsel %vm597, %v5629, %v5630
    %v5632 = vrot.slane %v5579, 3
    %v5633 = vsel %vm597, %v5630, %v5632
    %v5634 = vrot.slane %v5588, 3
    %v5635 = vsel %vm597, %v5632, %v5634
    %5636 = vrot.lane.b32.xlu0 %v5631, 48
    %v5637 = vpop.permute.xlu0 %5636
    %5638 = vrot.lane.b32.xlu0 %v5633, 48
    %v5639 = vpop.permute.xlu0 %5638
    %5640 = vrot.lane.b32.xlu0 %v5635, 48
    %v5641 = vpop.permute.xlu0 %5640
    %5642 = vrot.lane.b32.xlu0 %v5634, 48
    %v5643 = vpop.permute.xlu0 %5642
    %v5648 = vrot.slane %v5586, 4
    %v5649 = vrot.slane %v5577, 4
    %v5650 = vsel %vm273, %v5648, %v5649
    %v5651 = vrot.slane %v5579, 4
    %v5652 = vsel %vm273, %v5649, %v5651
    %v5653 = vrot.slane %v5588, 4
    %v5654 = vsel %vm273, %v5651, %v5653
    %5655 = vrot.lane.b32.xlu0 %v5650, 64
    %v5656 = vpop.permute.xlu0 %5655
    %5657 = vrot.lane.b32.xlu0 %v5652, 64
    %v5658 = vpop.permute.xlu0 %5657
    %5659 = vrot.lane.b32.xlu0 %v5654, 64
    %v5660 = vpop.permute.xlu0 %5659
    %5661 = vrot.lane.b32.xlu0 %v5653, 64
    %v5662 = vpop.permute.xlu0 %5661
    %v5667 = vsel %vm3840, %v5586, %v5599
    %v5668 = vsel %vm3840, %v5577, %v5601
    %v5669 = vsel %vm3840, %v5579, %v5603
    %v5670 = vsel %vm3840, %v5588, %v5605
    %v5671 = vsel %vm3874, %v5667, %v5618
    %v5672 = vsel %vm3874, %v5668, %v5620
    %v5673 = vsel %vm3874, %v5669, %v5622
    %v5674 = vsel %vm3874, %v5670, %v5624
    %vm5675 = vcmask 392192
    %v5676 = vsel %vm5675, %v5671, %v5637
    %v5677 = vsel %vm5675, %v5672, %v5639
    %v5678 = vsel %vm5675, %v5673, %v5641
    %v5679 = vsel %vm5675, %v5674, %v5643
    %vm5680 = vcmask 523264
    %v5681 = vsel %vm5680, %v5676, %v5656
    %v5682 = vsel %vm5680, %v5677, %v5658
    %v5683 = vsel %vm5680, %v5678, %v5660
    %v5684 = vsel %vm5680, %v5679, %v5662
    %vm5685 = vcmask 654336
    %v5687 = vsel %vm5685, %v5681, 0
    %v5690 = vsel %vm5685, %v5682, 0
    %v5693 = vsel %vm5685, %v5683, 0
    %v5696 = vsel %vm5685, %v5684, 0
    %5698 = vmatprep.subr.mxu0 0.0
    %5699 = vmatpush1.msra.mxu0 %v5558
    %5700 = vmatprep.subr.mxu0 0.0
    %5701 = vmatpush1.msra.mxu0 %v5559
    %5702 = vmatprep.subr.mxu0 0.0
    %5703 = vmatpush1.msra.mxu0 %v5560
    %5704 = vmatprep.subr.mxu0 0.0
    %5705 = vmatpush1.msra.mxu0 %v5561
    %5706 = vmatprep.subr.mxu0 0.0
    %5707 = vmatpush1.msra.mxu0 %v5562
    %5708 = vmatprep.subr.mxu0 0.0
    %5709 = vmatpush1.msra.mxu0 %v5563
    %5710 = vmatprep.subr.mxu0 0.0
    %5711 = vmatpush1.msra.mxu0 %v5564
    %5712 = vmatprep.subr.mxu0 0.0
    %5713 = vmatpush1.msra.mxu0 %v5565
    %5714 = vmatprep.subr.mxu0 0.0
    %5715 = vmatpush1.msra.mxu0 %v5566
    %5716 = vmatprep.subr.mxu0 0.0
    %5717 = vmatpush1.msra.mxu0 %v5567
    %5718 = vmatprep.subr.mxu0 0.0
    %5719 = vmatpush1.msra.mxu0 0.0
    %5720 = vmatprep.subr.mxu0 0.0
    %5721 = vmatpush1.msra.mxu0 0.0
    %5722 = vmatprep.subr.mxu0 0.0
    %5723 = vmatpush1.msra.mxu0 0.0
    %5724 = vmatprep.subr.mxu0 0.0
    %5725 = vmatpush1.msra.mxu0 0.0
    %5726 = vmatprep.subr.mxu0 0.0
    %5727 = vmatpush1.msra.mxu0 0.0
    %5728 = vmatprep.subr.mxu0 0.0
    %5729 = vmatpush1.msra.mxu0 0.0
    %5730 = vmatprep.subr.mxu0 0.0
    %5731 = vmatpush1.msra.mxu0 0.0
    %5732 = vmatprep.subr.mxu0 0.0
    %5733 = vmatpush1.msra.mxu0 0.0
    %5734 = vmatprep.subr.mxu0 0.0
    %5735 = vmatpush1.msra.mxu0 0.0
    %5736 = vmatprep.subr.mxu0 0.0
    %5737 = vmatpush1.msra.mxu0 0.0
    %5738 = vmatprep.subr.mxu0 0.0
    %5739 = vmatpush1.msra.mxu0 0.0
    %5740 = vmatprep.subr.mxu0 0.0
    %5741 = vmatpush1.msra.mxu0 0.0
    %5742 = vmatprep.subr.mxu0 0.0
    %5743 = vmatpush1.msra.mxu0 0.0
    %5744 = vmatprep.subr.mxu0 0.0
    %5745 = vmatpush1.msra.mxu0 0.0
    %5746 = vmatprep.subr.mxu0 0.0
    %5747 = vmatpush1.msra.mxu0 0.0
    %5748 = vmatprep.subr.mxu0 0.0
    %5749 = vmatpush1.msra.mxu0 0.0
    %5750 = vmatprep.subr.mxu0 0.0
    %5751 = vmatpush1.msra.mxu0 0.0
    %5752 = vmatprep.subr.mxu0 0.0
    %5753 = vmatpush1.msra.mxu0 0.0
    %5754 = vmatprep.subr.mxu0 0.0
    %5755 = vmatpush1.msra.mxu0 0.0
    %5756 = vmatprep.subr.mxu0 0.0
    %5757 = vmatpush1.msra.mxu0 0.0
    %5758 = vmatprep.subr.mxu0 0.0
    %5759 = vmatpush1.msra.mxu0 0.0
    %5760 = vmatprep.subr.mxu0 0.0
    %5761 = vmatpush1.msra.mxu0 0.0
    %5762 = vmatprep.mubr.f32.mxu0 0.0
    %5763 = vmatmul.mubr.f32.gmra.mrb[0].mxu0 %v5687
    %v5764 = vpop.f32.mrb[0].mxu0
    %v5765 = vadd.f32 0.0, %v5764
    %v5766 = vpop.f32.mrb[0].mxu0
    %5767 = vmatprep.mubr.f32.mxu0 0.0
    %5768 = vmatmul.mubr.f32.gmra.mrb[0].mxu0 %v5690
    %v5769 = vpop.f32.mrb[0].mxu0
    %v5770 = vadd.f32 0.0, %v5769
    %v5771 = vpop.f32.mrb[0].mxu0
    %5772 = vmatprep.mubr.f32.mxu0 0.0
    %5773 = vmatmul.mubr.f32.gmra.mrb[0].mxu0 %v5693
    %v5774 = vpop.f32.mrb[0].mxu0
    %v5775 = vadd.f32 0.0, %v5774
    %v5776 = vpop.f32.mrb[0].mxu0
    %5777 = vmatprep.mubr.f32.mxu0 0.0
    %5778 = vmatmul.mubr.f32.gmra.mrb[0].mxu0 %v5696
    %v5779 = vpop.f32.mrb[0].mxu0
    %v5780 = vadd.f32 0.0, %v5779
    %v5781 = vpop.f32.mrb[0].mxu0
    %5782 = vdwg.mxu0
    %v5784 = vlaneseq
    %v5785 = vshrl.u32 %v5784, 7
    %v5786 = vsub.s32 0, %v5785
    %v5787 = vrot.slane %v5568, %v5786
    %v5789 = vmul.f32 %v5765, %v5787
    %v5790 = vmul.f32 %v5770, %v5787
    %v5791 = vmul.f32 %v5775, %v5787
    %v5792 = vmul.f32 %v5780, %v5787
    %v5794 = vlaneseq
    %v5795 = vshrl.u32 %v5794, 7
    %v5796 = vsub.s32 0, %v5795
    %v5797 = vrot.slane %v5569, %v5796
    %v5799 = vadd.f32 %v5789, %v5797
    %v5800 = vadd.f32 %v5790, %v5797
    %v5801 = vadd.f32 %v5791, %v5797
    %v5802 = vadd.f32 %v5792, %v5797
    %v5803 = vmax.f32 %v5799, 0.0
    %v5804 = vmax.f32 %v5800, 0.0
    %v5805 = vmax.f32 %v5801, 0.0
    %v5806 = vmax.f32 %v5802, 0.0
    %v5810 = vrot.slane %v5803, 1
    %v5811 = vrot.slane %v5804, 1
    %v5812 = vsel %vm277, %v5810, %v5811
    %v5813 = vrot.slane %v5805, 1
    %v5814 = vsel %vm277, %v5811, %v5813
    %v5818 = vmax.f32 %v5803, %v5812
    %v5819 = vmax.f32 %v5804, %v5814
    %v5820 = vmax.f32 %v5805, %v5813
    %v5821 = vrot.slane %v5803, 2
    %v5822 = vrot.slane %v5804, 2
    %v5823 = vsel %vm437, %v5821, %v5822
    %v5824 = vrot.slane %v5805, 2
    %v5825 = vsel %vm437, %v5822, %v5824
    %v5829 = vmax.f32 %v5818, %v5823
    %v5830 = vmax.f32 %v5819, %v5825
    %v5831 = vmax.f32 %v5820, %v5824
    %v5832 = vrot.slane %v5803, 3
    %v5833 = vrot.slane %v5804, 3
    %v5834 = vsel %vm597, %v5832, %v5833
    %v5835 = vrot.slane %v5805, 3
    %v5836 = vsel %vm597, %v5833, %v5835
    %v5840 = vmax.f32 %v5829, %v5834
    %v5841 = vmax.f32 %v5830, %v5836
    %v5842 = vmax.f32 %v5831, %v5835
    %v5844 = vrot.slane %v5803, 4
    %v5845 = vrot.slane %v5804, 4
    %v5846 = vsel %vm273, %v5844, %v5845
    %v5847 = vrot.slane %v5805, 4
    %v5848 = vsel %vm273, %v5845, %v5847
    %v5849 = vrot.slane %v5806, 4
    %v5850 = vsel %vm273, %v5847, %v5849
    %v5854 = vmax.f32 %v5840, %v5846
    %v5855 = vmax.f32 %v5841, %v5848
    %v5856 = vmax.f32 %v5842, %v5850
    %vm5857 = vcmask 171008
    %v5859 = vsel %vm5857, %v5570, 0
    %v5862 = vsel %vm597, %v5856, 0
    %5864 = vmatprep.subr.mxu0 0.0
    %5865 = vmatpush1.msra.mxu0 %v5854
    %5866 = vmatprep.subr.mxu0 0.0
    %5867 = vmatpush1.msra.mxu0 %v5855
    %5868 = vmatprep.subr.mxu0 0.0
    %5869 = vmatpush1.msra.mxu0 %v5862
    %5870 = vmatprep.subr.mxu0 0.0
    %5871 = vmatpush1.msra.mxu0 0.0
    %5872 = vmatprep.subr.mxu0 0.0
    %5873 = vmatpush1.msra.mxu0 0.0
    %5874 = vmatprep.subr.mxu0 0.0
    %5875 = vmatpush1.msra.mxu0 0.0
    %5876 = vmatprep.subr.mxu0 0.0
    %5877 = vmatpush1.msra.mxu0 0.0
    %5878 = vmatprep.subr.mxu0 0.0
    %5879 = vmatpush1.msra.mxu0 0.0
    %5880 = vmatprep.subr.mxu0 0.0
    %5881 = vmatpush1.msra.mxu0 0.0
    %5882 = vmatprep.subr.mxu0 0.0
    %5883 = vmatpush1.msra.mxu0 0.0
    %5884 = vmatprep.subr.mxu0 0.0
    %5885 = vmatpush1.msra.mxu0 0.0
    %5886 = vmatprep.subr.mxu0 0.0
    %5887 = vmatpush1.msra.mxu0 0.0
    %5888 = vmatprep.subr.mxu0 0.0
    %5889 = vmatpush1.msra.mxu0 0.0
    %5890 = vmatprep.subr.mxu0 0.0
    %5891 = vmatpush1.msra.mxu0 0.0
    %5892 = vmatprep.subr.mxu0 0.0
    %5893 = vmatpush1.msra.mxu0 0.0
    %5894 = vmatprep.subr.mxu0 0.0
    %5895 = vmatpush1.msra.mxu0 0.0
    %5896 = vmatprep.subr.mxu0 0.0
    %5897 = vmatpush1.msra.mxu0 0.0
    %5898 = vmatprep.subr.mxu0 0.0
    %5899 = vmatpush1.msra.mxu0 0.0
    %5900 = vmatprep.subr.mxu0 0.0
    %5901 = vmatpush1.msra.mxu0 0.0
    %5902 = vmatprep.subr.mxu0 0.0
    %5903 = vmatpush1.msra.mxu0 0.0
    %5904 = vmatprep.subr.mxu0 0.0
    %5905 = vmatpush1.msra.mxu0 0.0
    %5906 = vmatprep.subr.mxu0 0.0
    %5907 = vmatpush1.msra.mxu0 0.0
    %5908 = vmatprep.subr.mxu0 0.0
    %5909 = vmatpush1.msra.mxu0 0.0
    %5910 = vmatprep.subr.mxu0 0.0
    %5911 = vmatpush1.msra.mxu0 0.0
    %5912 = vmatprep.subr.mxu0 0.0
    %5913 = vmatpush1.msra.mxu0 0.0
    %5914 = vmatprep.subr.mxu0 0.0
    %5915 = vmatpush1.msra.mxu0 0.0
    %5916 = vmatprep.subr.mxu0 0.0
    %5917 = vmatpush1.msra.mxu0 0.0
    %5918 = vmatprep.subr.mxu0 0.0
    %5919 = vmatpush1.msra.mxu0 0.0
    %5920 = vmatprep.subr.mxu0 0.0
    %5921 = vmatpush1.msra.mxu0 0.0
    %5922 = vmatprep.subr.mxu0 0.0
    %5923 = vmatpush1.msra.mxu0 0.0
    %5924 = vmatprep.subr.mxu0 0.0
    %5925 = vmatpush1.msra.mxu0 0.0
    %5926 = vmatprep.subr.mxu0 0.0
    %5927 = vmatpush1.msra.mxu0 0.0
    %5928 = vmatprep.mubr.f32.mxu0 0.0
    %5929 = vmatmul.mubr.f32.gmra.mrb[0].mxu0 %v5859
    %v5930 = vpop.f32.mrb[0].mxu0
    %v5931 = vadd.f32 0.0, %v5930
    %v5932 = vpop.f32.mrb[0].mxu0
    %5933 = vdwg.mxu0
    %v5938 = vrot.slane %v5540, 6
    %v5939 = vrot.slane %v5545, 6
    %v5940 = vsel %vm176, %v5938, %v5939
    %v5941 = vrot.slane %v5550, 6
    %v5942 = vsel %vm176, %v5939, %v5941
    %v5943 = vrot.slane %v5555, 6
    %v5944 = vsel %vm176, %v5941, %v5943
    %v5949 = vsel %vm176, 0.0, %v5938
    %v5950 = vsel %vm5587, %v5944, 0.0
    %v5953 = vrot.slane %v5949, 1
    %v5954 = vrot.slane %v5940, 1
    %v5955 = vsel %vm277, %v5953, %v5954
    %v5956 = vrot.slane %v5942, 1
    %v5957 = vsel %vm277, %v5954, %v5956
    %v5958 = vrot.slane %v5950, 1
    %v5959 = vsel %vm277, %v5956, %v5958
    %5960 = vrot.lane.b32.xlu0 %v5955, 16
    %v5961 = vpop.permute.xlu0 %5960
    %5962 = vrot.lane.b32.xlu0 %v5957, 16
    %v5963 = vpop.permute.xlu0 %5962
    %5964 = vrot.lane.b32.xlu0 %v5959, 16
    %v5965 = vpop.permute.xlu0 %5964
    %5966 = vrot.lane.b32.xlu0 %v5958, 16
    %v5967 = vpop.permute.xlu0 %5966
    %v5972 = vrot.slane %v5949, 2
    %v5973 = vrot.slane %v5940, 2
    %v5974 = vsel %vm437, %v5972, %v5973
    %v5975 = vrot.slane %v5942, 2
    %v5976 = vsel %vm437, %v5973, %v5975
    %v5977 = vrot.slane %v5950, 2
    %v5978 = vsel %vm437, %v5975, %v5977
    %5979 = vrot.lane.b32.xlu0 %v5974, 32
    %v5980 = vpop.permute.xlu0 %5979
    %5981 = vrot.lane.b32.xlu0 %v5976, 32
    %v5982 = vpop.permute.xlu0 %5981
    %5983 = vrot.lane.b32.xlu0 %v5978, 32
    %v5984 = vpop.permute.xlu0 %5983
    %5985 = vrot.lane.b32.xlu0 %v5977, 32
    %v5986 = vpop.permute.xlu0 %5985
    %v5991 = vrot.slane %v5949, 3
    %v5992 = vrot.slane %v5940, 3
    %v5993 = vsel %vm597, %v5991, %v5992
    %v5994 = vrot.slane %v5942, 3
    %v5995 = vsel %vm597, %v5992, %v5994
    %v5996 = vrot.slane %v5950, 3
    %v5997 = vsel %vm597, %v5994, %v5996
    %5998 = vrot.lane.b32.xlu0 %v5993, 48
    %v5999 = vpop.permute.xlu0 %5998
    %6000 = vrot.lane.b32.xlu0 %v5995, 48
    %v6001 = vpop.permute.xlu0 %6000
    %6002 = vrot.lane.b32.xlu0 %v5997, 48
    %v6003 = vpop.permute.xlu0 %6002
    %6004 = vrot.lane.b32.xlu0 %v5996, 48
    %v6005 = vpop.permute.xlu0 %6004
    %v6010 = vrot.slane %v5949, 4
    %v6011 = vrot.slane %v5940, 4
    %v6012 = vsel %vm273, %v6010, %v6011
    %v6013 = vrot.slane %v5942, 4
    %v6014 = vsel %vm273, %v6011, %v6013
    %v6015 = vrot.slane %v5950, 4
    %v6016 = vsel %vm273, %v6013, %v6015
    %6017 = vrot.lane.b32.xlu0 %v6012, 64
    %v6018 = vpop.permute.xlu0 %6017
    %6019 = vrot.lane.b32.xlu0 %v6014, 64
    %v6020 = vpop.permute.xlu0 %6019
    %6021 = vrot.lane.b32.xlu0 %v6016, 64
    %v6022 = vpop.permute.xlu0 %6021
    %6023 = vrot.lane.b32.xlu0 %v6015, 64
    %v6024 = vpop.permute.xlu0 %6023
    %v6029 = vsel %vm3840, %v5949, %v5961
    %v6030 = vsel %vm3840, %v5940, %v5963
    %v6031 = vsel %vm3840, %v5942, %v5965
    %v6032 = vsel %vm3840, %v5950, %v5967
    %v6033 = vsel %vm3874, %v6029, %v5980
    %v6034 = vsel %vm3874, %v6030, %v5982
    %v6035 = vsel %vm3874, %v6031, %v5984
    %v6036 = vsel %vm3874, %v6032, %v5986
    %v6037 = vsel %vm5675, %v6033, %v5999
    %v6038 = vsel %vm5675, %v6034, %v6001
    %v6039 = vsel %vm5675, %v6035, %v6003
    %v6040 = vsel %vm5675, %v6036, %v6005
    %v6041 = vsel %vm5680, %v6037, %v6018
    %v6042 = vsel %vm5680, %v6038, %v6020
    %v6043 = vsel %vm5680, %v6039, %v6022
    %v6044 = vsel %vm5680, %v6040, %v6024
    %v6046 = vsel %vm5685, %v6041, 0
    %v6049 = vsel %vm5685, %v6042, 0
    %v6052 = vsel %vm5685, %v6043, 0
    %v6055 = vsel %vm5685, %v6044, 0
    %6057 = vmatprep.subr.mxu0 0.0
    %6058 = vmatpush1.msra.mxu0 %v5558
    %6059 = vmatprep.subr.mxu0 0.0
    %6060 = vmatpush1.msra.mxu0 %v5559
    %6061 = vmatprep.subr.mxu0 0.0
    %6062 = vmatpush1.msra.mxu0 %v5560
    %6063 = vmatprep.subr.mxu0 0.0
    %6064 = vmatpush1.msra.mxu0 %v5561
    %6065 = vmatprep.subr.mxu0 0.0
    %6066 = vmatpush1.msra.mxu0 %v5562
    %6067 = vmatprep.subr.mxu0 0.0
    %6068 = vmatpush1.msra.mxu0 %v5563
    %6069 = vmatprep.subr.mxu0 0.0
    %6070 = vmatpush1.msra.mxu0 %v5564
    %6071 = vmatprep.subr.mxu0 0.0
    %6072 = vmatpush1.msra.mxu0 %v5565
    %6073 = vmatprep.subr.mxu0 0.0
    %6074 = vmatpush1.msra.mxu0 %v5566
    %6075 = vmatprep.subr.mxu0 0.0
    %6076 = vmatpush1.msra.mxu0 %v5567
    %6077 = vmatprep.subr.mxu0 0.0
    %6078 = vmatpush1.msra.mxu0 0.0
    %6079 = vmatprep.subr.mxu0 0.0
    %6080 = vmatpush1.msra.mxu0 0.0
    %6081 = vmatprep.subr.mxu0 0.0
    %6082 = vmatpush1.msra.mxu0 0.0
    %6083 = vmatprep.subr.mxu0 0.0
    %6084 = vmatpush1.msra.mxu0 0.0
    %6085 = vmatprep.subr.mxu0 0.0
    %6086 = vmatpush1.msra.mxu0 0.0
    %6087 = vmatprep.subr.mxu0 0.0
    %6088 = vmatpush1.msra.mxu0 0.0
    %6089 = vmatprep.subr.mxu0 0.0
    %6090 = vmatpush1.msra.mxu0 0.0
    %6091 = vmatprep.subr.mxu0 0.0
    %6092 = vmatpush1.msra.mxu0 0.0
    %6093 = vmatprep.subr.mxu0 0.0
    %6094 = vmatpush1.msra.mxu0 0.0
    %6095 = vmatprep.subr.mxu0 0.0
    %6096 = vmatpush1.msra.mxu0 0.0
    %6097 = vmatprep.subr.mxu0 0.0
    %6098 = vmatpush1.msra.mxu0 0.0
    %6099 = vmatprep.subr.mxu0 0.0
    %6100 = vmatpush1.msra.mxu0 0.0
    %6101 = vmatprep.subr.mxu0 0.0
    %6102 = vmatpush1.msra.mxu0 0.0
    %6103 = vmatprep.subr.mxu0 0.0
    %6104 = vmatpush1.msra.mxu0 0.0
    %6105 = vmatprep.subr.mxu0 0.0
    %6106 = vmatpush1.msra.mxu0 0.0
    %6107 = vmatprep.subr.mxu0 0.0
    %6108 = vmatpush1.msra.mxu0 0.0
    %6109 = vmatprep.subr.mxu0 0.0
    %6110 = vmatpush1.msra.mxu0 0.0
    %6111 = vmatprep.subr.mxu0 0.0
    %6112 = vmatpush1.msra.mxu0 0.0
    %6113 = vmatprep.subr.mxu0 0.0
    %6114 = vmatpush1.msra.mxu0 0.0
    %6115 = vmatprep.subr.mxu0 0.0
    %6116 = vmatpush1.msra.mxu0 0.0
    %6117 = vmatprep.subr.mxu0 0.0
    %6118 = vmatpush1.msra.mxu0 0.0
    %6119 = vmatprep.subr.mxu0 0.0
    %6120 = vmatpush1.msra.mxu0 0.0
    %6121 = vmatprep.mubr.f32.mxu0 0.0
    %6122 = vmatmul.mubr.f32.gmra.mrb[0].mxu0 %v6046
    %v6123 = vpop.f32.mrb[0].mxu0
    %v6124 = vadd.f32 0.0, %v6123
    %v6125 = vpop.f32.mrb[0].mxu0
    %6126 = vmatprep.mubr.f32.mxu0 0.0
    %6127 = vmatmul.mubr.f32.gmra.mrb[0].mxu0 %v6049
    %v6128 = vpop.f32.mrb[0].mxu0
    %v6129 = vadd.f32 0.0, %v6128
    %v6130 = vpop.f32.mrb[0].mxu0
    %6131 = vmatprep.mubr.f32.mxu0 0.0
    %6132 = vmatmul.mubr.f32.gmra.mrb[0].mxu0 %v6052
    %v6133 = vpop.f32.mrb[0].mxu0
    %v6134 = vadd.f32 0.0, %v6133
    %v6135 = vpop.f32.mrb[0].mxu0
    %6136 = vmatprep.mubr.f32.mxu0 0.0
    %6137 = vmatmul.mubr.f32.gmra.mrb[0].mxu0 %v6055
    %v6138 = vpop.f32.mrb[0].mxu0
    %v6139 = vadd.f32 0.0, %v6138
    %v6140 = vpop.f32.mrb[0].mxu0
    %6141 = vdwg.mxu0
    %v6142 = vmul.f32 %v6124, %v5787
    %v6143 = vmul.f32 %v6129, %v5787
    %v6144 = vmul.f32 %v6134, %v5787
    %v6145 = vmul.f32 %v6139, %v5787
    %v6146 = vadd.f32 %v6142, %v5797
    %v6147 = vadd.f32 %v6143, %v5797
    %v6148 = vadd.f32 %v6144, %v5797
    %v6149 = vadd.f32 %v6145, %v5797
    %v6150 = vmax.f32 %v6146, 0.0
    %v6151 = vmax.f32 %v6147, 0.0
    %v6152 = vmax.f32 %v6148, 0.0
    %v6153 = vmax.f32 %v6149, 0.0
    %v6157 = vrot.slane %v6150, 1
    %v6158 = vrot.slane %v6151, 1
    %v6159 = vsel %vm277, %v6157, %v6158
    %v6160 = vrot.slane %v6152, 1
    %v6161 = vsel %vm277, %v6158, %v6160
    %v6165 = vmax.f32 %v6150, %v6159
    %v6166 = vmax.f32 %v6151, %v6161
    %v6167 = vmax.f32 %v6152, %v6160
    %v6168 = vrot.slane %v6150, 2
    %v6169 = vrot.slane %v6151, 2
    %v6170 = vsel %vm437, %v6168, %v6169
    %v6171 = vrot.slane %v6152, 2
    %v6172 = vsel %vm437, %v6169, %v6171
    %v6176 = vmax.f32 %v6165, %v6170
    %v6177 = vmax.f32 %v6166, %v6172
    %v6178 = vmax.f32 %v6167, %v6171
    %v6179 = vrot.slane %v6150, 3
    %v6180 = vrot.slane %v6151, 3
    %v6181 = vsel %vm597, %v6179, %v6180
    %v6182 = vrot.slane %v6152, 3
    %v6183 = vsel %vm597, %v6180, %v6182
    %v6187 = vmax.f32 %v6176, %v6181
    %v6188 = vmax.f32 %v6177, %v6183
    %v6189 = vmax.f32 %v6178, %v6182
    %v6191 = vrot.slane %v6150, 4
    %v6192 = vrot.slane %v6151, 4
    %v6193 = vsel %vm273, %v6191, %v6192
    %v6194 = vrot.slane %v6152, 4
    %v6195 = vsel %vm273, %v6192, %v6194
    %v6196 = vrot.slane %v6153, 4
    %v6197 = vsel %vm273, %v6194, %v6196
    %v6201 = vmax.f32 %v6187, %v6193
    %v6202 = vmax.f32 %v6188, %v6195
    %v6203 = vmax.f32 %v6189, %v6197
    %v6205 = vsel %vm597, %v6203, 0
    %6207 = vmatprep.subr.mxu0 0.0
    %6208 = vmatpush1.msra.mxu0 %v6201
    %6209 = vmatprep.subr.mxu0 0.0
    %6210 = vmatpush1.msra.mxu0 %v6202
    %6211 = vmatprep.subr.mxu0 0.0
    %6212 = vmatpush1.msra.mxu0 %v6205
    %6213 = vmatprep.subr.mxu0 0.0
    %6214 = vmatpush1.msra.mxu0 0.0
    %6215 = vmatprep.subr.mxu0 0.0
    %6216 = vmatpush1.msra.mxu0 0.0
    %6217 = vmatprep.subr.mxu0 0.0
    %6218 = vmatpush1.msra.mxu0 0.0
    %6219 = vmatprep.subr.mxu0 0.0
    %6220 = vmatpush1.msra.mxu0 0.0
    %6221 = vmatprep.subr.mxu0 0.0
    %6222 = vmatpush1.msra.mxu0 0.0
    %6223 = vmatprep.subr.mxu0 0.0
    %6224 = vmatpush1.msra.mxu0 0.0
    %6225 = vmatprep.subr.mxu0 0.0
    %6226 = vmatpush1.msra.mxu0 0.0
    %6227 = vmatprep.subr.mxu0 0.0
    %6228 = vmatpush1.msra.mxu0 0.0
    %6229 = vmatprep.subr.mxu0 0.0
    %6230 = vmatpush1.msra.mxu0 0.0
    %6231 = vmatprep.subr.mxu0 0.0
    %6232 = vmatpush1.msra.mxu0 0.0
    %6233 = vmatprep.subr.mxu0 0.0
    %6234 = vmatpush1.msra.mxu0 0.0
    %6235 = vmatprep.subr.mxu0 0.0
    %6236 = vmatpush1.msra.mxu0 0.0
    %6237 = vmatprep.subr.mxu0 0.0
    %6238 = vmatpush1.msra.mxu0 0.0
    %6239 = vmatprep.subr.mxu0 0.0
    %6240 = vmatpush1.msra.mxu0 0.0
    %6241 = vmatprep.subr.mxu0 0.0
    %6242 = vmatpush1.msra.mxu0 0.0
    %6243 = vmatprep.subr.mxu0 0.0
    %6244 = vmatpush1.msra.mxu0 0.0
    %6245 = vmatprep.subr.mxu0 0.0
    %6246 = vmatpush1.msra.mxu0 0.0
    %6247 = vmatprep.subr.mxu0 0.0
    %6248 = vmatpush1.msra.mxu0 0.0
    %6249 = vmatprep.subr.mxu0 0.0
    %6250 = vmatpush1.msra.mxu0 0.0
    %6251 = vmatprep.subr.mxu0 0.0
    %6252 = vmatpush1.msra.mxu0 0.0
    %6253 = vmatprep.subr.mxu0 0.0
    %6254 = vmatpush1.msra.mxu0 0.0
    %6255 = vmatprep.subr.mxu0 0.0
    %6256 = vmatpush1.msra.mxu0 0.0
    %6257 = vmatprep.subr.mxu0 0.0
    %6258 = vmatpush1.msra.mxu0 0.0
    %6259 = vmatprep.subr.mxu0 0.0
    %6260 = vmatpush1.msra.mxu0 0.0
    %6261 = vmatprep.subr.mxu0 0.0
    %6262 = vmatpush1.msra.mxu0 0.0
    %6263 = vmatprep.subr.mxu0 0.0
    %6264 = vmatpush1.msra.mxu0 0.0
    %6265 = vmatprep.subr.mxu0 0.0
    %6266 = vmatpush1.msra.mxu0 0.0
    %6267 = vmatprep.subr.mxu0 0.0
    %6268 = vmatpush1.msra.mxu0 0.0
    %6269 = vmatprep.subr.mxu0 0.0
    %6270 = vmatpush1.msra.mxu0 0.0
    %6271 = vmatprep.mubr.f32.mxu0 0.0
    %6272 = vmatmul.mubr.f32.gmra.mrb[0].mxu0 %v5859
    %v6273 = vpop.f32.mrb[0].mxu0
    %v6274 = vadd.f32 0.0, %v6273
    %v6275 = vpop.f32.mrb[0].mxu0
    %6276 = vdwg.mxu0
    %v6277 = vld [vmem:[%s13] sm:$0xff]
    %v6278 = vld [vmem:[%s13 + $0x8] sm:$0xff]
    %v6279 = vld [vmem:[%s13 + $0x10] sm:$0xff]
    %v6280 = vld [vmem:[%s13 + $0x18] sm:$0xff]
    %v6281 = vld [vmem:[%s13 + $0x20] sm:$0xff]
    %v6282 = vld [vmem:[%s13 + $0x28] sm:$0xff]
    %v6283 = vld [vmem:[%s13 + $0x30] sm:$0xff]
    %v6284 = vld [vmem:[%s13 + $0x38] sm:$0xff]
    %v6285 = vld [vmem:[%s13 + $0x40] sm:$0xff]
    %v6286 = vld [vmem:[%s13 + $0x48] sm:$0xff]
    %v6287 = vld [vmem:[%s13 + $0x50] sm:$0xff]
    %v6288 = vld [vmem:[%s13 + $0x58] sm:$0xff]
    %v6289 = vld [vmem:[%s13 + $0x60] sm:$0xff]
    %v6290 = vld [vmem:[%s13 + $0x68] sm:$0xff]
    %v6291 = vld [vmem:[%s13 + $0x70] sm:$0xff]
    %v6292 = vld [vmem:[%s13 + $0x78] sm:$0xff]
    %v6293 = vld [vmem:[%s13 + $0x80] sm:$0xff]
    %v6294 = vld [vmem:[%s13 + $0x88] sm:$0xff]
    %v6295 = vld [vmem:[%s13 + $0x90] sm:$0xff]
    %v6296 = vld [vmem:[%s13 + $0x98] sm:$0xff]
    %v6297 = vld [vmem:[%s14] sm:$0x1]
    %v6298 = vld [vmem:[%s15] sm:$0x1]
    %v6300 = vrot.slane %v5931, 6
    %v6302 = vsel %vm176, 0.0, %v6300
    %v6303 = vsel %vm277, %v6302, 0.0
    %v6305 = vrot.slane %v6303, 1
    %6306 = vrot.lane.b32.xlu0 %v6305, 32
    %v6307 = vpop.permute.xlu0 %6306
    %v6309 = vrot.slane %v6303, 2
    %6310 = vrot.lane.b32.xlu0 %v6309, 64
    %v6311 = vpop.permute.xlu0 %6310
    %v6313 = vrot.slane %v6303, 3
    %6314 = vrot.lane.b32.xlu0 %v6313, 96
    %v6315 = vpop.permute.xlu0 %6314
    %v6317 = vrot.slane %v6303, 4
    %v6318 = vsel %vm273, %v6317, %v3773
    %v6319 = vsel %vm3874, %v6303, %v6307
    %v6320 = vsel %vm5680, %v6319, %v6311
    %vm6321 = vcmask 785408
    %v6322 = vsel %vm6321, %v6320, %v6315
    %v6323 = vsel %vm3874, %v6318, 0
    %6325 = vmatprep.subr.mxu0 0.0
    %6326 = vmatpush1.msra.mxu0 %v6277
    %6327 = vmatprep.subr.mxu0 0.0
    %6328 = vmatpush1.msra.mxu0 %v6278
    %6329 = vmatprep.subr.mxu0 0.0
    %6330 = vmatpush1.msra.mxu0 %v6279
    %6331 = vmatprep.subr.mxu0 0.0
    %6332 = vmatpush1.msra.mxu0 %v6280
    %6333 = vmatprep.subr.mxu0 0.0
    %6334 = vmatpush1.msra.mxu0 %v6281
    %6335 = vmatprep.subr.mxu0 0.0
    %6336 = vmatpush1.msra.mxu0 %v6282
    %6337 = vmatprep.subr.mxu0 0.0
    %6338 = vmatpush1.msra.mxu0 %v6283
    %6339 = vmatprep.subr.mxu0 0.0
    %6340 = vmatpush1.msra.mxu0 %v6284
    %6341 = vmatprep.subr.mxu0 0.0
    %6342 = vmatpush1.msra.mxu0 %v6285
    %6343 = vmatprep.subr.mxu0 0.0
    %6344 = vmatpush1.msra.mxu0 %v6286
    %6345 = vmatprep.subr.mxu0 0.0
    %6346 = vmatpush1.msra.mxu0 %v6287
    %6347 = vmatprep.subr.mxu0 0.0
    %6348 = vmatpush1.msra.mxu0 %v6288
    %6349 = vmatprep.subr.mxu0 0.0
    %6350 = vmatpush1.msra.mxu0 %v6289
    %6351 = vmatprep.subr.mxu0 0.0
    %6352 = vmatpush1.msra.mxu0 %v6290
    %6353 = vmatprep.subr.mxu0 0.0
    %6354 = vmatpush1.msra.mxu0 %v6291
    %6355 = vmatprep.subr.mxu0 0.0
    %6356 = vmatpush1.msra.mxu0 %v6292
    %6357 = vmatprep.subr.mxu0 0.0
    %6358 = vmatpush1.msra.mxu0 %v6293
    %6359 = vmatprep.subr.mxu0 0.0
    %6360 = vmatpush1.msra.mxu0 %v6294
    %6361 = vmatprep.subr.mxu0 0.0
    %6362 = vmatpush1.msra.mxu0 %v6295
    %6363 = vmatprep.subr.mxu0 0.0
    %6364 = vmatpush1.msra.mxu0 %v6296
    %6365 = vmatprep.subr.mxu0 0.0
    %6366 = vmatpush1.msra.mxu0 0.0
    %6367 = vmatprep.subr.mxu0 0.0
    %6368 = vmatpush1.msra.mxu0 0.0
    %6369 = vmatprep.subr.mxu0 0.0
    %6370 = vmatpush1.msra.mxu0 0.0
    %6371 = vmatprep.subr.mxu0 0.0
    %6372 = vmatpush1.msra.mxu0 0.0
    %6373 = vmatprep.subr.mxu0 0.0
    %6374 = vmatpush1.msra.mxu0 0.0
    %6375 = vmatprep.subr.mxu0 0.0
    %6376 = vmatpush1.msra.mxu0 0.0
    %6377 = vmatprep.subr.mxu0 0.0
    %6378 = vmatpush1.msra.mxu0 0.0
    %6379 = vmatprep.subr.mxu0 0.0
    %6380 = vmatpush1.msra.mxu0 0.0
    %6381 = vmatprep.subr.mxu0 0.0
    %6382 = vmatpush1.msra.mxu0 0.0
    %6383 = vmatprep.subr.mxu0 0.0
    %6384 = vmatpush1.msra.mxu0 0.0
    %6385 = vmatprep.subr.mxu0 0.0
    %6386 = vmatpush1.msra.mxu0 0.0
    %6387 = vmatprep.subr.mxu0 0.0
    %6388 = vmatpush1.msra.mxu0 0.0
    %6389 = vmatprep.mubr.f32.mxu0 %v6323
    %6390 = vmatmul.mubr.f32.gmra.mrb[0].mxu0 %v6322
    %v6391 = vpop.f32.mrb[0].mxu0
    %v6392 = vadd.f32 0.0, %v6391
    %v6393 = vpop.f32.mrb[0].mxu0
    %6394 = vdwg.mxu0
    %v6396 = vlaneseq
    %v6397 = vshrl.u32 %v6396, 7
    %v6398 = vsub.s32 0, %v6397
    %v6399 = vrot.slane %v6297, %v6398
    %v6401 = vmul.f32 %v6392, %v6399
    %v6403 = vlaneseq
    %v6404 = vshrl.u32 %v6403, 7
    %v6405 = vsub.s32 0, %v6404
    %v6406 = vrot.slane %v6298, %v6405
    %v6408 = vadd.f32 %v6401, %v6406
    %v6409 = vmax.f32 %v6408, 0.0
    %v6411 = vrot.slane %v6409, 1
    %v6413 = vmax.f32 %v6409, %v6411
    %v6414 = vrot.slane %v6409, 2
    %v6416 = vmax.f32 %v6413, %v6414
    %v6417 = vrot.slane %v6409, 3
    %v6419 = vmax.f32 %v6416, %v6417
    %v6420 = vrot.slane %v6409, 4
    %v6422 = vmax.f32 %v6419, %v6420
    %v6424 = vrot.slane %v6274, 6
    %v6426 = vsel %vm176, 0.0, %v6424
    %v6427 = vsel %vm277, %v6426, 0.0
    %v6429 = vrot.slane %v6427, 1
    %6430 = vrot.lane.b32.xlu0 %v6429, 32
    %v6431 = vpop.permute.xlu0 %6430
    %v6433 = vrot.slane %v6427, 2
    %6434 = vrot.lane.b32.xlu0 %v6433, 64
    %v6435 = vpop.permute.xlu0 %6434
    %v6437 = vrot.slane %v6427, 3
    %6438 = vrot.lane.b32.xlu0 %v6437, 96
    %v6439 = vpop.permute.xlu0 %6438
    %v6441 = vrot.slane %v6427, 4
    %v6442 = vsel %vm273, %v6441, %v3773
    %v6443 = vsel %vm3874, %v6427, %v6431
    %v6444 = vsel %vm5680, %v6443, %v6435
    %v6445 = vsel %vm6321, %v6444, %v6439
    %v6446 = vsel %vm3874, %v6442, 0
    %6448 = vmatprep.subr.mxu0 0.0
    %6449 = vmatpush1.msra.mxu0 %v6277
    %6450 = vmatprep.subr.mxu0 0.0
    %6451 = vmatpush1.msra.mxu0 %v6278
    %6452 = vmatprep.subr.mxu0 0.0
    %6453 = vmatpush1.msra.mxu0 %v6279
    %6454 = vmatprep.subr.mxu0 0.0
    %6455 = vmatpush1.msra.mxu0 %v6280
    %6456 = vmatprep.subr.mxu0 0.0
    %6457 = vmatpush1.msra.mxu0 %v6281
    %6458 = vmatprep.subr.mxu0 0.0
    %6459 = vmatpush1.msra.mxu0 %v6282
    %6460 = vmatprep.subr.mxu0 0.0
    %6461 = vmatpush1.msra.mxu0 %v6283
    %6462 = vmatprep.subr.mxu0 0.0
    %6463 = vmatpush1.msra.mxu0 %v6284
    %6464 = vmatprep.subr.mxu0 0.0
    %6465 = vmatpush1.msra.mxu0 %v6285
    %6466 = vmatprep.subr.mxu0 0.0
    %6467 = vmatpush1.msra.mxu0 %v6286
    %6468 = vmatprep.subr.mxu0 0.0
    %6469 = vmatpush1.msra.mxu0 %v6287
    %6470 = vmatprep.subr.mxu0 0.0
    %6471 = vmatpush1.msra.mxu0 %v6288
    %6472 = vmatprep.subr.mxu0 0.0
    %6473 = vmatpush1.msra.mxu0 %v6289
    %6474 = vmatprep.subr.mxu0 0.0
    %6475 = vmatpush1.msra.mxu0 %v6290
    %6476 = vmatprep.subr.mxu0 0.0
    %6477 = vmatpush1.msra.mxu0 %v6291
    %6478 = vmatprep.subr.mxu0 0.0
    %6479 = vmatpush1.msra.mxu0 %v6292
    %6480 = vmatprep.subr.mxu0 0.0
    %6481 = vmatpush1.msra.mxu0 %v6293
    %6482 = vmatprep.subr.mxu0 0.0
    %6483 = vmatpush1.msra.mxu0 %v6294
    %6484 = vmatprep.subr.mxu0 0.0
    %6485 = vmatpush1.msra.mxu0 %v6295
    %6486 = vmatprep.subr.mxu0 0.0
    %6487 = vmatpush1.msra.mxu0 %v6296
    %6488 = vmatprep.subr.mxu0 0.0
    %6489 = vmatpush1.msra.mxu0 0.0
    %6490 = vmatprep.subr.mxu0 0.0
    %6491 = vmatpush1.msra.mxu0 0.0
    %6492 = vmatprep.subr.mxu0 0.0
    %6493 = vmatpush1.msra.mxu0 0.0
    %6494 = vmatprep.subr.mxu0 0.0
    %6495 = vmatpush1.msra.mxu0 0.0
    %6496 = vmatprep.subr.mxu0 0.0
    %6497 = vmatpush1.msra.mxu0 0.0
    %6498 = vmatprep.subr.mxu0 0.0
    %6499 = vmatpush1.msra.mxu0 0.0
    %6500 = vmatprep.subr.mxu0 0.0
    %6501 = vmatpush1.msra.mxu0 0.0
    %6502 = vmatprep.subr.mxu0 0.0
    %6503 = vmatpush1.msra.mxu0 0.0
    %6504 = vmatprep.subr.mxu0 0.0
    %6505 = vmatpush1.msra.mxu0 0.0
    %6506 = vmatprep.subr.mxu0 0.0
    %6507 = vmatpush1.msra.mxu0 0.0
    %6508 = vmatprep.subr.mxu0 0.0
    %6509 = vmatpush1.msra.mxu0 0.0
    %6510 = vmatprep.subr.mxu0 0.0
    %6511 = vmatpush1.msra.mxu0 0.0
    %6512 = vmatprep.mubr.f32.mxu0 %v6446
    %6513 = vmatmul.mubr.f32.gmra.mrb[0].mxu0 %v6445
    %v6514 = vpop.f32.mrb[0].mxu0
    %v6515 = vadd.f32 0.0, %v6514
    %v6516 = vpop.f32.mrb[0].mxu0
    %6517 = vdwg.mxu0
    %v6518 = vmul.f32 %v6515, %v6399
    %v6519 = vadd.f32 %v6518, %v6406
    %v6520 = vmax.f32 %v6519, 0.0
    %v6522 = vrot.slane %v6520, 1
    %v6524 = vmax.f32 %v6520, %v6522
    %v6525 = vrot.slane %v6520, 2
    %v6527 = vmax.f32 %v6524, %v6525
    %v6528 = vrot.slane %v6520, 3
    %v6530 = vmax.f32 %v6527, %v6528
    %v6531 = vrot.slane %v6520, 4
    %v6533 = vmax.f32 %v6530, %v6531
    %v6535 = vrot.slane %v6533, 7
    %v6537 = vsel %vm1689, %v6422, %v6535
    %v6538 = vld [vmem:[%s17] sm:$0xff]
    %v6539 = vld [vmem:[%s17 + $0x8] sm:$0xff]
    %v6540 = vld [vmem:[%s17 + $0x10] sm:$0xff]
    %v6541 = vld [vmem:[%s17 + $0x18] sm:$0xff]
    %v6542 = vld [vmem:[%s17 + $0x20] sm:$0xff]
    %v6543 = vld [vmem:[%s17 + $0x28] sm:$0xff]
    %v6544 = vld [vmem:[%s17 + $0x30] sm:$0xff]
    %v6545 = vld [vmem:[%s17 + $0x38] sm:$0xff]
    %v6546 = vld [vmem:[%s18] sm:$0x3]
    %v6548 = vlaneseq
    %v6549 = vshrl.u32 %v6548, 7
    %v6550 = vsub.s32 0, %v6549
    %v6551 = vrot.slane %v6546, %v6550
    %v6552 = vlaneseq
    %v6553 = vshrl.u32 %v6552, 7
    %v6554 = vsub.s32 1, %v6553
    %v6555 = vrot.slane %v6546, %v6554
    %v6559 = vsel %vm3874, %v6537, 0
    %6561 = vmatprep.subr.mxu0 %v6539
    %6562 = vmatpush1.msra.mxu0 %v6538
    %6563 = vmatprep.subr.mxu0 %v6541
    %6564 = vmatpush1.msra.mxu0 %v6540
    %6565 = vmatprep.subr.mxu0 %v6543
    %6566 = vmatpush1.msra.mxu0 %v6542
    %6567 = vmatprep.subr.mxu0 %v6545
    %6568 = vmatpush1.msra.mxu0 %v6544
    %6569 = vmatprep.subr.mxu0 0.0
    %6570 = vmatpush1.msra.mxu0 0.0
    %6571 = vmatprep.subr.mxu0 0.0
    %6572 = vmatpush1.msra.mxu0 0.0
    %6573 = vmatprep.subr.mxu0 0.0
    %6574 = vmatpush1.msra.mxu0 0.0
    %6575 = vmatprep.subr.mxu0 0.0
    %6576 = vmatpush1.msra.mxu0 0.0
    %6577 = vmatprep.subr.mxu0 0.0
    %6578 = vmatpush1.msra.mxu0 0.0
    %6579 = vmatprep.subr.mxu0 0.0
    %6580 = vmatpush1.msra.mxu0 0.0
    %6581 = vmatprep.subr.mxu0 0.0
    %6582 = vmatpush1.msra.mxu0 0.0
    %6583 = vmatprep.subr.mxu0 0.0
    %6584 = vmatpush1.msra.mxu0 0.0
    %6585 = vmatprep.subr.mxu0 0.0
    %6586 = vmatpush1.msra.mxu0 0.0
    %6587 = vmatprep.subr.mxu0 0.0
    %6588 = vmatpush1.msra.mxu0 0.0
    %6589 = vmatprep.subr.mxu0 0.0
    %6590 = vmatpush1.msra.mxu0 0.0
    %6591 = vmatprep.subr.mxu0 0.0
    %6592 = vmatpush1.msra.mxu0 0.0
    %6593 = vmatprep.subr.mxu0 0.0
    %6594 = vmatpush1.msra.mxu0 0.0
    %6595 = vmatprep.subr.mxu0 0.0
    %6596 = vmatpush1.msra.mxu0 0.0
    %6597 = vmatprep.subr.mxu0 0.0
    %6598 = vmatpush1.msra.mxu0 0.0
    %6599 = vmatprep.subr.mxu0 0.0
    %6600 = vmatpush1.msra.mxu0 0.0
    %6601 = vmatprep.subr.mxu0 0.0
    %6602 = vmatpush1.msra.mxu0 0.0
    %6603 = vmatprep.subr.mxu0 0.0
    %6604 = vmatpush1.msra.mxu0 0.0
    %6605 = vmatprep.subr.mxu0 0.0
    %6606 = vmatpush1.msra.mxu0 0.0
    %6607 = vmatprep.subr.mxu0 0.0
    %6608 = vmatpush1.msra.mxu0 0.0
    %6609 = vmatprep.subr.mxu0 0.0
    %6610 = vmatpush1.msra.mxu0 0.0
    %6611 = vmatprep.subr.mxu0 0.0
    %6612 = vmatpush1.msra.mxu0 0.0
    %6613 = vmatprep.subr.mxu0 0.0
    %6614 = vmatpush1.msra.mxu0 0.0
    %6615 = vmatprep.subr.mxu0 0.0
    %6616 = vmatpush1.msra.mxu0 0.0
    %6617 = vmatprep.subr.mxu0 0.0
    %6618 = vmatpush1.msra.mxu0 0.0
    %6619 = vmatprep.subr.mxu0 0.0
    %6620 = vmatpush1.msra.mxu0 0.0
    %6621 = vmatprep.subr.mxu0 0.0
    %6622 = vmatpush1.msra.mxu0 0.0
    %6623 = vmatprep.subr.mxu0 0.0
    %6624 = vmatpush1.msra.mxu0 0.0
    %6625 = vmatprep.mubr.f32.mxu0 0.0
    %6626 = vmatmul.mubr.f32.gmra.mrb[0].mxu0 %v6559
    %v6627 = vpop.f32.mrb[0].mxu0
    %v6628 = vadd.f32 %v6551, %v6627
    %v6629 = vpop.f32.mrb[0].mxu0
    %v6630 = vadd.f32 %v6555, %v6629
    %6631 = vdwg.mxu0
    %v6632 = vmax.f32 %v6628, 0.0
    %v6633 = vmax.f32 %v6630, 0.0
    %v6634 = vld [vmem:[%s19] sm:$0xff]
    %v6635 = vld [vmem:[%s19 + $0x8] sm:$0xff]
    %v6636 = vld [vmem:[%s19 + $0x10] sm:$0xff]
    %v6637 = vld [vmem:[%s19 + $0x18] sm:$0xff]
    %v6638 = vld [vmem:[%s19 + $0x20] sm:$0xff]
    %v6639 = vld [vmem:[%s19 + $0x28] sm:$0xff]
    %v6640 = vld [vmem:[%s19 + $0x30] sm:$0xff]
    %v6641 = vld [vmem:[%s19 + $0x38] sm:$0xff]
    %v6642 = vld [vmem:[%s19 + $0x40] sm:$0xff]
    %v6643 = vld [vmem:[%s19 + $0x48] sm:$0xff]
    %v6644 = vld [vmem:[%s19 + $0x50] sm:$0xff]
    %v6645 = vld [vmem:[%s19 + $0x58] sm:$0xff]
    %v6646 = vld [vmem:[%s19 + $0x60] sm:$0xff]
    %v6647 = vld [vmem:[%s19 + $0x68] sm:$0xff]
    %v6648 = vld [vmem:[%s19 + $0x70] sm:$0xff]
    %v6649 = vld [vmem:[%s19 + $0x78] sm:$0xff]
    %v6650 = vld [vmem:[%s19 + $0x80] sm:$0xff]
    %v6651 = vld [vmem:[%s19 + $0x88] sm:$0xff]
    %v6652 = vld [vmem:[%s19 + $0x90] sm:$0xff]
    %v6653 = vld [vmem:[%s19 + $0x98] sm:$0xff]
    %v6654 = vld [vmem:[%s19 + $0xa0] sm:$0xff]
    %v6655 = vld [vmem:[%s19 + $0xa8] sm:$0xff]
    %v6656 = vld [vmem:[%s19 + $0xb0] sm:$0xff]
    %v6657 = vld [vmem:[%s19 + $0xb8] sm:$0xff]
    %v6658 = vld [vmem:[%s19 + $0xc0] sm:$0xff]
    %v6659 = vld [vmem:[%s19 + $0xc8] sm:$0xff]
    %v6660 = vld [vmem:[%s19 + $0xd0] sm:$0xff]
    %v6661 = vld [vmem:[%s19 + $0xd8] sm:$0xff]
    %v6662 = vld [vmem:[%s19 + $0xe0] sm:$0xff]
    %v6663 = vld [vmem:[%s19 + $0xe8] sm:$0xff]
    %v6664 = vld [vmem:[%s19 + $0xf0] sm:$0xff]
    %v6665 = vld [vmem:[%s19 + $0xf8] sm:$0xff]
    %v6666 = vld [vmem:[%s19 + $0x100] sm:$0xff]
    %v6667 = vld [vmem:[%s19 + $0x108] sm:$0xff]
    %v6668 = vld [vmem:[%s19 + $0x110] sm:$0xff]
    %v6669 = vld [vmem:[%s19 + $0x118] sm:$0xff]
    %v6670 = vld [vmem:[%s19 + $0x120] sm:$0xff]
    %v6671 = vld [vmem:[%s19 + $0x128] sm:$0xff]
    %v6672 = vld [vmem:[%s19 + $0x130] sm:$0xff]
    %v6673 = vld [vmem:[%s19 + $0x138] sm:$0xff]
    %v6674 = vld [vmem:[%s19 + $0x140] sm:$0xff]
    %v6675 = vld [vmem:[%s19 + $0x148] sm:$0xff]
    %v6676 = vld [vmem:[%s19 + $0x150] sm:$0xff]
    %v6677 = vld [vmem:[%s19 + $0x158] sm:$0xff]
    %v6678 = vld [vmem:[%s19 + $0x160] sm:$0xff]
    %v6679 = vld [vmem:[%s19 + $0x168] sm:$0xff]
    %v6680 = vld [vmem:[%s19 + $0x170] sm:$0xff]
    %v6681 = vld [vmem:[%s19 + $0x178] sm:$0xff]
    %v6682 = vld [vmem:[%s19 + $0x180] sm:$0xff]
    %v6683 = vld [vmem:[%s19 + $0x188] sm:$0xff]
    %v6684 = vld [vmem:[%s19 + $0x190] sm:$0xff]
    %v6685 = vld [vmem:[%s19 + $0x198] sm:$0xff]
    %v6686 = vld [vmem:[%s19 + $0x1a0] sm:$0xff]
    %v6687 = vld [vmem:[%s19 + $0x1a8] sm:$0xff]
    %v6688 = vld [vmem:[%s19 + $0x1b0] sm:$0xff]
    %v6689 = vld [vmem:[%s19 + $0x1b8] sm:$0xff]
    %v6690 = vld [vmem:[%s19 + $0x1c0] sm:$0xff]
    %v6691 = vld [vmem:[%s19 + $0x1c8] sm:$0xff]
    %v6692 = vld [vmem:[%s19 + $0x1d0] sm:$0xff]
    %v6693 = vld [vmem:[%s19 + $0x1d8] sm:$0xff]
    %v6694 = vld [vmem:[%s19 + $0x1e0] sm:$0xff]
    %v6695 = vld [vmem:[%s19 + $0x1e8] sm:$0xff]
    %v6696 = vld [vmem:[%s19 + $0x1f0] sm:$0xff]
    %v6697 = vld [vmem:[%s19 + $0x1f8] sm:$0xff]
    %v6698 = vld [vmem:[%s20] sm:$0x3]
    %v6700 = vlaneseq
    %v6701 = vshrl.u32 %v6700, 7
    %v6702 = vsub.s32 0, %v6701
    %v6703 = vrot.slane %v6698, %v6702
    %v6704 = vlaneseq
    %v6705 = vshrl.u32 %v6704, 7
    %v6706 = vsub.s32 1, %v6705
    %v6707 = vrot.slane %v6698, %v6706
    %6710 = vmatprep.subr.mxu0 %v6635
    %6711 = vmatpush1.msra.mxu0 %v6634
    %6712 = vmatprep.subr.mxu0 %v6637
    %6713 = vmatpush1.msra.mxu0 %v6636
    %6714 = vmatprep.subr.mxu0 %v6639
    %6715 = vmatpush1.msra.mxu0 %v6638
    %6716 = vmatprep.subr.mxu0 %v6641
    %6717 = vmatpush1.msra.mxu0 %v6640
    %6718 = vmatprep.subr.mxu0 %v6643
    %6719 = vmatpush1.msra.mxu0 %v6642
    %6720 = vmatprep.subr.mxu0 %v6645
    %6721 = vmatpush1.msra.mxu0 %v6644
    %6722 = vmatprep.subr.mxu0 %v6647
    %6723 = vmatpush1.msra.mxu0 %v6646
    %6724 = vmatprep.subr.mxu0 %v6649
    %6725 = vmatpush1.msra.mxu0 %v6648
    %6726 = vmatprep.subr.mxu0 %v6651
    %6727 = vmatpush1.msra.mxu0 %v6650
    %6728 = vmatprep.subr.mxu0 %v6653
    %6729 = vmatpush1.msra.mxu0 %v6652
    %6730 = vmatprep.subr.mxu0 %v6655
    %6731 = vmatpush1.msra.mxu0 %v6654
    %6732 = vmatprep.subr.mxu0 %v6657
    %6733 = vmatpush1.msra.mxu0 %v6656
    %6734 = vmatprep.subr.mxu0 %v6659
    %6735 = vmatpush1.msra.mxu0 %v6658
    %6736 = vmatprep.subr.mxu0 %v6661
    %6737 = vmatpush1.msra.mxu0 %v6660
    %6738 = vmatprep.subr.mxu0 %v6663
    %6739 = vmatpush1.msra.mxu0 %v6662
    %6740 = vmatprep.subr.mxu0 %v6665
    %6741 = vmatpush1.msra.mxu0 %v6664
    %6742 = vmatprep.subr.mxu0 %v6667
    %6743 = vmatpush1.msra.mxu0 %v6666
    %6744 = vmatprep.subr.mxu0 %v6669
    %6745 = vmatpush1.msra.mxu0 %v6668
    %6746 = vmatprep.subr.mxu0 %v6671
    %6747 = vmatpush1.msra.mxu0 %v6670
    %6748 = vmatprep.subr.mxu0 %v6673
    %6749 = vmatpush1.msra.mxu0 %v6672
    %6750 = vmatprep.subr.mxu0 %v6675
    %6751 = vmatpush1.msra.mxu0 %v6674
    %6752 = vmatprep.subr.mxu0 %v6677
    %6753 = vmatpush1.msra.mxu0 %v6676
    %6754 = vmatprep.subr.mxu0 %v6679
    %6755 = vmatpush1.msra.mxu0 %v6678
    %6756 = vmatprep.subr.mxu0 %v6681
    %6757 = vmatpush1.msra.mxu0 %v6680
    %6758 = vmatprep.subr.mxu0 %v6683
    %6759 = vmatpush1.msra.mxu0 %v6682
    %6760 = vmatprep.subr.mxu0 %v6685
    %6761 = vmatpush1.msra.mxu0 %v6684
    %6762 = vmatprep.subr.mxu0 %v6687
    %6763 = vmatpush1.msra.mxu0 %v6686
    %6764 = vmatprep.subr.mxu0 %v6689
    %6765 = vmatpush1.msra.mxu0 %v6688
    %6766 = vmatprep.subr.mxu0 %v6691
    %6767 = vmatpush1.msra.mxu0 %v6690
    %6768 = vmatprep.subr.mxu0 %v6693
    %6769 = vmatpush1.msra.mxu0 %v6692
    %6770 = vmatprep.subr.mxu0 %v6695
    %6771 = vmatpush1.msra.mxu0 %v6694
    %6772 = vmatprep.subr.mxu0 %v6697
    %6773 = vmatpush1.msra.mxu0 %v6696
    %6774 = vmatprep.mubr.f32.mxu0 %v6633
    %6775 = vmatmul.mubr.f32.gmra.mrb[0].mxu0 %v6632
    %v6776 = vpop.f32.mrb[0].mxu0
    %v6777 = vadd.f32 %v6703, %v6776
    %v6778 = vpop.f32.mrb[0].mxu0
    %v6779 = vadd.f32 %v6707, %v6778
    %6780 = vdwg.mxu0
    %v6781 = vmax.f32 %v6777, 0.0
    %v6782 = vmax.f32 %v6779, 0.0
    %v6783 = vld [vmem:[%s21] sm:$0xff]
    %v6784 = vld [vmem:[%s21 + $0x8] sm:$0xff]
    %v6785 = vld [vmem:[%s21 + $0x10] sm:$0xff]
    %v6786 = vld [vmem:[%s21 + $0x18] sm:$0xff]
    %v6787 = vld [vmem:[%s21 + $0x20] sm:$0xff]
    %v6788 = vld [vmem:[%s21 + $0x28] sm:$0xff]
    %v6789 = vld [vmem:[%s21 + $0x30] sm:$0xff]
    %v6790 = vld [vmem:[%s21 + $0x38] sm:$0xff]
    %v6791 = vld [vmem:[%s21 + $0x40] sm:$0xff]
    %v6792 = vld [vmem:[%s21 + $0x48] sm:$0xff]
    %v6793 = vld [vmem:[%s21 + $0x50] sm:$0xff]
    %v6794 = vld [vmem:[%s21 + $0x58] sm:$0xff]
    %v6795 = vld [vmem:[%s21 + $0x60] sm:$0xff]
    %v6796 = vld [vmem:[%s21 + $0x68] sm:$0xff]
    %v6797 = vld [vmem:[%s21 + $0x70] sm:$0xff]
    %v6798 = vld [vmem:[%s21 + $0x78] sm:$0xff]
    %v6799 = vld [vmem:[%s21 + $0x80] sm:$0xff]
    %v6800 = vld [vmem:[%s21 + $0x88] sm:$0xff]
    %v6801 = vld [vmem:[%s21 + $0x90] sm:$0xff]
    %v6802 = vld [vmem:[%s21 + $0x98] sm:$0xff]
    %v6803 = vld [vmem:[%s21 + $0xa0] sm:$0xff]
    %v6804 = vld [vmem:[%s21 + $0xa8] sm:$0xff]
    %v6805 = vld [vmem:[%s21 + $0xb0] sm:$0xff]
    %v6806 = vld [vmem:[%s21 + $0xb8] sm:$0xff]
    %v6807 = vld [vmem:[%s21 + $0xc0] sm:$0xff]
    %v6808 = vld [vmem:[%s21 + $0xc8] sm:$0xff]
    %v6809 = vld [vmem:[%s21 + $0xd0] sm:$0xff]
    %v6810 = vld [vmem:[%s21 + $0xd8] sm:$0xff]
    %v6811 = vld [vmem:[%s21 + $0xe0] sm:$0xff]
    %v6812 = vld [vmem:[%s21 + $0xe8] sm:$0xff]
    %v6813 = vld [vmem:[%s21 + $0xf0] sm:$0xff]
    %v6814 = vld [vmem:[%s21 + $0xf8] sm:$0xff]
    %v6815 = vld [vmem:[%s22] sm:$0x1]
    %v6817 = vlaneseq
    %v6818 = vshrl.u32 %v6817, 7
    %v6819 = vsub.s32 0, %v6818
    %v6820 = vrot.slane %v6815, %v6819
    %6822 = vmatprep.subr.mxu0 0.0
    %6823 = vmatpush1.msra.mxu0 %v6783
    %6824 = vmatprep.subr.mxu0 0.0
    %6825 = vmatpush1.msra.mxu0 %v6784
    %6826 = vmatprep.subr.mxu0 0.0
    %6827 = vmatpush1.msra.mxu0 %v6785
    %6828 = vmatprep.subr.mxu0 0.0
    %6829 = vmatpush1.msra.mxu0 %v6786
    %6830 = vmatprep.subr.mxu0 0.0
    %6831 = vmatpush1.msra.mxu0 %v6787
    %6832 = vmatprep.subr.mxu0 0.0
    %6833 = vmatpush1.msra.mxu0 %v6788
    %6834 = vmatprep.subr.mxu0 0.0
    %6835 = vmatpush1.msra.mxu0 %v6789
    %6836 = vmatprep.subr.mxu0 0.0
    %6837 = vmatpush1.msra.mxu0 %v6790
    %6838 = vmatprep.subr.mxu0 0.0
    %6839 = vmatpush1.msra.mxu0 %v6791
    %6840 = vmatprep.subr.mxu0 0.0
    %6841 = vmatpush1.msra.mxu0 %v6792
    %6842 = vmatprep.subr.mxu0 0.0
    %6843 = vmatpush1.msra.mxu0 %v6793
    %6844 = vmatprep.subr.mxu0 0.0
    %6845 = vmatpush1.msra.mxu0 %v6794
    %6846 = vmatprep.subr.mxu0 0.0
    %6847 = vmatpush1.msra.mxu0 %v6795
    %6848 = vmatprep.subr.mxu0 0.0
    %6849 = vmatpush1.msra.mxu0 %v6796
    %6850 = vmatprep.subr.mxu0 0.0
    %6851 = vmatpush1.msra.mxu0 %v6797
    %6852 = vmatprep.subr.mxu0 0.0
    %6853 = vmatpush1.msra.mxu0 %v6798
    %6854 = vmatprep.subr.mxu0 0.0
    %6855 = vmatpush1.msra.mxu0 %v6799
    %6856 = vmatprep.subr.mxu0 0.0
    %6857 = vmatpush1.msra.mxu0 %v6800
    %6858 = vmatprep.subr.mxu0 0.0
    %6859 = vmatpush1.msra.mxu0 %v6801
    %6860 = vmatprep.subr.mxu0 0.0
    %6861 = vmatpush1.msra.mxu0 %v6802
    %6862 = vmatprep.subr.mxu0 0.0
    %6863 = vmatpush1.msra.mxu0 %v6803
    %6864 = vmatprep.subr.mxu0 0.0
    %6865 = vmatpush1.msra.mxu0 %v6804
    %6866 = vmatprep.subr.mxu0 0.0
    %6867 = vmatpush1.msra.mxu0 %v6805
    %6868 = vmatprep.subr.mxu0 0.0
    %6869 = vmatpush1.msra.mxu0 %v6806
    %6870 = vmatprep.subr.mxu0 0.0
    %6871 = vmatpush1.msra.mxu0 %v6807
    %6872 = vmatprep.subr.mxu0 0.0
    %6873 = vmatpush1.msra.mxu0 %v6808
    %6874 = vmatprep.subr.mxu0 0.0
    %6875 = vmatpush1.msra.mxu0 %v6809
    %6876 = vmatprep.subr.mxu0 0.0
    %6877 = vmatpush1.msra.mxu0 %v6810
    %6878 = vmatprep.subr.mxu0 0.0
    %6879 = vmatpush1.msra.mxu0 %v6811
    %6880 = vmatprep.subr.mxu0 0.0
    %6881 = vmatpush1.msra.mxu0 %v6812
    %6882 = vmatprep.subr.mxu0 0.0
    %6883 = vmatpush1.msra.mxu0 %v6813
    %6884 = vmatprep.subr.mxu0 0.0
    %6885 = vmatpush1.msra.mxu0 %v6814
    %6886 = vmatprep.mubr.f32.mxu0 %v6782
    %6887 = vmatmul.mubr.f32.gmra.mrb[0].mxu0 %v6781
    %v6888 = vpop.f32.mrb[0].mxu0
    %v6889 = vadd.f32 %v6820, %v6888
    %v6890 = vpop.f32.mrb[0].mxu0
    %6891 = vdwg.mxu0
    %vm6892 = vcmask 33792
    %6893 = vst.msk [vmem:[#allocation3] sm:$0x3] %vm6892, %v6889
    // Predicated region
    $region94: #{tpu_custom_call.1} parent=1 // pred_check
      _
    $region95: #{tpu_custom_call.1} parent=1 // pred_check_branch
      %6895 = sbr.rel (0) target = $region97
    $region96: #{tpu_custom_call.1} parent=1 // pred_region
      %s6897 = ssub.s32 32, 32
      %6898 = vsyncadd [#allocation4], %s6897
      %s6900 = sshll.u32 [#allocation3], 4
      %s6901 = int_to_ptr.vmem [resolvable:$true] %s6900
      %6903 = dma.vmem_to_hbm [thread:$0]  %s6901, 32, %s23, [#allocation4]
    $region97: #{tpu_custom_call.1} parent=1 // pred_fallthru
      _
    // Predicated region
    $region98: #{tpu_custom_call.1} parent=1 // pred_check
      _
    $region99: #{tpu_custom_call.1} parent=1 // pred_check_branch
      %6905 = sbr.rel (0) target = $region101
    $region100: #{tpu_custom_call.1} parent=1 // pred_region
      %6906 = dma.done [#allocation4], 32
    $region101: #{tpu_custom_call.1} parent=1 // pred_fallthru
      _
    %6907 = vsyncpa [#allocation4], 1

</llo_original>
